<compile_context>
chip_gen: v7x
topology: tpu7x:2x2x1
jax: 0.10.0
libtpu: 0.0.40
codegen_flags: <defaults>
</compile_context>

<pallas_src>
import numpy as np
import jax
import jax.numpy as jnp
from jax.scipy.linalg import block_diag
from jax.experimental import pallas as pl
from jax.experimental.pallas import tpu as pltpu

B = 32            # batch (== INPUT_DIM, required by the reference broadcast)
INPUT_DIM = 32
HIDDEN = 32
LATENT = 16
NUM_HEADS = 4
HEAD_DIM = LATENT // NUM_HEADS
LN_EPS = 1e-5
OUT_W = 256       # single lane-dense packed output width

# ---------------------------------------------------------------------------
# one packed (SLAB_ROWS, 256) weight/constant slab; name -> (row0, rows, col0, cols)
# (row starts are multiples of 8; matrices share lanes where row counts match)
SLAB_W = 256
SLAB_ROWS = 912
SLAB = {
    "M192":     (0,   192, 0,   192),   # segment-mean, seg=64
    "encW2":    (192, 192, 0,   96),
    "decW3":    (192, 192, 128, 96),
    "decW2":    (384, 96,  0,   192),
    "mcW1":     (384, 96,  192, 64),    # fused meta/controller layer-1
    "encW3":    (480, 96,  0,   96),
    "discW1":   (480, 96,  128, 96),
    "M96":      (576, 96,  0,   96),    # segment-mean, seg=32
    "fin_sum":  (576, 96,  128, 32),    # branch sum / 3
    "discW2":   (576, 96,  192, 3),
    "M64":      (672, 64,  0,   64),    # segment-mean, seg=32 (meta|ctrl)
    "mcW2":     (672, 64,  64,  4),     # fused [meta logits | factor] head
    "attnWin":  (736, 48,  0,   144),
    "attnWo":   (736, 48,  144, 48),
    "hsum48":   (736, 48,  192, 12),    # per-(src j, head) scaled dot-sum
    "jsum48":   (736, 48,  204, 16),    # sum over sources j
    "decW1":    (784, 48,  0,   96),
    "awmask":   (784, 36,  128, 9),     # head-average of attention weights
    "encW1":    (832, 32,  0,   192),
    "rowp":     (864, 32,  0,   192),   # bias / gamma / beta row table
    "hrep12":   (896, 12,  0,   48),    # broadcast (src j, head) -> head dims
    "mrep3_96": (896, 3,   128, 96),    # broadcast per-branch scalar -> 32 lanes
}

# rows of the rowp bias/gamma/beta table (row index -> content)
R_EB1, R_EG1, R_EBT1 = 0, 1, 2          # encoder L1 bias / gamma / beta (192)
R_DB2, R_DG2, R_DBT2 = 3, 4, 5          # decoder L2                      (192)
R_ABIN = 6                              # attention in-proj bias          (144)
R_EB2, R_EG2, R_EBT2 = 7, 8, 9          # encoder L2                      (96)
R_EB3 = 10                              # encoder L3 bias (mu|lv layout)  (96)
R_DB1, R_DG1, R_DBT1 = 11, 12, 13       # decoder L1                      (96)
R_DB3, R_DG3, R_DBT3 = 14, 15, 16       # decoder L3                      (96)
R_GB1, R_GG1, R_GBT1 = 17, 18, 19       # discriminator L1 (tiled x3)     (96)
R_ABO = 20                              # attention out-proj bias (x3)    (48)
R_MCB1, R_MCG1, R_MCBT1 = 21, 22, 23    # fused meta|ctrl L1              (64)
R_SMALL = 24                            # [meta_b2(3)|ctrl_b2(1)|disc_b2(3)]
ROWP_R0 = SLAB["rowp"][0]


def _relu(x):
    return jnp.maximum(x, 0.0)


def _dot(a, b):
    return jnp.dot(a, b, preferred_element_type=jnp.float32)


# ---------------------------------------------------------------------------
# the fused kernel: 2 inputs (acts slab, weight slab), 1 packed output
def exploration_kernel(acts_ref, wslab_ref, out_ref):
    f32 = jnp.float32

    def W(name):
        r0, nr, c0, nc = SLAB[name]
        return wslab_ref[r0:r0 + nr, c0:c0 + nc]

    def row(r, w):
        return wslab_ref[ROWP_R0 + r:ROWP_R0 + r + 1, 0:w]

    def rown(r, c0, c1):
        return wslab_ref[ROWP_R0 + r:ROWP_R0 + r + 1, c0:c1]

    def gln(h, m_seg, g, b):
        # fused segment LayerNorm: segment mean / variance via ONE matrix each
        mean = _dot(h, m_seg)
        d = h - mean
        var = _dot(d * d, m_seg)
        return d * jax.lax.rsqrt(var + LN_EPS) * g + b

    x = acts_ref[:, 0:32]               # (B, 32)
    eps = acts_ref[:, 32:80]            # (B, 48)  [eps0|eps1|eps2]
    noise = acts_ref[:, 80:176]         # (B, 96)  [n0|n1|n2]

    # ---------------- 3 VAE-style encoders (fused, lane-concat) ------------
    # TODO(synk): nn.Dropout(0.1) treated as inference-mode identity.
    h = _relu(_dot(x, W("encW1")) + row(R_EB1, 192))                 # (B,192)
    h = gln(h, W("M192"), row(R_EG1, 192), row(R_EBT1, 192))
    h = _relu(_dot(h, W("encW2")) + row(R_EB2, 96))                  # (B,96)
    h = gln(h, W("M96"), row(R_EG2, 96), row(R_EBT2, 96))
    enc = _dot(h, W("encW3")) + row(R_EB3, 96)   # [mu0|mu1|mu2|lv0|lv1|lv2]
    out_ref[:, 32:128] = enc                                         # store early

    mu = enc[:, 0:48]
    lv = enc[:, 48:96]
    z = mu + eps * jnp.exp(0.5 * lv)                                 # (B,48)

    # -------- multi-head self-attention over the 3 latents (seq = 3) -------
    qkv = _dot(z, W("attnWin")) + row(R_ABIN, 144)   # [q0..2|k0..2|v0..2]
    k = qkv[:, 48:96]
    v = qkv[:, 96:144]
    hsum = W("hsum48")
    hrep = W("hrep12")
    jsum = W("jsum48")

    outs = []
    ws = []
    for i in range(3):                          # target position i
        qi = qkv[:, i * 16:(i + 1) * 16]        # (B,16)
        qrep = jnp.concatenate([qi, qi, qi], axis=-1)                # (B,48)
        s = _dot(qrep * k, hsum)                # (B,12), col = j*4 + head
        m = jnp.maximum(jnp.maximum(s[:, 0:4], s[:, 4:8]), s[:, 8:12])
        e = jnp.exp(s - jnp.concatenate([m, m, m], axis=-1))
        den = e[:, 0:4] + e[:, 4:8] + e[:, 8:12]
        w = e / jnp.concatenate([den, den, den], axis=-1)            # exact
        ws.append(w)
        outs.append(_dot(_dot(w, hrep) * v, jsum))                   # (B,16)
    att_cat = jnp.concatenate(outs, axis=-1)                         # (B,48)
    attended = _dot(att_cat, W("attnWo")) + row(R_ABO, 48)
    attn9 = _dot(jnp.concatenate(ws, axis=-1), W("awmask"))          # (B,9)
    out_ref[:, 224:233] = attn9

    # ---------------------- 3 decoders (fused) -----------------------------
    # TODO(synk): nn.Dropout(0.1) treated as inference-mode identity.
    d = _relu(_dot(z, W("decW1")) + row(R_DB1, 96))
    d = gln(d, W("M96"), row(R_DG1, 96), row(R_DBT1, 96))
    d = _relu(_dot(d, W("decW2")) + row(R_DB2, 192))
    d = gln(d, W("M192"), row(R_DG2, 192), row(R_DBT2, 192))
    d = _dot(d, W("decW3")) + row(R_DB3, 96)
    dec = gln(d, W("M96"), row(R_DG3, 96), row(R_DBT3, 96))
    out_ref[:, 128:224] = dec                                        # store early

    # ---- fused meta-exploration (softmax) + exploration controller --------
    mc_in = jnp.concatenate([z, attended], axis=-1)                  # (B,96)
    mc = _relu(_dot(mc_in, W("mcW1")) + row(R_MCB1, 64))             # (B,64)
    mc = gln(mc, W("M64"), row(R_MCG1, 64), row(R_MCBT1, 64))
    head = _dot(mc, W("mcW2")) + rown(R_SMALL, 0, 4)                 # (B,4)
    logits = head[:, 0:3]
    el = jnp.exp(logits - jnp.max(logits, axis=-1, keepdims=True))
    ew = el / jnp.sum(el, axis=-1, keepdims=True)                    # (B,3)
    factor = 1.0 / (1.0 + jnp.exp(-head[:, 3:4]))                    # (B,1)
    out_ref[:, 233:236] = ew
    out_ref[:, 236:237] = factor

    # --------------- explore + discriminate + blend ------------------------
    # reference broadcast: explored_i[b,f] = dec_i[b,f] +
    #   noise_i[b,f] * factor[b] * ew[f,i]   (requires B == INPUT_DIM)
    ew_sq = jnp.concatenate([ew, jnp.zeros((B, B - 3), f32)], axis=-1)
    ew_t = jnp.transpose(ew_sq)                 # rows 0..2 hold ew[:, i]
    wrow = jnp.concatenate([ew_t[0:1, :], ew_t[1:2, :], ew_t[2:3, :]],
                           axis=-1)             # (1, 96)
    explored = dec + noise * factor * wrow      # (B, 96)

    gh = _relu(_dot(explored, W("discW1")) + row(R_GB1, 96))
    gh = gln(gh, W("M96"), row(R_GG1, 96), row(R_GBT1, 96))
    nov = 1.0 / (1.0 + jnp.exp(-(_dot(gh, W("discW2")) + rown(R_SMALL, 4, 7))))
    out_ref[:, 237:240] = nov
    out_ref[:, 240:256] = jnp.zeros((B, 16), f32)

    novb = _dot(nov, W("mrep3_96"))             # (B,96) per-branch broadcast
    final = _dot(novb * explored, W("fin_sum"))  # (B,32), includes the /3
    out_ref[:, 0:32] = final


# ---------------------------------------------------------------------------
def init_params(key):
    keys = jax.random.split(key, 40)
    it = iter(keys)

    def w(shape, scale=0.05):
        return (scale * jax.random.normal(next(it), shape)).astype(jnp.float32)

    def bias(shape):
        return (0.01 * jax.random.normal(next(it), shape)).astype(jnp.float32)

    ones = lambda s: jnp.ones(s, jnp.float32)
    zeros = lambda s: jnp.zeros(s, jnp.float32)

    H, D, L = HIDDEN, INPUT_DIM, LATENT
    return dict(
        eW1=w((3, D, 2 * H)), eb1=bias((3, 2 * H)),
        eg1=ones((3, 2 * H)), ebt1=zeros((3, 2 * H)),
        eW2=w((3, 2 * H, H)), eb2=bias((3, H)),
        eg2=ones((3, H)), ebt2=zeros((3, H)),
        eW3=w((3, H, 2 * L)), eb3=bias((3, 2 * L)),
        dW1=w((3, L, H)), db1=bias((3, H)),
        dg1=ones((3, H)), dbt1=zeros((3, H)),
        dW2=w((3, H, 2 * H)), db2=bias((3, 2 * H)),
        dg2=ones((3, 2 * H)), dbt2=zeros((3, 2 * H)),
        dW3=w((3, 2 * H, D)), db3=bias((3, D)),
        dg3=ones((3, D)), dbt3=zeros((3, D)),
        Wq=w((L, L)), Wk=w((L, L)), Wv=w((L, L)),
        bqkv=bias((3, L)),
        Wo=w((L, L)), bo=bias((1, L)),
        mW1=w((3 * L, H)), mb1=bias((1, H)),
        mg1=ones((1, H)), mbt1=zeros((1, H)),
        mW2=w((H, 3)), mb2=bias((1, 3)),
        cW1=w((2 * L, H)), cb1=bias((1, H)),
        cg1=ones((1, H)), cbt1=zeros((1, H)),
        cW2=w((H, 1)), cb2=bias((1, 1)),
        gW1=w((D, H)), gb1=bias((1, H)),
        gg1=ones((1, H)), gbt1=zeros((1, H)),
        gW2=w((H, 1)), gb2=bias((1, 1)),
    )


def pack_params(p):
    """Pack ~50 parameter arrays + all precomputed masks into one (912,256)
    lane-dense f32 slab.  Call once per parameter set (hoisted out of the
    per-forward path)."""
    f32 = jnp.float32
    L = LATENT

    def bd3(w):                       # per-branch stacked weight (3, i, o)
        return block_diag(w[0], w[1], w[2])

    def bd3s(w):                      # shared weight replicated 3x
        return block_diag(w, w, w)

    def flat(a):
        return jnp.asarray(a, f32).reshape(-1)

    # fused / block-diagonal weights (lane-concatenated branch layout)
    encW1 = jnp.concatenate([p["eW1"][i] for i in range(3)], axis=1)  # (32,192)
    encW2 = bd3(p["eW2"])                                             # (192,96)
    w3 = bd3(p["eW3"])                                                # (96,96)
    perm = np.concatenate([np.arange(0, 16), np.arange(32, 48),
                           np.arange(64, 80), np.arange(16, 32),
                           np.arange(48, 64), np.arange(80, 96)])
    encW3 = w3[:, perm]               # columns -> [mu0|mu1|mu2|lv0|lv1|lv2]
    decW1 = bd3(p["dW1"])                                             # (48,96)
    decW2 = bd3(p["dW2"])                                             # (96,192)
    decW3 = bd3(p["dW3"])                                             # (192,96)
    attnWin = jnp.concatenate(
        [bd3s(p["Wq"]), bd3s(p["Wk"]), bd3s(p["Wv"])], axis=1)        # (48,144)
    attnWo = bd3s(p["Wo"])                                            # (48,48)
    discW1 = bd3s(p["gW1"])                                           # (96,96)
    discW2 = block_diag(p["gW2"], p["gW2"], p["gW2"])                 # (96,3)

    # fused meta-exploration + controller layer 1 / head weights
    mcW1 = jnp.zeros((96, 64), f32)
    mcW1 = mcW1.at[0:48, 0:32].set(p["mW1"])                  # meta on z
    mcW1 = mcW1.at[0:48, 32:64].set(jnp.tile(p["cW1"][L:2 * L, :], (3, 1)) / 3.0)
    mcW1 = mcW1.at[48:96, 32:64].set(jnp.tile(p["cW1"][0:L, :], (3, 1)) / 3.0)
    mcW2 = jnp.zeros((64, 4), f32)
    mcW2 = mcW2.at[0:32, 0:3].set(p["mW2"])
    mcW2 = mcW2.at[32:64, 3:4].set(p["cW2"])

    # precomputed segment-mean matrices / block masks (static, numpy)
    def seg_mean(n, seg):
        idx = np.arange(n)
        return ((idx[:, None] // seg == idx[None, :] // seg)
                .astype(np.float32) / seg)

    M192 = seg_mean(192, 64)
    M96 = seg_mean(96, 32)
    M64 = seg_mean(64, 32)

    hsum48 = np.zeros((48, 12), np.float32)
    hrep12 = np.zeros((12, 48), np.float32)
    jsum48 = np.zeros((48, 16), np.float32)
    for j in range(3):
        for hh in range(NUM_HEADS):
            for dd in range(HEAD_DIM):
                r = j * 16 + hh * HEAD_DIM + dd
                hsum48[r, j * NUM_HEADS + hh] = 1.0 / np.sqrt(HEAD_DIM)
                hrep12[j * NUM_HEADS + hh, r] = 1.0
        for c in range(16):
            jsum48[j * 16 + c, c] = 1.0
    awmask = np.zeros((36, 9), np.float32)
    for i in range(3):
        for j in range(3):
            for hh in range(NUM_HEADS):
                awmask[i * 12 + j * 4 + hh, i * 3 + j] = 1.0 / NUM_HEADS
    mrep3_96 = np.zeros((3, 96), np.float32)
    for i in range(3):
        mrep3_96[i, i * 32:(i + 1) * 32] = 1.0
    fin_sum = np.zeros((96, 32), np.float32)
    for i in range(3):
        fin_sum[i * 32:(i + 1) * 32, :] = np.eye(32, dtype=np.float32) / 3.0

    # bias / gamma / beta row table (32, 192)
    eb3p = jnp.concatenate([p["eb3"][i, :L] for i in range(3)]
                           + [p["eb3"][i, L:] for i in range(3)])
    bin_cat = jnp.concatenate([jnp.tile(p["bqkv"][j], 3) for j in range(3)])
    row_data = [
        flat(p["eb1"]), flat(p["eg1"]), flat(p["ebt1"]),      # R_EB1..R_EBT1
        flat(p["db2"]), flat(p["dg2"]), flat(p["dbt2"]),      # R_DB2..R_DBT2
        bin_cat,                                              # R_ABIN
        flat(p["eb2"]), flat(p["eg2"]), flat(p["ebt2"]),      # R_EB2..R_EBT2
        eb3p,                                                 # R_EB3
        flat(p["db1"]), flat(p["dg1"]), flat(p["dbt1"]),      # R_DB1..R_DBT1
        flat(p["db3"]), flat(p["dg3"]), flat(p["dbt3"]),      # R_DB3..R_DBT3
        jnp.tile(flat(p["gb1"]), 3), jnp.tile(flat(p["gg1"]), 3),
        jnp.tile(flat(p["gbt1"]), 3),                         # R_GB1..R_GBT1
        jnp.tile(flat(p["bo"]), 3),                           # R_ABO
        jnp.concatenate([flat(p["mb1"]), flat(p["cb1"])]),    # R_MCB1
        jnp.concatenate([flat(p["mg1"]), flat(p["cg1"])]),    # R_MCG1
        jnp.concatenate([flat(p["mbt1"]), flat(p["cbt1"])]),  # R_MCBT1
        jnp.concatenate([flat(p["mb2"]), flat(p["cb2"]),
                         jnp.tile(flat(p["gb2"]), 3)]),       # R_SMALL
    ]
    rowp = jnp.stack(
        [jnp.pad(r, (0, 192 - r.shape[0])) for r in row_data]
        + [jnp.zeros((192,), f32)] * (32 - len(row_data)))

    mats = dict(
        M192=M192, encW2=encW2, decW3=decW3, decW2=decW2, mcW1=mcW1,
        encW3=encW3, discW1=discW1, M96=M96, fin_sum=fin_sum, discW2=discW2,
        M64=M64, mcW2=mcW2, attnWin=attnWin, attnWo=attnWo, hsum48=hsum48,
        jsum48=jsum48, decW1=decW1, awmask=awmask, encW1=encW1, rowp=rowp,
        hrep12=hrep12, mrep3_96=mrep3_96)

    slab = jnp.zeros((SLAB_ROWS, SLAB_W), f32)
    for name, (r0, nr, c0, nc) in SLAB.items():
        m = jnp.asarray(mats[name], f32)
        assert m.shape == (nr, nc), (name, m.shape, (nr, nc))
        slab = slab.at[r0:r0 + nr, c0:c0 + nc].set(m)
    return slab


@jax.jit
def exploration_forward(x, eps, xnoise, wslab):
    # the reference (batch,) * (batch, input_dim) noise broadcast needs this
    assert x.shape == (B, INPUT_DIM) and B == INPUT_DIM
    f32 = jnp.float32

    # per-call work: only the activation-slab concat (weights pre-packed)
    acts = jnp.concatenate(
        [x, eps[0], eps[1], eps[2], xnoise[0], xnoise[1], xnoise[2],
         jnp.zeros((B, 80), f32)], axis=-1).astype(f32)          # (B, 256)

    vmem = pl.BlockSpec(memory_space=pltpu.MemorySpace.VMEM)
    out = pl.pallas_call(
        exploration_kernel,
        out_shape=jax.ShapeDtypeStruct((B, OUT_W), jnp.float32),
        in_specs=[vmem, vmem],
        out_specs=vmem,
    )(acts, wslab)

    final = out[:, 0:32]
    mu = [out[:, 32 + 16 * i: 48 + 16 * i] for i in range(3)]
    logvar = [out[:, 80 + 16 * i: 96 + 16 * i] for i in range(3)]
    decoded = [out[:, 128 + 32 * i: 160 + 32 * i] for i in range(3)]
    attn = out[:, 224:233].reshape(B, 3, 3)
    ew = out[:, 233:236]
    factor = out[:, 236:237]
    nov = out[:, 237:240]
    metadata = {
        "latent_params": [(mu[i], logvar[i]) for i in range(3)],
        "attention_weights": attn,                          # (B, tgt=3, src=3)
        "exploration_weights": ew,                          # (B, 3)
        "exploration_factor": factor,                       # (B, 1)
        "novelty_scores": jnp.transpose(nov)[:, :, None],   # (3, B, 1)
        "decoded_states": decoded,                          # 3 x (B, 32)
    }
    return final, metadata


if __name__ == "__main__":
    key = jax.random.PRNGKey(0)
    kx, keps, knoise, kparams = jax.random.split(key, 4)
    x = jax.random.normal(kx, (B, INPUT_DIM), dtype=jnp.float32)
    # randomness of reparameterize() and exploration noise, generated in glue
    eps = jax.random.normal(keps, (3, B, LATENT), dtype=jnp.float32)
    xnoise = jax.random.normal(knoise, (3, B, INPUT_DIM), dtype=jnp.float32)
    params = init_params(kparams)

    wslab = pack_params(params)          # packed once (hoisted out of forward)

    final, meta = exploration_forward(x, eps, xnoise, wslab)
    jax.block_until_ready(final)
    jax.block_until_ready(meta["attention_weights"])
    print("KERNEL_OK")
</pallas_src>

<mosaic_0001>
module attributes {stable_mosaic.version = 11 : i64} {
  func.func @exploration_kernel(%arg0: memref<32x256xf32, #tpu.memory_space<vmem>>, %arg1: memref<912x256xf32, #tpu.memory_space<vmem>>, %arg2: memref<32x256xf32, #tpu.memory_space<vmem>>) attributes {dimension_semantics = [], scalar_prefetch = 0 : i64, scratch_operands = 0 : i64, tpu.core_type = #tpu.core_type<tc>} {
    %c0 = arith.constant 0 : index
    %c0_0 = arith.constant 0 : index
    %0 = vector.load %arg0[%c0, %c0_0] : memref<32x256xf32, #tpu.memory_space<vmem>>, vector<32x32xf32>
    %c0_1 = arith.constant 0 : index
    %c32 = arith.constant 32 : index
    %1 = vector.load %arg0[%c0_1, %c32] : memref<32x256xf32, #tpu.memory_space<vmem>>, vector<32x48xf32>
    %c0_2 = arith.constant 0 : index
    %c80 = arith.constant 80 : index
    %2 = vector.load %arg0[%c0_2, %c80] : memref<32x256xf32, #tpu.memory_space<vmem>>, vector<32x96xf32>
    %c832 = arith.constant 832 : index
    %c0_3 = arith.constant 0 : index
    %3 = vector.load %arg1[%c832, %c0_3] : memref<912x256xf32, #tpu.memory_space<vmem>>, vector<32x192xf32>
    %cst = arith.constant dense<0.000000e+00> : vector<32x192xf32>
    %4 = tpu.matmul %0, %3, %cst {dimension_numbers = #tpu.dot_dimension_numbers<[1], [0], [0], [1], [0, 0, 1, 1], [], []>} : vector<32x32xf32>, vector<32x192xf32>, vector<32x192xf32> -> vector<32x192xf32>
    %c864 = arith.constant 864 : index
    %c0_4 = arith.constant 0 : index
    %5 = vector.load %arg1[%c864, %c0_4] : memref<912x256xf32, #tpu.memory_space<vmem>>, vector<1x192xf32>
    %6 = vector.broadcast %5 : vector<1x192xf32> to vector<32x192xf32>
    %7 = arith.addf %4, %6 : vector<32x192xf32>
    %cst_5 = arith.constant 0.000000e+00 : f32
    %8 = vector.broadcast %cst_5 : f32 to vector<32x192xf32>
    %9 = arith.maximumf %7, %8 : vector<32x192xf32>
    %c0_6 = arith.constant 0 : index
    %c0_7 = arith.constant 0 : index
    %10 = vector.load %arg1[%c0_6, %c0_7] : memref<912x256xf32, #tpu.memory_space<vmem>>, vector<192x192xf32>
    %c865 = arith.constant 865 : index
    %c0_8 = arith.constant 0 : index
    %11 = vector.load %arg1[%c865, %c0_8] : memref<912x256xf32, #tpu.memory_space<vmem>>, vector<1x192xf32>
    %c866 = arith.constant 866 : index
    %c0_9 = arith.constant 0 : index
    %12 = vector.load %arg1[%c866, %c0_9] : memref<912x256xf32, #tpu.memory_space<vmem>>, vector<1x192xf32>
    %cst_10 = arith.constant dense<0.000000e+00> : vector<32x192xf32>
    %13 = tpu.matmul %9, %10, %cst_10 {dimension_numbers = #tpu.dot_dimension_numbers<[1], [0], [0], [1], [0, 0, 1, 1], [], []>} : vector<32x192xf32>, vector<192x192xf32>, vector<32x192xf32> -> vector<32x192xf32>
    %14 = arith.subf %9, %13 : vector<32x192xf32>
    %15 = arith.mulf %14, %14 : vector<32x192xf32>
    %cst_11 = arith.constant dense<0.000000e+00> : vector<32x192xf32>
    %16 = tpu.matmul %15, %10, %cst_11 {dimension_numbers = #tpu.dot_dimension_numbers<[1], [0], [0], [1], [0, 0, 1, 1], [], []>} : vector<32x192xf32>, vector<192x192xf32>, vector<32x192xf32> -> vector<32x192xf32>
    %cst_12 = arith.constant 9.99999974E-6 : f32
    %17 = vector.broadcast %cst_12 : f32 to vector<32x192xf32>
    %18 = arith.addf %16, %17 : vector<32x192xf32>
    %19 = math.rsqrt %18 : vector<32x192xf32>
    %20 = arith.mulf %14, %19 : vector<32x192xf32>
    %21 = vector.broadcast %11 : vector<1x192xf32> to vector<32x192xf32>
    %22 = arith.mulf %20, %21 : vector<32x192xf32>
    %23 = vector.broadcast %12 : vector<1x192xf32> to vector<32x192xf32>
    %24 = arith.addf %22, %23 : vector<32x192xf32>
    %c192 = arith.constant 192 : index
    %c0_13 = arith.constant 0 : index
    %25 = vector.load %arg1[%c192, %c0_13] : memref<912x256xf32, #tpu.memory_space<vmem>>, vector<192x96xf32>
    %cst_14 = arith.constant dense<0.000000e+00> : vector<32x96xf32>
    %26 = tpu.matmul %24, %25, %cst_14 {dimension_numbers = #tpu.dot_dimension_numbers<[1], [0], [0], [1], [0, 0, 1, 1], [], []>} : vector<32x192xf32>, vector<192x96xf32>, vector<32x96xf32> -> vector<32x96xf32>
    %c871 = arith.constant 871 : index
    %c0_15 = arith.constant 0 : index
    %27 = vector.load %arg1[%c871, %c0_15] : memref<912x256xf32, #tpu.memory_space<vmem>>, vector<1x96xf32>
    %28 = vector.broadcast %27 : vector<1x96xf32> to vector<32x96xf32>
    %29 = arith.addf %26, %28 : vector<32x96xf32>
    %cst_16 = arith.constant 0.000000e+00 : f32
    %30 = vector.broadcast %cst_16 : f32 to vector<32x96xf32>
    %31 = arith.maximumf %29, %30 : vector<32x96xf32>
    %c576 = arith.constant 576 : index
    %c0_17 = arith.constant 0 : index
    %32 = vector.load %arg1[%c576, %c0_17] : memref<912x256xf32, #tpu.memory_space<vmem>>, vector<96x96xf32>
    %c872 = arith.constant 872 : index
    %c0_18 = arith.constant 0 : index
    %33 = vector.load %arg1[%c872, %c0_18] : memref<912x256xf32, #tpu.memory_space<vmem>>, vector<1x96xf32>
    %c873 = arith.constant 873 : index
    %c0_19 = arith.constant 0 : index
    %34 = vector.load %arg1[%c873, %c0_19] : memref<912x256xf32, #tpu.memory_space<vmem>>, vector<1x96xf32>
    %cst_20 = arith.constant dense<0.000000e+00> : vector<32x96xf32>
    %35 = tpu.matmul %31, %32, %cst_20 {dimension_numbers = #tpu.dot_dimension_numbers<[1], [0], [0], [1], [0, 0, 1, 1], [], []>} : vector<32x96xf32>, vector<96x96xf32>, vector<32x96xf32> -> vector<32x96xf32>
    %36 = arith.subf %31, %35 : vector<32x96xf32>
    %37 = arith.mulf %36, %36 : vector<32x96xf32>
    %cst_21 = arith.constant dense<0.000000e+00> : vector<32x96xf32>
    %38 = tpu.matmul %37, %32, %cst_21 {dimension_numbers = #tpu.dot_dimension_numbers<[1], [0], [0], [1], [0, 0, 1, 1], [], []>} : vector<32x96xf32>, vector<96x96xf32>, vector<32x96xf32> -> vector<32x96xf32>
    %cst_22 = arith.constant 9.99999974E-6 : f32
    %39 = vector.broadcast %cst_22 : f32 to vector<32x96xf32>
    %40 = arith.addf %38, %39 : vector<32x96xf32>
    %41 = math.rsqrt %40 : vector<32x96xf32>
    %42 = arith.mulf %36, %41 : vector<32x96xf32>
    %43 = vector.broadcast %33 : vector<1x96xf32> to vector<32x96xf32>
    %44 = arith.mulf %42, %43 : vector<32x96xf32>
    %45 = vector.broadcast %34 : vector<1x96xf32> to vector<32x96xf32>
    %46 = arith.addf %44, %45 : vector<32x96xf32>
    %c480 = arith.constant 480 : index
    %c0_23 = arith.constant 0 : index
    %47 = vector.load %arg1[%c480, %c0_23] : memref<912x256xf32, #tpu.memory_space<vmem>>, vector<96x96xf32>
    %cst_24 = arith.constant dense<0.000000e+00> : vector<32x96xf32>
    %48 = tpu.matmul %46, %47, %cst_24 {dimension_numbers = #tpu.dot_dimension_numbers<[1], [0], [0], [1], [0, 0, 1, 1], [], []>} : vector<32x96xf32>, vector<96x96xf32>, vector<32x96xf32> -> vector<32x96xf32>
    %c874 = arith.constant 874 : index
    %c0_25 = arith.constant 0 : index
    %49 = vector.load %arg1[%c874, %c0_25] : memref<912x256xf32, #tpu.memory_space<vmem>>, vector<1x96xf32>
    %50 = vector.broadcast %49 : vector<1x96xf32> to vector<32x96xf32>
    %51 = arith.addf %48, %50 : vector<32x96xf32>
    %c0_26 = arith.constant 0 : index
    %c32_27 = arith.constant 32 : index
    %52 = vector.load %arg2[%c0_26, %c32_27] : memref<32x256xf32, #tpu.memory_space<vmem>>, vector<32x96xf32>
    tpu.vector_store %arg2[%c0_26, %c32_27], %51 {strides = array<i32>} : memref<32x256xf32, #tpu.memory_space<vmem>>, vector<32x96xf32>,
    %53 = vector.extract_strided_slice %51 {offsets = [0, 0], sizes = [32, 48], strides = [1, 1]} : vector<32x96xf32> to vector<32x48xf32>
    %54 = vector.extract_strided_slice %51 {offsets = [0, 48], sizes = [32, 48], strides = [1, 1]} : vector<32x96xf32> to vector<32x48xf32>
    %cst_28 = arith.constant 5.000000e-01 : f32
    %55 = vector.broadcast %cst_28 : f32 to vector<32x48xf32>
    %56 = arith.mulf %55, %54 : vector<32x48xf32>
    %57 = math.exp %56 : vector<32x48xf32>
    %58 = arith.mulf %1, %57 : vector<32x48xf32>
    %59 = arith.addf %53, %58 : vector<32x48xf32>
    %c736 = arith.constant 736 : index
    %c0_29 = arith.constant 0 : index
    %60 = vector.load %arg1[%c736, %c0_29] : memref<912x256xf32, #tpu.memory_space<vmem>>, vector<48x144xf32>
    %cst_30 = arith.constant dense<0.000000e+00> : vector<32x144xf32>
    %61 = tpu.matmul %59, %60, %cst_30 {dimension_numbers = #tpu.dot_dimension_numbers<[1], [0], [0], [1], [0, 0, 1, 1], [], []>} : vector<32x48xf32>, vector<48x144xf32>, vector<32x144xf32> -> vector<32x144xf32>
    %c870 = arith.constant 870 : index
    %c0_31 = arith.constant 0 : index
    %62 = vector.load %arg1[%c870, %c0_31] : memref<912x256xf32, #tpu.memory_space<vmem>>, vector<1x144xf32>
    %63 = vector.broadcast %62 : vector<1x144xf32> to vector<32x144xf32>
    %64 = arith.addf %61, %63 : vector<32x144xf32>
    %65 = vector.extract_strided_slice %64 {offsets = [0, 48], sizes = [32, 48], strides = [1, 1]} : vector<32x144xf32> to vector<32x48xf32>
    %66 = vector.extract_strided_slice %64 {offsets = [0, 96], sizes = [32, 48], strides = [1, 1]} : vector<32x144xf32> to vector<32x48xf32>
    %c736_32 = arith.constant 736 : index
    %c192_33 = arith.constant 192 : index
    %67 = vector.load %arg1[%c736_32, %c192_33] : memref<912x256xf32, #tpu.memory_space<vmem>>, vector<48x12xf32>
    %c896 = arith.constant 896 : index
    %c0_34 = arith.constant 0 : index
    %68 = vector.load %arg1[%c896, %c0_34] : memref<912x256xf32, #tpu.memory_space<vmem>>, vector<12x48xf32>
    %c736_35 = arith.constant 736 : index
    %c204 = arith.constant 204 : index
    %69 = vector.load %arg1[%c736_35, %c204] : memref<912x256xf32, #tpu.memory_space<vmem>>, vector<48x16xf32>
    %70 = vector.extract_strided_slice %64 {offsets = [0, 0], sizes = [32, 16], strides = [1, 1]} : vector<32x144xf32> to vector<32x16xf32>
    %71 = tpu.concatenate %70, %70, %70 in 1 : vector<32x16xf32>, vector<32x16xf32>, vector<32x16xf32> -> vector<32x48xf32>
    %72 = arith.mulf %71, %65 : vector<32x48xf32>
    %cst_36 = arith.constant dense<0.000000e+00> : vector<32x12xf32>
    %73 = tpu.matmul %72, %67, %cst_36 {dimension_numbers = #tpu.dot_dimension_numbers<[1], [0], [0], [1], [0, 0, 1, 1], [], []>} : vector<32x48xf32>, vector<48x12xf32>, vector<32x12xf32> -> vector<32x12xf32>
    %74 = vector.extract_strided_slice %73 {offsets = [0, 0], sizes = [32, 4], strides = [1, 1]} : vector<32x12xf32> to vector<32x4xf32>
    %75 = vector.extract_strided_slice %73 {offsets = [0, 4], sizes = [32, 4], strides = [1, 1]} : vector<32x12xf32> to vector<32x4xf32>
    %76 = arith.maximumf %74, %75 : vector<32x4xf32>
    %77 = vector.extract_strided_slice %73 {offsets = [0, 8], sizes = [32, 4], strides = [1, 1]} : vector<32x12xf32> to vector<32x4xf32>
    %78 = arith.maximumf %76, %77 : vector<32x4xf32>
    %79 = tpu.concatenate %78, %78, %78 in 1 : vector<32x4xf32>, vector<32x4xf32>, vector<32x4xf32> -> vector<32x12xf32>
    %80 = arith.subf %73, %79 : vector<32x12xf32>
    %81 = math.exp %80 : vector<32x12xf32>
    %82 = vector.extract_strided_slice %81 {offsets = [0, 0], sizes = [32, 4], strides = [1, 1]} : vector<32x12xf32> to vector<32x4xf32>
    %83 = vector.extract_strided_slice %81 {offsets = [0, 4], sizes = [32, 4], strides = [1, 1]} : vector<32x12xf32> to vector<32x4xf32>
    %84 = arith.addf %82, %83 : vector<32x4xf32>
    %85 = vector.extract_strided_slice %81 {offsets = [0, 8], sizes = [32, 4], strides = [1, 1]} : vector<32x12xf32> to vector<32x4xf32>
    %86 = arith.addf %84, %85 : vector<32x4xf32>
    %87 = tpu.concatenate %86, %86, %86 in 1 : vector<32x4xf32>, vector<32x4xf32>, vector<32x4xf32> -> vector<32x12xf32>
    %88 = arith.divf %81, %87 : vector<32x12xf32>
    %cst_37 = arith.constant dense<0.000000e+00> : vector<32x48xf32>
    %89 = tpu.matmul %88, %68, %cst_37 {dimension_numbers = #tpu.dot_dimension_numbers<[1], [0], [0], [1], [0, 0, 1, 1], [], []>} : vector<32x12xf32>, vector<12x48xf32>, vector<32x48xf32> -> vector<32x48xf32>
    %90 = arith.mulf %89, %66 : vector<32x48xf32>
    %cst_38 = arith.constant dense<0.000000e+00> : vector<32x16xf32>
    %91 = tpu.matmul %90, %69, %cst_38 {dimension_numbers = #tpu.dot_dimension_numbers<[1], [0], [0], [1], [0, 0, 1, 1], [], []>} : vector<32x48xf32>, vector<48x16xf32>, vector<32x16xf32> -> vector<32x16xf32>
    %92 = vector.extract_strided_slice %64 {offsets = [0, 16], sizes = [32, 16], strides = [1, 1]} : vector<32x144xf32> to vector<32x16xf32>
    %93 = tpu.concatenate %92, %92, %92 in 1 : vector<32x16xf32>, vector<32x16xf32>, vector<32x16xf32> -> vector<32x48xf32>
    %94 = arith.mulf %93, %65 : vector<32x48xf32>
    %cst_39 = arith.constant dense<0.000000e+00> : vector<32x12xf32>
    %95 = tpu.matmul %94, %67, %cst_39 {dimension_numbers = #tpu.dot_dimension_numbers<[1], [0], [0], [1], [0, 0, 1, 1], [], []>} : vector<32x48xf32>, vector<48x12xf32>, vector<32x12xf32> -> vector<32x12xf32>
    %96 = vector.extract_strided_slice %95 {offsets = [0, 0], sizes = [32, 4], strides = [1, 1]} : vector<32x12xf32> to vector<32x4xf32>
    %97 = vector.extract_strided_slice %95 {offsets = [0, 4], sizes = [32, 4], strides = [1, 1]} : vector<32x12xf32> to vector<32x4xf32>
    %98 = arith.maximumf %96, %97 : vector<32x4xf32>
    %99 = vector.extract_strided_slice %95 {offsets = [0, 8], sizes = [32, 4], strides = [1, 1]} : vector<32x12xf32> to vector<32x4xf32>
    %100 = arith.maximumf %98, %99 : vector<32x4xf32>
    %101 = tpu.concatenate %100, %100, %100 in 1 : vector<32x4xf32>, vector<32x4xf32>, vector<32x4xf32> -> vector<32x12xf32>
    %102 = arith.subf %95, %101 : vector<32x12xf32>
    %103 = math.exp %102 : vector<32x12xf32>
    %104 = vector.extract_strided_slice %103 {offsets = [0, 0], sizes = [32, 4], strides = [1, 1]} : vector<32x12xf32> to vector<32x4xf32>
    %105 = vector.extract_strided_slice %103 {offsets = [0, 4], sizes = [32, 4], strides = [1, 1]} : vector<32x12xf32> to vector<32x4xf32>
    %106 = arith.addf %104, %105 : vector<32x4xf32>
    %107 = vector.extract_strided_slice %103 {offsets = [0, 8], sizes = [32, 4], strides = [1, 1]} : vector<32x12xf32> to vector<32x4xf32>
    %108 = arith.addf %106, %107 : vector<32x4xf32>
    %109 = tpu.concatenate %108, %108, %108 in 1 : vector<32x4xf32>, vector<32x4xf32>, vector<32x4xf32> -> vector<32x12xf32>
    %110 = arith.divf %103, %109 : vector<32x12xf32>
    %cst_40 = arith.constant dense<0.000000e+00> : vector<32x48xf32>
    %111 = tpu.matmul %110, %68, %cst_40 {dimension_numbers = #tpu.dot_dimension_numbers<[1], [0], [0], [1], [0, 0, 1, 1], [], []>} : vector<32x12xf32>, vector<12x48xf32>, vector<32x48xf32> -> vector<32x48xf32>
    %112 = arith.mulf %111, %66 : vector<32x48xf32>
    %cst_41 = arith.constant dense<0.000000e+00> : vector<32x16xf32>
    %113 = tpu.matmul %112, %69, %cst_41 {dimension_numbers = #tpu.dot_dimension_numbers<[1], [0], [0], [1], [0, 0, 1, 1], [], []>} : vector<32x48xf32>, vector<48x16xf32>, vector<32x16xf32> -> vector<32x16xf32>
    %114 = vector.extract_strided_slice %64 {offsets = [0, 32], sizes = [32, 16], strides = [1, 1]} : vector<32x144xf32> to vector<32x16xf32>
    %115 = tpu.concatenate %114, %114, %114 in 1 : vector<32x16xf32>, vector<32x16xf32>, vector<32x16xf32> -> vector<32x48xf32>
    %116 = arith.mulf %115, %65 : vector<32x48xf32>
    %cst_42 = arith.constant dense<0.000000e+00> : vector<32x12xf32>
    %117 = tpu.matmul %116, %67, %cst_42 {dimension_numbers = #tpu.dot_dimension_numbers<[1], [0], [0], [1], [0, 0, 1, 1], [], []>} : vector<32x48xf32>, vector<48x12xf32>, vector<32x12xf32> -> vector<32x12xf32>
    %118 = vector.extract_strided_slice %117 {offsets = [0, 0], sizes = [32, 4], strides = [1, 1]} : vector<32x12xf32> to vector<32x4xf32>
    %119 = vector.extract_strided_slice %117 {offsets = [0, 4], sizes = [32, 4], strides = [1, 1]} : vector<32x12xf32> to vector<32x4xf32>
    %120 = arith.maximumf %118, %119 : vector<32x4xf32>
    %121 = vector.extract_strided_slice %117 {offsets = [0, 8], sizes = [32, 4], strides = [1, 1]} : vector<32x12xf32> to vector<32x4xf32>
    %122 = arith.maximumf %120, %121 : vector<32x4xf32>
    %123 = tpu.concatenate %122, %122, %122 in 1 : vector<32x4xf32>, vector<32x4xf32>, vector<32x4xf32> -> vector<32x12xf32>
    %124 = arith.subf %117, %123 : vector<32x12xf32>
    %125 = math.exp %124 : vector<32x12xf32>
    %126 = vector.extract_strided_slice %125 {offsets = [0, 0], sizes = [32, 4], strides = [1, 1]} : vector<32x12xf32> to vector<32x4xf32>
    %127 = vector.extract_strided_slice %125 {offsets = [0, 4], sizes = [32, 4], strides = [1, 1]} : vector<32x12xf32> to vector<32x4xf32>
    %128 = arith.addf %126, %127 : vector<32x4xf32>
    %129 = vector.extract_strided_slice %125 {offsets = [0, 8], sizes = [32, 4], strides = [1, 1]} : vector<32x12xf32> to vector<32x4xf32>
    %130 = arith.addf %128, %129 : vector<32x4xf32>
    %131 = tpu.concatenate %130, %130, %130 in 1 : vector<32x4xf32>, vector<32x4xf32>, vector<32x4xf32> -> vector<32x12xf32>
    %132 = arith.divf %125, %131 : vector<32x12xf32>
    %cst_43 = arith.constant dense<0.000000e+00> : vector<32x48xf32>
    %133 = tpu.matmul %132, %68, %cst_43 {dimension_numbers = #tpu.dot_dimension_numbers<[1], [0], [0], [1], [0, 0, 1, 1], [], []>} : vector<32x12xf32>, vector<12x48xf32>, vector<32x48xf32> -> vector<32x48xf32>
    %134 = arith.mulf %133, %66 : vector<32x48xf32>
    %cst_44 = arith.constant dense<0.000000e+00> : vector<32x16xf32>
    %135 = tpu.matmul %134, %69, %cst_44 {dimension_numbers = #tpu.dot_dimension_numbers<[1], [0], [0], [1], [0, 0, 1, 1], [], []>} : vector<32x48xf32>, vector<48x16xf32>, vector<32x16xf32> -> vector<32x16xf32>
    %136 = tpu.concatenate %91, %113, %135 in 1 : vector<32x16xf32>, vector<32x16xf32>, vector<32x16xf32> -> vector<32x48xf32>
    %c736_45 = arith.constant 736 : index
    %c144 = arith.constant 144 : index
    %137 = vector.load %arg1[%c736_45, %c144] : memref<912x256xf32, #tpu.memory_space<vmem>>, vector<48x48xf32>
    %cst_46 = arith.constant dense<0.000000e+00> : vector<32x48xf32>
    %138 = tpu.matmul %136, %137, %cst_46 {dimension_numbers = #tpu.dot_dimension_numbers<[1], [0], [0], [1], [0, 0, 1, 1], [], []>} : vector<32x48xf32>, vector<48x48xf32>, vector<32x48xf32> -> vector<32x48xf32>
    %c884 = arith.constant 884 : index
    %c0_47 = arith.constant 0 : index
    %139 = vector.load %arg1[%c884, %c0_47] : memref<912x256xf32, #tpu.memory_space<vmem>>, vector<1x48xf32>
    %140 = vector.broadcast %139 : vector<1x48xf32> to vector<32x48xf32>
    %141 = arith.addf %138, %140 : vector<32x48xf32>
    %142 = tpu.concatenate %88, %110, %132 in 1 : vector<32x12xf32>, vector<32x12xf32>, vector<32x12xf32> -> vector<32x36xf32>
    %c784 = arith.constant 784 : index
    %c128 = arith.constant 128 : index
    %143 = vector.load %arg1[%c784, %c128] : memref<912x256xf32, #tpu.memory_space<vmem>>, vector<36x9xf32>
    %cst_48 = arith.constant dense<0.000000e+00> : vector<32x9xf32>
    %144 = tpu.matmul %142, %143, %cst_48 {dimension_numbers = #tpu.dot_dimension_numbers<[1], [0], [0], [1], [0, 0, 1, 1], [], []>} : vector<32x36xf32>, vector<36x9xf32>, vector<32x9xf32> -> vector<32x9xf32>
    %c0_49 = arith.constant 0 : index
    %c224 = arith.constant 224 : index
    %145 = vector.load %arg2[%c0_49, %c224] : memref<32x256xf32, #tpu.memory_space<vmem>>, vector<32x9xf32>
    tpu.vector_store %arg2[%c0_49, %c224], %144 {strides = array<i32>} : memref<32x256xf32, #tpu.memory_space<vmem>>, vector<32x9xf32>,
    %c784_50 = arith.constant 784 : index
    %c0_51 = arith.constant 0 : index
    %146 = vector.load %arg1[%c784_50, %c0_51] : memref<912x256xf32, #tpu.memory_space<vmem>>, vector<48x96xf32>
    %cst_52 = arith.constant dense<0.000000e+00> : vector<32x96xf32>
    %147 = tpu.matmul %59, %146, %cst_52 {dimension_numbers = #tpu.dot_dimension_numbers<[1], [0], [0], [1], [0, 0, 1, 1], [], []>} : vector<32x48xf32>, vector<48x96xf32>, vector<32x96xf32> -> vector<32x96xf32>
    %c875 = arith.constant 875 : index
    %c0_53 = arith.constant 0 : index
    %148 = vector.load %arg1[%c875, %c0_53] : memref<912x256xf32, #tpu.memory_space<vmem>>, vector<1x96xf32>
    %149 = vector.broadcast %148 : vector<1x96xf32> to vector<32x96xf32>
    %150 = arith.addf %147, %149 : vector<32x96xf32>
    %cst_54 = arith.constant 0.000000e+00 : f32
    %151 = vector.broadcast %cst_54 : f32 to vector<32x96xf32>
    %152 = arith.maximumf %150, %151 : vector<32x96xf32>
    %c576_55 = arith.constant 576 : index
    %c0_56 = arith.constant 0 : index
    %153 = vector.load %arg1[%c576_55, %c0_56] : memref<912x256xf32, #tpu.memory_space<vmem>>, vector<96x96xf32>
    %c876 = arith.constant 876 : index
    %c0_57 = arith.constant 0 : index
    %154 = vector.load %arg1[%c876, %c0_57] : memref<912x256xf32, #tpu.memory_space<vmem>>, vector<1x96xf32>
    %c877 = arith.constant 877 : index
    %c0_58 = arith.constant 0 : index
    %155 = vector.load %arg1[%c877, %c0_58] : memref<912x256xf32, #tpu.memory_space<vmem>>, vector<1x96xf32>
    %cst_59 = arith.constant dense<0.000000e+00> : vector<32x96xf32>
    %156 = tpu.matmul %152, %153, %cst_59 {dimension_numbers = #tpu.dot_dimension_numbers<[1], [0], [0], [1], [0, 0, 1, 1], [], []>} : vector<32x96xf32>, vector<96x96xf32>, vector<32x96xf32> -> vector<32x96xf32>
    %157 = arith.subf %152, %156 : vector<32x96xf32>
    %158 = arith.mulf %157, %157 : vector<32x96xf32>
    %cst_60 = arith.constant dense<0.000000e+00> : vector<32x96xf32>
    %159 = tpu.matmul %158, %153, %cst_60 {dimension_numbers = #tpu.dot_dimension_numbers<[1], [0], [0], [1], [0, 0, 1, 1], [], []>} : vector<32x96xf32>, vector<96x96xf32>, vector<32x96xf32> -> vector<32x96xf32>
    %cst_61 = arith.constant 9.99999974E-6 : f32
    %160 = vector.broadcast %cst_61 : f32 to vector<32x96xf32>
    %161 = arith.addf %159, %160 : vector<32x96xf32>
    %162 = math.rsqrt %161 : vector<32x96xf32>
    %163 = arith.mulf %157, %162 : vector<32x96xf32>
    %164 = vector.broadcast %154 : vector<1x96xf32> to vector<32x96xf32>
    %165 = arith.mulf %163, %164 : vector<32x96xf32>
    %166 = vector.broadcast %155 : vector<1x96xf32> to vector<32x96xf32>
    %167 = arith.addf %165, %166 : vector<32x96xf32>
    %c384 = arith.constant 384 : index
    %c0_62 = arith.constant 0 : index
    %168 = vector.load %arg1[%c384, %c0_62] : memref<912x256xf32, #tpu.memory_space<vmem>>, vector<96x192xf32>
    %cst_63 = arith.constant dense<0.000000e+00> : vector<32x192xf32>
    %169 = tpu.matmul %167, %168, %cst_63 {dimension_numbers = #tpu.dot_dimension_numbers<[1], [0], [0], [1], [0, 0, 1, 1], [], []>} : vector<32x96xf32>, vector<96x192xf32>, vector<32x192xf32> -> vector<32x192xf32>
    %c867 = arith.constant 867 : index
    %c0_64 = arith.constant 0 : index
    %170 = vector.load %arg1[%c867, %c0_64] : memref<912x256xf32, #tpu.memory_space<vmem>>, vector<1x192xf32>
    %171 = vector.broadcast %170 : vector<1x192xf32> to vector<32x192xf32>
    %172 = arith.addf %169, %171 : vector<32x192xf32>
    %cst_65 = arith.constant 0.000000e+00 : f32
    %173 = vector.broadcast %cst_65 : f32 to vector<32x192xf32>
    %174 = arith.maximumf %172, %173 : vector<32x192xf32>
    %c0_66 = arith.constant 0 : index
    %c0_67 = arith.constant 0 : index
    %175 = vector.load %arg1[%c0_66, %c0_67] : memref<912x256xf32, #tpu.memory_space<vmem>>, vector<192x192xf32>
    %c868 = arith.constant 868 : index
    %c0_68 = arith.constant 0 : index
    %176 = vector.load %arg1[%c868, %c0_68] : memref<912x256xf32, #tpu.memory_space<vmem>>, vector<1x192xf32>
    %c869 = arith.constant 869 : index
    %c0_69 = arith.constant 0 : index
    %177 = vector.load %arg1[%c869, %c0_69] : memref<912x256xf32, #tpu.memory_space<vmem>>, vector<1x192xf32>
    %cst_70 = arith.constant dense<0.000000e+00> : vector<32x192xf32>
    %178 = tpu.matmul %174, %175, %cst_70 {dimension_numbers = #tpu.dot_dimension_numbers<[1], [0], [0], [1], [0, 0, 1, 1], [], []>} : vector<32x192xf32>, vector<192x192xf32>, vector<32x192xf32> -> vector<32x192xf32>
    %179 = arith.subf %174, %178 : vector<32x192xf32>
    %180 = arith.mulf %179, %179 : vector<32x192xf32>
    %cst_71 = arith.constant dense<0.000000e+00> : vector<32x192xf32>
    %181 = tpu.matmul %180, %175, %cst_71 {dimension_numbers = #tpu.dot_dimension_numbers<[1], [0], [0], [1], [0, 0, 1, 1], [], []>} : vector<32x192xf32>, vector<192x192xf32>, vector<32x192xf32> -> vector<32x192xf32>
    %cst_72 = arith.constant 9.99999974E-6 : f32
    %182 = vector.broadcast %cst_72 : f32 to vector<32x192xf32>
    %183 = arith.addf %181, %182 : vector<32x192xf32>
    %184 = math.rsqrt %183 : vector<32x192xf32>
    %185 = arith.mulf %179, %184 : vector<32x192xf32>
    %186 = vector.broadcast %176 : vector<1x192xf32> to vector<32x192xf32>
    %187 = arith.mulf %185, %186 : vector<32x192xf32>
    %188 = vector.broadcast %177 : vector<1x192xf32> to vector<32x192xf32>
    %189 = arith.addf %187, %188 : vector<32x192xf32>
    %c192_73 = arith.constant 192 : index
    %c128_74 = arith.constant 128 : index
    %190 = vector.load %arg1[%c192_73, %c128_74] : memref<912x256xf32, #tpu.memory_space<vmem>>, vector<192x96xf32>
    %cst_75 = arith.constant dense<0.000000e+00> : vector<32x96xf32>
    %191 = tpu.matmul %189, %190, %cst_75 {dimension_numbers = #tpu.dot_dimension_numbers<[1], [0], [0], [1], [0, 0, 1, 1], [], []>} : vector<32x192xf32>, vector<192x96xf32>, vector<32x96xf32> -> vector<32x96xf32>
    %c878 = arith.constant 878 : index
    %c0_76 = arith.constant 0 : index
    %192 = vector.load %arg1[%c878, %c0_76] : memref<912x256xf32, #tpu.memory_space<vmem>>, vector<1x96xf32>
    %193 = vector.broadcast %192 : vector<1x96xf32> to vector<32x96xf32>
    %194 = arith.addf %191, %193 : vector<32x96xf32>
    %c576_77 = arith.constant 576 : index
    %c0_78 = arith.constant 0 : index
    %195 = vector.load %arg1[%c576_77, %c0_78] : memref<912x256xf32, #tpu.memory_space<vmem>>, vector<96x96xf32>
    %c879 = arith.constant 879 : index
    %c0_79 = arith.constant 0 : index
    %196 = vector.load %arg1[%c879, %c0_79] : memref<912x256xf32, #tpu.memory_space<vmem>>, vector<1x96xf32>
    %c880 = arith.constant 880 : index
    %c0_80 = arith.constant 0 : index
    %197 = vector.load %arg1[%c880, %c0_80] : memref<912x256xf32, #tpu.memory_space<vmem>>, vector<1x96xf32>
    %cst_81 = arith.constant dense<0.000000e+00> : vector<32x96xf32>
    %198 = tpu.matmul %194, %195, %cst_81 {dimension_numbers = #tpu.dot_dimension_numbers<[1], [0], [0], [1], [0, 0, 1, 1], [], []>} : vector<32x96xf32>, vector<96x96xf32>, vector<32x96xf32> -> vector<32x96xf32>
    %199 = arith.subf %194, %198 : vector<32x96xf32>
    %200 = arith.mulf %199, %199 : vector<32x96xf32>
    %cst_82 = arith.constant dense<0.000000e+00> : vector<32x96xf32>
    %201 = tpu.matmul %200, %195, %cst_82 {dimension_numbers = #tpu.dot_dimension_numbers<[1], [0], [0], [1], [0, 0, 1, 1], [], []>} : vector<32x96xf32>, vector<96x96xf32>, vector<32x96xf32> -> vector<32x96xf32>
    %cst_83 = arith.constant 9.99999974E-6 : f32
    %202 = vector.broadcast %cst_83 : f32 to vector<32x96xf32>
    %203 = arith.addf %201, %202 : vector<32x96xf32>
    %204 = math.rsqrt %203 : vector<32x96xf32>
    %205 = arith.mulf %199, %204 : vector<32x96xf32>
    %206 = vector.broadcast %196 : vector<1x96xf32> to vector<32x96xf32>
    %207 = arith.mulf %205, %206 : vector<32x96xf32>
    %208 = vector.broadcast %197 : vector<1x96xf32> to vector<32x96xf32>
    %209 = arith.addf %207, %208 : vector<32x96xf32>
    %c0_84 = arith.constant 0 : index
    %c128_85 = arith.constant 128 : index
    %210 = vector.load %arg2[%c0_84, %c128_85] : memref<32x256xf32, #tpu.memory_space<vmem>>, vector<32x96xf32>
    tpu.vector_store %arg2[%c0_84, %c128_85], %209 {strides = array<i32>} : memref<32x256xf32, #tpu.memory_space<vmem>>, vector<32x96xf32>,
    %211 = tpu.concatenate %59, %141 in 1 : vector<32x48xf32>, vector<32x48xf32> -> vector<32x96xf32>
    %c384_86 = arith.constant 384 : index
    %c192_87 = arith.constant 192 : index
    %212 = vector.load %arg1[%c384_86, %c192_87] : memref<912x256xf32, #tpu.memory_space<vmem>>, vector<96x64xf32>
    %cst_88 = arith.constant dense<0.000000e+00> : vector<32x64xf32>
    %213 = tpu.matmul %211, %212, %cst_88 {dimension_numbers = #tpu.dot_dimension_numbers<[1], [0], [0], [1], [0, 0, 1, 1], [], []>} : vector<32x96xf32>, vector<96x64xf32>, vector<32x64xf32> -> vector<32x64xf32>
    %c885 = arith.constant 885 : index
    %c0_89 = arith.constant 0 : index
    %214 = vector.load %arg1[%c885, %c0_89] : memref<912x256xf32, #tpu.memory_space<vmem>>, vector<1x64xf32>
    %215 = vector.broadcast %214 : vector<1x64xf32> to vector<32x64xf32>
    %216 = arith.addf %213, %215 : vector<32x64xf32>
    %cst_90 = arith.constant 0.000000e+00 : f32
    %217 = vector.broadcast %cst_90 : f32 to vector<32x64xf32>
    %218 = arith.maximumf %216, %217 : vector<32x64xf32>
    %c672 = arith.constant 672 : index
    %c0_91 = arith.constant 0 : index
    %219 = vector.load %arg1[%c672, %c0_91] : memref<912x256xf32, #tpu.memory_space<vmem>>, vector<64x64xf32>
    %c886 = arith.constant 886 : index
    %c0_92 = arith.constant 0 : index
    %220 = vector.load %arg1[%c886, %c0_92] : memref<912x256xf32, #tpu.memory_space<vmem>>, vector<1x64xf32>
    %c887 = arith.constant 887 : index
    %c0_93 = arith.constant 0 : index
    %221 = vector.load %arg1[%c887, %c0_93] : memref<912x256xf32, #tpu.memory_space<vmem>>, vector<1x64xf32>
    %cst_94 = arith.constant dense<0.000000e+00> : vector<32x64xf32>
    %222 = tpu.matmul %218, %219, %cst_94 {dimension_numbers = #tpu.dot_dimension_numbers<[1], [0], [0], [1], [0, 0, 1, 1], [], []>} : vector<32x64xf32>, vector<64x64xf32>, vector<32x64xf32> -> vector<32x64xf32>
    %223 = arith.subf %218, %222 : vector<32x64xf32>
    %224 = arith.mulf %223, %223 : vector<32x64xf32>
    %cst_95 = arith.constant dense<0.000000e+00> : vector<32x64xf32>
    %225 = tpu.matmul %224, %219, %cst_95 {dimension_numbers = #tpu.dot_dimension_numbers<[1], [0], [0], [1], [0, 0, 1, 1], [], []>} : vector<32x64xf32>, vector<64x64xf32>, vector<32x64xf32> -> vector<32x64xf32>
    %cst_96 = arith.constant 9.99999974E-6 : f32
    %226 = vector.broadcast %cst_96 : f32 to vector<32x64xf32>
    %227 = arith.addf %225, %226 : vector<32x64xf32>
    %228 = math.rsqrt %227 : vector<32x64xf32>
    %229 = arith.mulf %223, %228 : vector<32x64xf32>
    %230 = vector.broadcast %220 : vector<1x64xf32> to vector<32x64xf32>
    %231 = arith.mulf %229, %230 : vector<32x64xf32>
    %232 = vector.broadcast %221 : vector<1x64xf32> to vector<32x64xf32>
    %233 = arith.addf %231, %232 : vector<32x64xf32>
    %c672_97 = arith.constant 672 : index
    %c64 = arith.constant 64 : index
    %234 = vector.load %arg1[%c672_97, %c64] : memref<912x256xf32, #tpu.memory_space<vmem>>, vector<64x4xf32>
    %cst_98 = arith.constant dense<0.000000e+00> : vector<32x4xf32>
    %235 = tpu.matmul %233, %234, %cst_98 {dimension_numbers = #tpu.dot_dimension_numbers<[1], [0], [0], [1], [0, 0, 1, 1], [], []>} : vector<32x64xf32>, vector<64x4xf32>, vector<32x4xf32> -> vector<32x4xf32>
    %c888 = arith.constant 888 : index
    %c0_99 = arith.constant 0 : index
    %236 = vector.load %arg1[%c888, %c0_99] : memref<912x256xf32, #tpu.memory_space<vmem>>, vector<1x4xf32>
    %237 = vector.broadcast %236 : vector<1x4xf32> to vector<32x4xf32>
    %238 = arith.addf %235, %237 : vector<32x4xf32>
    %239 = vector.extract_strided_slice %238 {offsets = [0, 0], sizes = [32, 3], strides = [1, 1]} : vector<32x4xf32> to vector<32x3xf32>
    %cst_100 = arith.constant dense<0xFF800000> : vector<32xf32>
    %240 = vector.multi_reduction <maximumf>, %239, %cst_100 [1] : vector<32x3xf32> to vector<32xf32>
    %241 = vector.shape_cast %240 : vector<32xf32> to vector<32x1xf32>
    %242 = vector.broadcast %241 : vector<32x1xf32> to vector<32x3xf32>
    %243 = arith.subf %239, %242 : vector<32x3xf32>
    %244 = math.exp %243 : vector<32x3xf32>
    %cst_101 = arith.constant dense<0.000000e+00> : vector<32xf32>
    %245 = vector.multi_reduction <add>, %244, %cst_101 [1] : vector<32x3xf32> to vector<32xf32>
    %246 = vector.shape_cast %245 : vector<32xf32> to vector<32x1xf32>
    %247 = vector.broadcast %246 : vector<32x1xf32> to vector<32x3xf32>
    %248 = arith.divf %244, %247 : vector<32x3xf32>
    %249 = vector.extract_strided_slice %238 {offsets = [0, 3], sizes = [32, 1], strides = [1, 1]} : vector<32x4xf32> to vector<32x1xf32>
    %cst_102 = arith.constant 0.000000e+00 : f32
    %250 = vector.broadcast %cst_102 : f32 to vector<32x1xf32>
    %251 = arith.subf %250, %249 : vector<32x1xf32>
    %252 = math.exp %251 : vector<32x1xf32>
    %cst_103 = arith.constant 1.000000e+00 : f32
    %253 = vector.broadcast %cst_103 : f32 to vector<32x1xf32>
    %254 = arith.addf %253, %252 : vector<32x1xf32>
    %cst_104 = arith.constant 1.000000e+00 : f32
    %255 = vector.broadcast %cst_104 : f32 to vector<32x1xf32>
    %256 = arith.divf %255, %254 : vector<32x1xf32>
    %c0_105 = arith.constant 0 : index
    %c233 = arith.constant 233 : index
    %257 = vector.load %arg2[%c0_105, %c233] : memref<32x256xf32, #tpu.memory_space<vmem>>, vector<32x3xf32>
    tpu.vector_store %arg2[%c0_105, %c233], %248 {strides = array<i32>} : memref<32x256xf32, #tpu.memory_space<vmem>>, vector<32x3xf32>,
    %c0_106 = arith.constant 0 : index
    %c236 = arith.constant 236 : index
    %258 = vector.load %arg2[%c0_106, %c236] : memref<32x256xf32, #tpu.memory_space<vmem>>, vector<32x1xf32>
    tpu.vector_store %arg2[%c0_106, %c236], %256 {strides = array<i32>} : memref<32x256xf32, #tpu.memory_space<vmem>>, vector<32x1xf32>,
    %cst_107 = arith.constant 0.000000e+00 : f32
    %259 = vector.broadcast %cst_107 : f32 to vector<32x29xf32>
    %260 = tpu.concatenate %248, %259 in 1 : vector<32x3xf32>, vector<32x29xf32> -> vector<32x32xf32>
    %261 = tpu.transpose %260, [1, 0] : vector<32x32xf32> -> vector<32x32xf32>
    %262 = vector.extract_strided_slice %261 {offsets = [0, 0], sizes = [1, 32], strides = [1, 1]} : vector<32x32xf32> to vector<1x32xf32>
    %263 = vector.extract_strided_slice %261 {offsets = [1, 0], sizes = [1, 32], strides = [1, 1]} : vector<32x32xf32> to vector<1x32xf32>
    %264 = vector.extract_strided_slice %261 {offsets = [2, 0], sizes = [1, 32], strides = [1, 1]} : vector<32x32xf32> to vector<1x32xf32>
    %265 = tpu.concatenate %262, %263, %264 in 1 : vector<1x32xf32>, vector<1x32xf32>, vector<1x32xf32> -> vector<1x96xf32>
    %266 = vector.broadcast %256 : vector<32x1xf32> to vector<32x96xf32>
    %267 = arith.mulf %2, %266 : vector<32x96xf32>
    %268 = vector.broadcast %265 : vector<1x96xf32> to vector<32x96xf32>
    %269 = arith.mulf %267, %268 : vector<32x96xf32>
    %270 = arith.addf %209, %269 : vector<32x96xf32>
    %c480_108 = arith.constant 480 : index
    %c128_109 = arith.constant 128 : index
    %271 = vector.load %arg1[%c480_108, %c128_109] : memref<912x256xf32, #tpu.memory_space<vmem>>, vector<96x96xf32>
    %cst_110 = arith.constant dense<0.000000e+00> : vector<32x96xf32>
    %272 = tpu.matmul %270, %271, %cst_110 {dimension_numbers = #tpu.dot_dimension_numbers<[1], [0], [0], [1], [0, 0, 1, 1], [], []>} : vector<32x96xf32>, vector<96x96xf32>, vector<32x96xf32> -> vector<32x96xf32>
    %c881 = arith.constant 881 : index
    %c0_111 = arith.constant 0 : index
    %273 = vector.load %arg1[%c881, %c0_111] : memref<912x256xf32, #tpu.memory_space<vmem>>, vector<1x96xf32>
    %274 = vector.broadcast %273 : vector<1x96xf32> to vector<32x96xf32>
    %275 = arith.addf %272, %274 : vector<32x96xf32>
    %cst_112 = arith.constant 0.000000e+00 : f32
    %276 = vector.broadcast %cst_112 : f32 to vector<32x96xf32>
    %277 = arith.maximumf %275, %276 : vector<32x96xf32>
    %c576_113 = arith.constant 576 : index
    %c0_114 = arith.constant 0 : index
    %278 = vector.load %arg1[%c576_113, %c0_114] : memref<912x256xf32, #tpu.memory_space<vmem>>, vector<96x96xf32>
    %c882 = arith.constant 882 : index
    %c0_115 = arith.constant 0 : index
    %279 = vector.load %arg1[%c882, %c0_115] : memref<912x256xf32, #tpu.memory_space<vmem>>, vector<1x96xf32>
    %c883 = arith.constant 883 : index
    %c0_116 = arith.constant 0 : index
    %280 = vector.load %arg1[%c883, %c0_116] : memref<912x256xf32, #tpu.memory_space<vmem>>, vector<1x96xf32>
    %cst_117 = arith.constant dense<0.000000e+00> : vector<32x96xf32>
    %281 = tpu.matmul %277, %278, %cst_117 {dimension_numbers = #tpu.dot_dimension_numbers<[1], [0], [0], [1], [0, 0, 1, 1], [], []>} : vector<32x96xf32>, vector<96x96xf32>, vector<32x96xf32> -> vector<32x96xf32>
    %282 = arith.subf %277, %281 : vector<32x96xf32>
    %283 = arith.mulf %282, %282 : vector<32x96xf32>
    %cst_118 = arith.constant dense<0.000000e+00> : vector<32x96xf32>
    %284 = tpu.matmul %283, %278, %cst_118 {dimension_numbers = #tpu.dot_dimension_numbers<[1], [0], [0], [1], [0, 0, 1, 1], [], []>} : vector<32x96xf32>, vector<96x96xf32>, vector<32x96xf32> -> vector<32x96xf32>
    %cst_119 = arith.constant 9.99999974E-6 : f32
    %285 = vector.broadcast %cst_119 : f32 to vector<32x96xf32>
    %286 = arith.addf %284, %285 : vector<32x96xf32>
    %287 = math.rsqrt %286 : vector<32x96xf32>
    %288 = arith.mulf %282, %287 : vector<32x96xf32>
    %289 = vector.broadcast %279 : vector<1x96xf32> to vector<32x96xf32>
    %290 = arith.mulf %288, %289 : vector<32x96xf32>
    %291 = vector.broadcast %280 : vector<1x96xf32> to vector<32x96xf32>
    %292 = arith.addf %290, %291 : vector<32x96xf32>
    %c576_120 = arith.constant 576 : index
    %c192_121 = arith.constant 192 : index
    %293 = vector.load %arg1[%c576_120, %c192_121] : memref<912x256xf32, #tpu.memory_space<vmem>>, vector<96x3xf32>
    %cst_122 = arith.constant dense<0.000000e+00> : vector<32x3xf32>
    %294 = tpu.matmul %292, %293, %cst_122 {dimension_numbers = #tpu.dot_dimension_numbers<[1], [0], [0], [1], [0, 0, 1, 1], [], []>} : vector<32x96xf32>, vector<96x3xf32>, vector<32x3xf32> -> vector<32x3xf32>
    %c888_123 = arith.constant 888 : index
    %c4 = arith.constant 4 : index
    %295 = vector.load %arg1[%c888_123, %c4] : memref<912x256xf32, #tpu.memory_space<vmem>>, vector<1x3xf32>
    %296 = vector.broadcast %295 : vector<1x3xf32> to vector<32x3xf32>
    %297 = arith.addf %294, %296 : vector<32x3xf32>
    %cst_124 = arith.constant 0.000000e+00 : f32
    %298 = vector.broadcast %cst_124 : f32 to vector<32x3xf32>
    %299 = arith.subf %298, %297 : vector<32x3xf32>
    %300 = math.exp %299 : vector<32x3xf32>
    %cst_125 = arith.constant 1.000000e+00 : f32
    %301 = vector.broadcast %cst_125 : f32 to vector<32x3xf32>
    %302 = arith.addf %301, %300 : vector<32x3xf32>
    %cst_126 = arith.constant 1.000000e+00 : f32
    %303 = vector.broadcast %cst_126 : f32 to vector<32x3xf32>
    %304 = arith.divf %303, %302 : vector<32x3xf32>
    %c0_127 = arith.constant 0 : index
    %c237 = arith.constant 237 : index
    %305 = vector.load %arg2[%c0_127, %c237] : memref<32x256xf32, #tpu.memory_space<vmem>>, vector<32x3xf32>
    tpu.vector_store %arg2[%c0_127, %c237], %304 {strides = array<i32>} : memref<32x256xf32, #tpu.memory_space<vmem>>, vector<32x3xf32>,
    %cst_128 = arith.constant 0.000000e+00 : f32
    %306 = vector.broadcast %cst_128 : f32 to vector<32x16xf32>
    %c0_129 = arith.constant 0 : index
    %c240 = arith.constant 240 : index
    %307 = vector.load %arg2[%c0_129, %c240] : memref<32x256xf32, #tpu.memory_space<vmem>>, vector<32x16xf32>
    tpu.vector_store %arg2[%c0_129, %c240], %306 {strides = array<i32>} : memref<32x256xf32, #tpu.memory_space<vmem>>, vector<32x16xf32>,
    %c896_130 = arith.constant 896 : index
    %c128_131 = arith.constant 128 : index
    %308 = vector.load %arg1[%c896_130, %c128_131] : memref<912x256xf32, #tpu.memory_space<vmem>>, vector<3x96xf32>
    %cst_132 = arith.constant dense<0.000000e+00> : vector<32x96xf32>
    %309 = tpu.matmul %304, %308, %cst_132 {dimension_numbers = #tpu.dot_dimension_numbers<[1], [0], [0], [1], [0, 0, 1, 1], [], []>} : vector<32x3xf32>, vector<3x96xf32>, vector<32x96xf32> -> vector<32x96xf32>
    %310 = arith.mulf %309, %270 : vector<32x96xf32>
    %c576_133 = arith.constant 576 : index
    %c128_134 = arith.constant 128 : index
    %311 = vector.load %arg1[%c576_133, %c128_134] : memref<912x256xf32, #tpu.memory_space<vmem>>, vector<96x32xf32>
    %cst_135 = arith.constant dense<0.000000e+00> : vector<32x32xf32>
    %312 = tpu.matmul %310, %311, %cst_135 {dimension_numbers = #tpu.dot_dimension_numbers<[1], [0], [0], [1], [0, 0, 1, 1], [], []>} : vector<32x96xf32>, vector<96x32xf32>, vector<32x32xf32> -> vector<32x32xf32>
    %c0_136 = arith.constant 0 : index
    %c0_137 = arith.constant 0 : index
    %313 = vector.load %arg2[%c0_136, %c0_137] : memref<32x256xf32, #tpu.memory_space<vmem>>, vector<32x32xf32>
    tpu.vector_store %arg2[%c0_136, %c0_137], %312 {strides = array<i32>} : memref<32x256xf32, #tpu.memory_space<vmem>>, vector<32x32xf32>,
    return
  }
}

</mosaic_0001>

<llo_original>
// kernel: exploration_forward.1
$region0: #{exploration_forward.1}
  #allocation0 [shape = 'u32[]', space=smem, size = 0x4, offset = 0x4, fixed_abs, tag = 'smem constant byte address 0x4 - core index']
  #allocation1 [shape = 'u32[144,128]{1,0:T(1,128)}', space=vmem, size = 0x12000, scoped, tag = 'internal scratch']
  %s0 = inlined_call_operand.vmem [shape: f32[32,256], index: 0, kind: input, shape index: {}]
  %s1 = inlined_call_operand.hbm [shape: f32[912,256], index: 1, kind: input, shape index: {}]
  %s2 = inlined_call_operand.vmem [shape: f32[32,256], index: 2, kind: output, shape index: {}]
  %s3 = sld [smem:[#allocation0]]
  $region22: #{exploration_forward.1} parent=0
    _
  %s5 = ssub.s32 1, %s3
  %s6 = scalar_select 0, %s5, %s3
  $region1: #{exploration_forward.1} parent=0
    #allocation2 [shape = 'u8[933888]{0}', space=vmem, size = 0xe4000, scoped, tag = 'input window, operand 1, single buffered']
    #allocation3 [shape = 's32[1]{0}', space=sflag, size = 0x4, scoped, tag = 'scoped memory for exploration_forward.1']
    %7 = vsyncpa [#allocation3], 0
    // Predicated region
    $region2: #{exploration_forward.1} parent=1 // pred_check
      _
    $region3: #{exploration_forward.1} parent=1 // pred_check_branch
      %9 = sbr.rel (0) target = $region5
    $region4: #{exploration_forward.1} parent=1 // pred_region
      _
    $region5: #{exploration_forward.1} parent=1 // pred_fallthru
      _
    // Predicated region
    $region6: #{exploration_forward.1} parent=1 // pred_check
      _
    $region7: #{exploration_forward.1} parent=1 // pred_check_branch
      %11 = sbr.rel (0) target = $region9
    $region8: #{exploration_forward.1} parent=1 // pred_region
      %s13 = ssub.s32 29184, 29184
      %14 = vsyncadd [#allocation3], %s13
      %s15 = sshll.u32 [#allocation2], 4
      %s16 = int_to_ptr.vmem [resolvable:$true] %s15
      %21 = dma.hbm_to_vmem [thread:$0]  %s1, 29184, %s16, [#allocation3], 256, 256, 16
    $region9: #{exploration_forward.1} parent=1 // pred_fallthru
      _
    // Predicated region
    $region10: #{exploration_forward.1} parent=1 // pred_check
      _
    $region11: #{exploration_forward.1} parent=1 // pred_check_branch
      %23 = sbr.rel (0) target = $region13
    $region12: #{exploration_forward.1} parent=1 // pred_region
      %24 = dma.done [#allocation3], 29184
    $region13: #{exploration_forward.1} parent=1 // pred_fallthru
      _
    %v25 = vld [vmem:[%s0] sm:$0xff]
    %v26 = vld [vmem:[%s0 + $0x10] sm:$0xff]
    %v27 = vld [vmem:[%s0 + $0x20] sm:$0xff]
    %v28 = vld [vmem:[%s0 + $0x30] sm:$0xff]
    %v29 = vld [vmem:[%s0] sm:$0xff]
    %v30 = vld [vmem:[%s0 + $0x8] sm:$0xff]
    %v31 = vld [vmem:[%s0 + $0x10] sm:$0xff]
    %v32 = vld [vmem:[%s0 + $0x18] sm:$0xff]
    %v33 = vld [vmem:[%s0 + $0x20] sm:$0xff]
    %v34 = vld [vmem:[%s0 + $0x28] sm:$0xff]
    %v35 = vld [vmem:[%s0 + $0x30] sm:$0xff]
    %v36 = vld [vmem:[%s0 + $0x38] sm:$0xff]
    %v37 = vld [vmem:[#allocation2 + $0x680] sm:$0xff]
    %v38 = vld [vmem:[#allocation2 + $0x688] sm:$0xff]
    %v39 = vld [vmem:[#allocation2 + $0x690] sm:$0xff]
    %v40 = vld [vmem:[#allocation2 + $0x698] sm:$0xff]
    %v41 = vld [vmem:[#allocation2 + $0x6a0] sm:$0xff]
    %v42 = vld [vmem:[#allocation2 + $0x6a8] sm:$0xff]
    %v43 = vld [vmem:[#allocation2 + $0x6b0] sm:$0xff]
    %v44 = vld [vmem:[#allocation2 + $0x6b8] sm:$0xff]
    %s45 = scalar_lea.vmem [#allocation2], 1728
    %v46 = vld [vmem:[%s45] ss:$8 sm:$0x3]
    %v48 = vlaneseq
    %v49 = vshrl.u32 %v48, 7
    %v50 = vsub.s32 0, %v49
    %v51 = vrot.slane %v46, %v50
    %v52 = vlaneseq
    %v53 = vshrl.u32 %v52, 7
    %v54 = vsub.s32 1, %v53
    %v55 = vrot.slane %v46, %v54
    %vm58 = vcmask 261120
    %v60 = vsel %vm58, %v25, 0
    %v63 = vsel %vm58, %v26, 0
    %v66 = vsel %vm58, %v27, 0
    %v69 = vsel %vm58, %v28, 0
    %71 = vmatprep.subr.mxu0 %v38
    %72 = vmatpush1.msra.mxu0 %v37
    %73 = vmatprep.subr.mxu0 %v40
    %74 = vmatpush1.msra.mxu0 %v39
    %75 = vmatprep.subr.mxu0 %v42
    %76 = vmatpush1.msra.mxu0 %v41
    %77 = vmatprep.subr.mxu0 %v44
    %78 = vmatpush1.msra.mxu0 %v43
    %79 = vmatprep.subr.mxu0 0.0
    %80 = vmatpush1.msra.mxu0 0.0
    %81 = vmatprep.subr.mxu0 0.0
    %82 = vmatpush1.msra.mxu0 0.0
    %83 = vmatprep.subr.mxu0 0.0
    %84 = vmatpush1.msra.mxu0 0.0
    %85 = vmatprep.subr.mxu0 0.0
    %86 = vmatpush1.msra.mxu0 0.0
    %87 = vmatprep.subr.mxu0 0.0
    %88 = vmatpush1.msra.mxu0 0.0
    %89 = vmatprep.subr.mxu0 0.0
    %90 = vmatpush1.msra.mxu0 0.0
    %91 = vmatprep.subr.mxu0 0.0
    %92 = vmatpush1.msra.mxu0 0.0
    %93 = vmatprep.subr.mxu0 0.0
    %94 = vmatpush1.msra.mxu0 0.0
    %95 = vmatprep.subr.mxu0 0.0
    %96 = vmatpush1.msra.mxu0 0.0
    %97 = vmatprep.subr.mxu0 0.0
    %98 = vmatpush1.msra.mxu0 0.0
    %99 = vmatprep.subr.mxu0 0.0
    %100 = vmatpush1.msra.mxu0 0.0
    %101 = vmatprep.subr.mxu0 0.0
    %102 = vmatpush1.msra.mxu0 0.0
    %103 = vmatprep.subr.mxu0 0.0
    %104 = vmatpush1.msra.mxu0 0.0
    %105 = vmatprep.subr.mxu0 0.0
    %106 = vmatpush1.msra.mxu0 0.0
    %107 = vmatprep.subr.mxu0 0.0
    %108 = vmatpush1.msra.mxu0 0.0
    %109 = vmatprep.subr.mxu0 0.0
    %110 = vmatpush1.msra.mxu0 0.0
    %111 = vmatprep.subr.mxu0 0.0
    %112 = vmatpush1.msra.mxu0 0.0
    %113 = vmatprep.subr.mxu0 0.0
    %114 = vmatpush1.msra.mxu0 0.0
    %115 = vmatprep.subr.mxu0 0.0
    %116 = vmatpush1.msra.mxu0 0.0
    %117 = vmatprep.subr.mxu0 0.0
    %118 = vmatpush1.msra.mxu0 0.0
    %119 = vmatprep.subr.mxu0 0.0
    %120 = vmatpush1.msra.mxu0 0.0
    %121 = vmatprep.subr.mxu0 0.0
    %122 = vmatpush1.msra.mxu0 0.0
    %123 = vmatprep.subr.mxu0 0.0
    %124 = vmatpush1.msra.mxu0 0.0
    %125 = vmatprep.subr.mxu0 0.0
    %126 = vmatpush1.msra.mxu0 0.0
    %127 = vmatprep.subr.mxu0 0.0
    %128 = vmatpush1.msra.mxu0 0.0
    %129 = vmatprep.subr.mxu0 0.0
    %130 = vmatpush1.msra.mxu0 0.0
    %131 = vmatprep.subr.mxu0 0.0
    %132 = vmatpush1.msra.mxu0 0.0
    %133 = vmatprep.subr.mxu0 0.0
    %134 = vmatpush1.msra.mxu0 0.0
    %135 = vmatprep.mubr.f32.mxu0 0.0
    %136 = vmatmul.mubr.f32.gmra.mrb[0].mxu0 %v60
    %v137 = vpop.f32.mrb[0].mxu0
    %v138 = vadd.f32 %v51, %v137
    %v139 = vpop.f32.mrb[0].mxu0
    %v140 = vadd.f32 %v55, %v139
    %141 = vmatprep.mubr.f32.mxu0 0.0
    %142 = vmatmul.mubr.f32.gmra.mrb[0].mxu0 %v63
    %v143 = vpop.f32.mrb[0].mxu0
    %v144 = vadd.f32 %v51, %v143
    %v145 = vpop.f32.mrb[0].mxu0
    %v146 = vadd.f32 %v55, %v145
    %147 = vmatprep.mubr.f32.mxu0 0.0
    %148 = vmatmul.mubr.f32.gmra.mrb[0].mxu0 %v66
    %v149 = vpop.f32.mrb[0].mxu0
    %v150 = vadd.f32 %v51, %v149
    %v151 = vpop.f32.mrb[0].mxu0
    %v152 = vadd.f32 %v55, %v151
    %153 = vmatprep.mubr.f32.mxu0 0.0
    %154 = vmatmul.mubr.f32.gmra.mrb[0].mxu0 %v69
    %v155 = vpop.f32.mrb[0].mxu0
    %v156 = vadd.f32 %v51, %v155
    %v157 = vpop.f32.mrb[0].mxu0
    %v158 = vadd.f32 %v55, %v157
    %159 = vdwg.mxu0
    %v160 = vmax.f32 %v138, 0.0
    %v161 = vmax.f32 %v140, 0.0
    %v162 = vmax.f32 %v144, 0.0
    %v163 = vmax.f32 %v146, 0.0
    %v164 = vmax.f32 %v150, 0.0
    %v165 = vmax.f32 %v152, 0.0
    %v166 = vmax.f32 %v156, 0.0
    %v167 = vmax.f32 %v158, 0.0
    %v168 = vld [vmem:[#allocation2] sm:$0xff]
    %v169 = vld [vmem:[#allocation2 + $0x8] sm:$0xff]
    %v170 = vld [vmem:[#allocation2 + $0x10] sm:$0xff]
    %v171 = vld [vmem:[#allocation2 + $0x18] sm:$0xff]
    %v172 = vld [vmem:[#allocation2 + $0x20] sm:$0xff]
    %v173 = vld [vmem:[#allocation2 + $0x28] sm:$0xff]
    %v174 = vld [vmem:[#allocation2 + $0x30] sm:$0xff]
    %v175 = vld [vmem:[#allocation2 + $0x38] sm:$0xff]
    %v176 = vld [vmem:[#allocation2 + $0x40] sm:$0xff]
    %v177 = vld [vmem:[#allocation2 + $0x48] sm:$0xff]
    %v178 = vld [vmem:[#allocation2 + $0x50] sm:$0xff]
    %v179 = vld [vmem:[#allocation2 + $0x58] sm:$0xff]
    %v180 = vld [vmem:[#allocation2 + $0x60] sm:$0xff]
    %v181 = vld [vmem:[#allocation2 + $0x68] sm:$0xff]
    %v182 = vld [vmem:[#allocation2 + $0x70] sm:$0xff]
    %v183 = vld [vmem:[#allocation2 + $0x78] sm:$0xff]
    %v184 = vld [vmem:[#allocation2 + $0x80] sm:$0xff]
    %v185 = vld [vmem:[#allocation2 + $0x88] sm:$0xff]
    %v186 = vld [vmem:[#allocation2 + $0x90] sm:$0xff]
    %v187 = vld [vmem:[#allocation2 + $0x98] sm:$0xff]
    %v188 = vld [vmem:[#allocation2 + $0xa0] sm:$0xff]
    %v189 = vld [vmem:[#allocation2 + $0xa8] sm:$0xff]
    %v190 = vld [vmem:[#allocation2 + $0xb0] sm:$0xff]
    %v191 = vld [vmem:[#allocation2 + $0xb8] sm:$0xff]
    %v192 = vld [vmem:[#allocation2 + $0xc0] sm:$0xff]
    %v193 = vld [vmem:[#allocation2 + $0xc8] sm:$0xff]
    %v194 = vld [vmem:[#allocation2 + $0xd0] sm:$0xff]
    %v195 = vld [vmem:[#allocation2 + $0xd8] sm:$0xff]
    %v196 = vld [vmem:[#allocation2 + $0xe0] sm:$0xff]
    %v197 = vld [vmem:[#allocation2 + $0xe8] sm:$0xff]
    %v198 = vld [vmem:[#allocation2 + $0xf0] sm:$0xff]
    %v199 = vld [vmem:[#allocation2 + $0xf8] sm:$0xff]
    %v200 = vld [vmem:[#allocation2 + $0x100] sm:$0xff]
    %v201 = vld [vmem:[#allocation2 + $0x108] sm:$0xff]
    %v202 = vld [vmem:[#allocation2 + $0x110] sm:$0xff]
    %v203 = vld [vmem:[#allocation2 + $0x118] sm:$0xff]
    %v204 = vld [vmem:[#allocation2 + $0x120] sm:$0xff]
    %v205 = vld [vmem:[#allocation2 + $0x128] sm:$0xff]
    %v206 = vld [vmem:[#allocation2 + $0x130] sm:$0xff]
    %v207 = vld [vmem:[#allocation2 + $0x138] sm:$0xff]
    %v208 = vld [vmem:[#allocation2 + $0x140] sm:$0xff]
    %v209 = vld [vmem:[#allocation2 + $0x148] sm:$0xff]
    %v210 = vld [vmem:[#allocation2 + $0x150] sm:$0xff]
    %v211 = vld [vmem:[#allocation2 + $0x158] sm:$0xff]
    %v212 = vld [vmem:[#allocation2 + $0x160] sm:$0xff]
    %v213 = vld [vmem:[#allocation2 + $0x168] sm:$0xff]
    %v214 = vld [vmem:[#allocation2 + $0x170] sm:$0xff]
    %v215 = vld [vmem:[#allocation2 + $0x178] sm:$0xff]
    %s216 = scalar_lea.vmem [#allocation2], 1729
    %v217 = vld [vmem:[%s216] ss:$8 sm:$0x3]
    %s218 = scalar_lea.vmem [#allocation2], 1730
    %v219 = vld [vmem:[%s218] ss:$8 sm:$0x3]
    %vm220 = vcmask 523264
    %v222 = vsel %vm220, %v161, 0
    %v225 = vsel %vm220, %v163, 0
    %v228 = vsel %vm220, %v165, 0
    %v231 = vsel %vm220, %v167, 0
    %233 = vmatprep.subr.mxu0 %v169
    %234 = vmatpush1.msra.mxu0 %v168
    %235 = vmatprep.subr.mxu0 %v171
    %236 = vmatpush1.msra.mxu0 %v170
    %237 = vmatprep.subr.mxu0 %v173
    %238 = vmatpush1.msra.mxu0 %v172
    %239 = vmatprep.subr.mxu0 %v175
    %240 = vmatpush1.msra.mxu0 %v174
    %241 = vmatprep.subr.mxu0 %v177
    %242 = vmatpush1.msra.mxu0 %v176
    %243 = vmatprep.subr.mxu0 %v179
    %244 = vmatpush1.msra.mxu0 %v178
    %245 = vmatprep.subr.mxu0 %v181
    %246 = vmatpush1.msra.mxu0 %v180
    %247 = vmatprep.subr.mxu0 %v183
    %248 = vmatpush1.msra.mxu0 %v182
    %249 = vmatprep.subr.mxu0 %v185
    %250 = vmatpush1.msra.mxu0 %v184
    %251 = vmatprep.subr.mxu0 %v187
    %252 = vmatpush1.msra.mxu0 %v186
    %253 = vmatprep.subr.mxu0 %v189
    %254 = vmatpush1.msra.mxu0 %v188
    %255 = vmatprep.subr.mxu0 %v191
    %256 = vmatpush1.msra.mxu0 %v190
    %257 = vmatprep.subr.mxu0 %v193
    %258 = vmatpush1.msra.mxu0 %v192
    %259 = vmatprep.subr.mxu0 %v195
    %260 = vmatpush1.msra.mxu0 %v194
    %261 = vmatprep.subr.mxu0 %v197
    %262 = vmatpush1.msra.mxu0 %v196
    %263 = vmatprep.subr.mxu0 %v199
    %264 = vmatpush1.msra.mxu0 %v198
    %265 = vmatprep.subr.mxu0 %v201
    %266 = vmatpush1.msra.mxu0 %v200
    %267 = vmatprep.subr.mxu0 %v203
    %268 = vmatpush1.msra.mxu0 %v202
    %269 = vmatprep.subr.mxu0 %v205
    %270 = vmatpush1.msra.mxu0 %v204
    %271 = vmatprep.subr.mxu0 %v207
    %272 = vmatpush1.msra.mxu0 %v206
    %273 = vmatprep.subr.mxu0 %v209
    %274 = vmatpush1.msra.mxu0 %v208
    %275 = vmatprep.subr.mxu0 %v211
    %276 = vmatpush1.msra.mxu0 %v210
    %277 = vmatprep.subr.mxu0 %v213
    %278 = vmatpush1.msra.mxu0 %v212
    %279 = vmatprep.subr.mxu0 %v215
    %280 = vmatpush1.msra.mxu0 %v214
    %281 = vmatprep.subr.mxu0 0.0
    %282 = vmatpush1.msra.mxu0 0.0
    %283 = vmatprep.subr.mxu0 0.0
    %284 = vmatpush1.msra.mxu0 0.0
    %285 = vmatprep.subr.mxu0 0.0
    %286 = vmatpush1.msra.mxu0 0.0
    %287 = vmatprep.subr.mxu0 0.0
    %288 = vmatpush1.msra.mxu0 0.0
    %289 = vmatprep.subr.mxu0 0.0
    %290 = vmatpush1.msra.mxu0 0.0
    %291 = vmatprep.subr.mxu0 0.0
    %292 = vmatpush1.msra.mxu0 0.0
    %293 = vmatprep.subr.mxu0 0.0
    %294 = vmatpush1.msra.mxu0 0.0
    %295 = vmatprep.subr.mxu0 0.0
    %296 = vmatpush1.msra.mxu0 0.0
    %297 = vmatprep.mubr.f32.mxu0 %v222
    %298 = vmatmul.mubr.f32.gmra.mrb[0].mxu0 %v160
    %v299 = vpop.f32.mrb[0].mxu0
    %v300 = vadd.f32 0.0, %v299
    %v301 = vpop.f32.mrb[0].mxu0
    %v302 = vadd.f32 0.0, %v301
    %303 = vmatprep.mubr.f32.mxu0 %v225
    %304 = vmatmul.mubr.f32.gmra.mrb[0].mxu0 %v162
    %v305 = vpop.f32.mrb[0].mxu0
    %v306 = vadd.f32 0.0, %v305
    %v307 = vpop.f32.mrb[0].mxu0
    %v308 = vadd.f32 0.0, %v307
    %309 = vmatprep.mubr.f32.mxu0 %v228
    %310 = vmatmul.mubr.f32.gmra.mrb[0].mxu0 %v164
    %v311 = vpop.f32.mrb[0].mxu0
    %v312 = vadd.f32 0.0, %v311
    %v313 = vpop.f32.mrb[0].mxu0
    %v314 = vadd.f32 0.0, %v313
    %315 = vmatprep.mubr.f32.mxu0 %v231
    %316 = vmatmul.mubr.f32.gmra.mrb[0].mxu0 %v166
    %v317 = vpop.f32.mrb[0].mxu0
    %v318 = vadd.f32 0.0, %v317
    %v319 = vpop.f32.mrb[0].mxu0
    %v320 = vadd.f32 0.0, %v319
    %321 = vdwg.mxu0
    %v322 = vsub.f32 %v160, %v300
    %v323 = vsub.f32 %v161, %v302
    %v324 = vsub.f32 %v162, %v306
    %v325 = vsub.f32 %v163, %v308
    %v326 = vsub.f32 %v164, %v312
    %v327 = vsub.f32 %v165, %v314
    %v328 = vsub.f32 %v166, %v318
    %v329 = vsub.f32 %v167, %v320
    %v330 = vmul.f32 %v322, %v322
    %v331 = vmul.f32 %v323, %v323
    %v332 = vmul.f32 %v324, %v324
    %v333 = vmul.f32 %v325, %v325
    %v334 = vmul.f32 %v326, %v326
    %v335 = vmul.f32 %v327, %v327
    %v336 = vmul.f32 %v328, %v328
    %v337 = vmul.f32 %v329, %v329
    %v339 = vsel %vm220, %v331, 0
    %v342 = vsel %vm220, %v333, 0
    %v345 = vsel %vm220, %v335, 0
    %v348 = vsel %vm220, %v337, 0
    %350 = vmatprep.subr.mxu0 %v169
    %351 = vmatpush1.msra.mxu0 %v168
    %352 = vmatprep.subr.mxu0 %v171
    %353 = vmatpush1.msra.mxu0 %v170
    %354 = vmatprep.subr.mxu0 %v173
    %355 = vmatpush1.msra.mxu0 %v172
    %356 = vmatprep.subr.mxu0 %v175
    %357 = vmatpush1.msra.mxu0 %v174
    %358 = vmatprep.subr.mxu0 %v177
    %359 = vmatpush1.msra.mxu0 %v176
    %360 = vmatprep.subr.mxu0 %v179
    %361 = vmatpush1.msra.mxu0 %v178
    %362 = vmatprep.subr.mxu0 %v181
    %363 = vmatpush1.msra.mxu0 %v180
    %364 = vmatprep.subr.mxu0 %v183
    %365 = vmatpush1.msra.mxu0 %v182
    %366 = vmatprep.subr.mxu0 %v185
    %367 = vmatpush1.msra.mxu0 %v184
    %368 = vmatprep.subr.mxu0 %v187
    %369 = vmatpush1.msra.mxu0 %v186
    %370 = vmatprep.subr.mxu0 %v189
    %371 = vmatpush1.msra.mxu0 %v188
    %372 = vmatprep.subr.mxu0 %v191
    %373 = vmatpush1.msra.mxu0 %v190
    %374 = vmatprep.subr.mxu0 %v193
    %375 = vmatpush1.msra.mxu0 %v192
    %376 = vmatprep.subr.mxu0 %v195
    %377 = vmatpush1.msra.mxu0 %v194
    %378 = vmatprep.subr.mxu0 %v197
    %379 = vmatpush1.msra.mxu0 %v196
    %380 = vmatprep.subr.mxu0 %v199
    %381 = vmatpush1.msra.mxu0 %v198
    %382 = vmatprep.subr.mxu0 %v201
    %383 = vmatpush1.msra.mxu0 %v200
    %384 = vmatprep.subr.mxu0 %v203
    %385 = vmatpush1.msra.mxu0 %v202
    %386 = vmatprep.subr.mxu0 %v205
    %387 = vmatpush1.msra.mxu0 %v204
    %388 = vmatprep.subr.mxu0 %v207
    %389 = vmatpush1.msra.mxu0 %v206
    %390 = vmatprep.subr.mxu0 %v209
    %391 = vmatpush1.msra.mxu0 %v208
    %392 = vmatprep.subr.mxu0 %v211
    %393 = vmatpush1.msra.mxu0 %v210
    %394 = vmatprep.subr.mxu0 %v213
    %395 = vmatpush1.msra.mxu0 %v212
    %396 = vmatprep.subr.mxu0 %v215
    %397 = vmatpush1.msra.mxu0 %v214
    %398 = vmatprep.subr.mxu0 0.0
    %399 = vmatpush1.msra.mxu0 0.0
    %400 = vmatprep.subr.mxu0 0.0
    %401 = vmatpush1.msra.mxu0 0.0
    %402 = vmatprep.subr.mxu0 0.0
    %403 = vmatpush1.msra.mxu0 0.0
    %404 = vmatprep.subr.mxu0 0.0
    %405 = vmatpush1.msra.mxu0 0.0
    %406 = vmatprep.subr.mxu0 0.0
    %407 = vmatpush1.msra.mxu0 0.0
    %408 = vmatprep.subr.mxu0 0.0
    %409 = vmatpush1.msra.mxu0 0.0
    %410 = vmatprep.subr.mxu0 0.0
    %411 = vmatpush1.msra.mxu0 0.0
    %412 = vmatprep.subr.mxu0 0.0
    %413 = vmatpush1.msra.mxu0 0.0
    %414 = vmatprep.mubr.f32.mxu0 %v339
    %415 = vmatmul.mubr.f32.gmra.mrb[0].mxu0 %v330
    %v416 = vpop.f32.mrb[0].mxu0
    %v417 = vadd.f32 1e-05, %v416
    %v418 = vpop.f32.mrb[0].mxu0
    %v419 = vadd.f32 1e-05, %v418
    %420 = vmatprep.mubr.f32.mxu0 %v342
    %421 = vmatmul.mubr.f32.gmra.mrb[0].mxu0 %v332
    %v422 = vpop.f32.mrb[0].mxu0
    %v423 = vadd.f32 1e-05, %v422
    %v424 = vpop.f32.mrb[0].mxu0
    %v425 = vadd.f32 1e-05, %v424
    %426 = vmatprep.mubr.f32.mxu0 %v345
    %427 = vmatmul.mubr.f32.gmra.mrb[0].mxu0 %v334
    %v428 = vpop.f32.mrb[0].mxu0
    %v429 = vadd.f32 1e-05, %v428
    %v430 = vpop.f32.mrb[0].mxu0
    %v431 = vadd.f32 1e-05, %v430
    %432 = vmatprep.mubr.f32.mxu0 %v348
    %433 = vmatmul.mubr.f32.gmra.mrb[0].mxu0 %v336
    %v434 = vpop.f32.mrb[0].mxu0
    %v435 = vadd.f32 1e-05, %v434
    %v436 = vpop.f32.mrb[0].mxu0
    %v437 = vadd.f32 1e-05, %v436
    %438 = vdwg.mxu0
    %v439 = vrsqrt.pop %v417
    %v440 = vrsqrt.pop %v419
    %v441 = vrsqrt.pop %v423
    %v442 = vrsqrt.pop %v425
    %v443 = vrsqrt.pop %v429
    %v444 = vrsqrt.pop %v431
    %v445 = vrsqrt.pop %v435
    %v446 = vrsqrt.pop %v437
    %v447 = vmul.f32 %v322, %v439
    %v448 = vmul.f32 %v323, %v440
    %v449 = vmul.f32 %v324, %v441
    %v450 = vmul.f32 %v325, %v442
    %v451 = vmul.f32 %v326, %v443
    %v452 = vmul.f32 %v327, %v444
    %v453 = vmul.f32 %v328, %v445
    %v454 = vmul.f32 %v329, %v446
    %v456 = vlaneseq
    %v457 = vshrl.u32 %v456, 7
    %v458 = vsub.s32 0, %v457
    %v459 = vrot.slane %v217, %v458
    %v460 = vlaneseq
    %v461 = vshrl.u32 %v460, 7
    %v462 = vsub.s32 1, %v461
    %v463 = vrot.slane %v217, %v462
    %v466 = vmul.f32 %v447, %v459
    %v467 = vmul.f32 %v448, %v463
    %v468 = vmul.f32 %v449, %v459
    %v469 = vmul.f32 %v450, %v463
    %v470 = vmul.f32 %v451, %v459
    %v471 = vmul.f32 %v452, %v463
    %v472 = vmul.f32 %v453, %v459
    %v473 = vmul.f32 %v454, %v463
    %v475 = vlaneseq
    %v476 = vshrl.u32 %v475, 7
    %v477 = vsub.s32 0, %v476
    %v478 = vrot.slane %v219, %v477
    %v479 = vlaneseq
    %v480 = vshrl.u32 %v479, 7
    %v481 = vsub.s32 1, %v480
    %v482 = vrot.slane %v219, %v481
    %v485 = vadd.f32 %v466, %v478
    %v486 = vadd.f32 %v467, %v482
    %v487 = vadd.f32 %v468, %v478
    %v488 = vadd.f32 %v469, %v482
    %v489 = vadd.f32 %v470, %v478
    %v490 = vadd.f32 %v471, %v482
    %v491 = vadd.f32 %v472, %v478
    %v492 = vadd.f32 %v473, %v482
    %v493 = vld [vmem:[#allocation2 + $0x180] sm:$0xff]
    %v494 = vld [vmem:[#allocation2 + $0x190] sm:$0xff]
    %v495 = vld [vmem:[#allocation2 + $0x1a0] sm:$0xff]
    %v496 = vld [vmem:[#allocation2 + $0x1b0] sm:$0xff]
    %v497 = vld [vmem:[#allocation2 + $0x1c0] sm:$0xff]
    %v498 = vld [vmem:[#allocation2 + $0x1d0] sm:$0xff]
    %v499 = vld [vmem:[#allocation2 + $0x1e0] sm:$0xff]
    %v500 = vld [vmem:[#allocation2 + $0x1f0] sm:$0xff]
    %v501 = vld [vmem:[#allocation2 + $0x200] sm:$0xff]
    %v502 = vld [vmem:[#allocation2 + $0x210] sm:$0xff]
    %v503 = vld [vmem:[#allocation2 + $0x220] sm:$0xff]
    %v504 = vld [vmem:[#allocation2 + $0x230] sm:$0xff]
    %v505 = vld [vmem:[#allocation2 + $0x240] sm:$0xff]
    %v506 = vld [vmem:[#allocation2 + $0x250] sm:$0xff]
    %v507 = vld [vmem:[#allocation2 + $0x260] sm:$0xff]
    %v508 = vld [vmem:[#allocation2 + $0x270] sm:$0xff]
    %v509 = vld [vmem:[#allocation2 + $0x280] sm:$0xff]
    %v510 = vld [vmem:[#allocation2 + $0x290] sm:$0xff]
    %v511 = vld [vmem:[#allocation2 + $0x2a0] sm:$0xff]
    %v512 = vld [vmem:[#allocation2 + $0x2b0] sm:$0xff]
    %v513 = vld [vmem:[#allocation2 + $0x2c0] sm:$0xff]
    %v514 = vld [vmem:[#allocation2 + $0x2d0] sm:$0xff]
    %v515 = vld [vmem:[#allocation2 + $0x2e0] sm:$0xff]
    %v516 = vld [vmem:[#allocation2 + $0x2f0] sm:$0xff]
    %v517 = vld [vmem:[#allocation2 + $0x6c7] ss:$0 sm:$0xff]
    %v519 = vsel %vm220, %v486, 0
    %v522 = vsel %vm220, %v488, 0
    %v525 = vsel %vm220, %v490, 0
    %v528 = vsel %vm220, %v492, 0
    %530 = vmatprep.subr.mxu0 0.0
    %531 = vmatpush1.msra.mxu0 %v493
    %532 = vmatprep.subr.mxu0 0.0
    %533 = vmatpush1.msra.mxu0 %v494
    %534 = vmatprep.subr.mxu0 0.0
    %535 = vmatpush1.msra.mxu0 %v495
    %536 = vmatprep.subr.mxu0 0.0
    %537 = vmatpush1.msra.mxu0 %v496
    %538 = vmatprep.subr.mxu0 0.0
    %539 = vmatpush1.msra.mxu0 %v497
    %540 = vmatprep.subr.mxu0 0.0
    %541 = vmatpush1.msra.mxu0 %v498
    %542 = vmatprep.subr.mxu0 0.0
    %543 = vmatpush1.msra.mxu0 %v499
    %544 = vmatprep.subr.mxu0 0.0
    %545 = vmatpush1.msra.mxu0 %v500
    %546 = vmatprep.subr.mxu0 0.0
    %547 = vmatpush1.msra.mxu0 %v501
    %548 = vmatprep.subr.mxu0 0.0
    %549 = vmatpush1.msra.mxu0 %v502
    %550 = vmatprep.subr.mxu0 0.0
    %551 = vmatpush1.msra.mxu0 %v503
    %552 = vmatprep.subr.mxu0 0.0
    %553 = vmatpush1.msra.mxu0 %v504
    %554 = vmatprep.subr.mxu0 0.0
    %555 = vmatpush1.msra.mxu0 %v505
    %556 = vmatprep.subr.mxu0 0.0
    %557 = vmatpush1.msra.mxu0 %v506
    %558 = vmatprep.subr.mxu0 0.0
    %559 = vmatpush1.msra.mxu0 %v507
    %560 = vmatprep.subr.mxu0 0.0
    %561 = vmatpush1.msra.mxu0 %v508
    %562 = vmatprep.subr.mxu0 0.0
    %563 = vmatpush1.msra.mxu0 %v509
    %564 = vmatprep.subr.mxu0 0.0
    %565 = vmatpush1.msra.mxu0 %v510
    %566 = vmatprep.subr.mxu0 0.0
    %567 = vmatpush1.msra.mxu0 %v511
    %568 = vmatprep.subr.mxu0 0.0
    %569 = vmatpush1.msra.mxu0 %v512
    %570 = vmatprep.subr.mxu0 0.0
    %571 = vmatpush1.msra.mxu0 %v513
    %572 = vmatprep.subr.mxu0 0.0
    %573 = vmatpush1.msra.mxu0 %v514
    %574 = vmatprep.subr.mxu0 0.0
    %575 = vmatpush1.msra.mxu0 %v515
    %576 = vmatprep.subr.mxu0 0.0
    %577 = vmatpush1.msra.mxu0 %v516
    %578 = vmatprep.subr.mxu0 0.0
    %579 = vmatpush1.msra.mxu0 0.0
    %580 = vmatprep.subr.mxu0 0.0
    %581 = vmatpush1.msra.mxu0 0.0
    %582 = vmatprep.subr.mxu0 0.0
    %583 = vmatpush1.msra.mxu0 0.0
    %584 = vmatprep.subr.mxu0 0.0
    %585 = vmatpush1.msra.mxu0 0.0
    %586 = vmatprep.subr.mxu0 0.0
    %587 = vmatpush1.msra.mxu0 0.0
    %588 = vmatprep.subr.mxu0 0.0
    %589 = vmatpush1.msra.mxu0 0.0
    %590 = vmatprep.subr.mxu0 0.0
    %591 = vmatpush1.msra.mxu0 0.0
    %592 = vmatprep.subr.mxu0 0.0
    %593 = vmatpush1.msra.mxu0 0.0
    %594 = vmatprep.mubr.f32.mxu0 %v519
    %595 = vmatmul.mubr.f32.gmra.mrb[0].mxu0 %v485
    %v596 = vpop.f32.mrb[0].mxu0
    %v597 = vadd.f32 %v517, %v596
    %v598 = vpop.f32.mrb[0].mxu0
    %599 = vmatprep.mubr.f32.mxu0 %v522
    %600 = vmatmul.mubr.f32.gmra.mrb[0].mxu0 %v487
    %v601 = vpop.f32.mrb[0].mxu0
    %v602 = vadd.f32 %v517, %v601
    %v603 = vpop.f32.mrb[0].mxu0
    %604 = vmatprep.mubr.f32.mxu0 %v525
    %605 = vmatmul.mubr.f32.gmra.mrb[0].mxu0 %v489
    %v606 = vpop.f32.mrb[0].mxu0
    %v607 = vadd.f32 %v517, %v606
    %v608 = vpop.f32.mrb[0].mxu0
    %609 = vmatprep.mubr.f32.mxu0 %v528
    %610 = vmatmul.mubr.f32.gmra.mrb[0].mxu0 %v491
    %v611 = vpop.f32.mrb[0].mxu0
    %v612 = vadd.f32 %v517, %v611
    %v613 = vpop.f32.mrb[0].mxu0
    %614 = vdwg.mxu0
    %v615 = vmax.f32 %v597, 0.0
    %v616 = vmax.f32 %v602, 0.0
    %v617 = vmax.f32 %v607, 0.0
    %v618 = vmax.f32 %v612, 0.0
    %v619 = vld [vmem:[#allocation2 + $0x480] sm:$0xff]
    %v620 = vld [vmem:[#allocation2 + $0x490] sm:$0xff]
    %v621 = vld [vmem:[#allocation2 + $0x4a0] sm:$0xff]
    %v622 = vld [vmem:[#allocation2 + $0x4b0] sm:$0xff]
    %v623 = vld [vmem:[#allocation2 + $0x4c0] sm:$0xff]
    %v624 = vld [vmem:[#allocation2 + $0x4d0] sm:$0xff]
    %v625 = vld [vmem:[#allocation2 + $0x4e0] sm:$0xff]
    %v626 = vld [vmem:[#allocation2 + $0x4f0] sm:$0xff]
    %v627 = vld [vmem:[#allocation2 + $0x500] sm:$0xff]
    %v628 = vld [vmem:[#allocation2 + $0x510] sm:$0xff]
    %v629 = vld [vmem:[#allocation2 + $0x520] sm:$0xff]
    %v630 = vld [vmem:[#allocation2 + $0x530] sm:$0xff]
    %v631 = vld [vmem:[#allocation2 + $0x6d0] ss:$0 sm:$0xff]
    %v632 = vld [vmem:[#allocation2 + $0x6d1] ss:$0 sm:$0xff]
    %vm633 = vcmask 785408
    %v635 = vsel %vm633, %v615, 0
    %v638 = vsel %vm633, %v616, 0
    %v641 = vsel %vm633, %v617, 0
    %v644 = vsel %vm633, %v618, 0
    %646 = vmatprep.subr.mxu0 0.0
    %647 = vmatpush1.msra.mxu0 %v619
    %648 = vmatprep.subr.mxu0 0.0
    %649 = vmatpush1.msra.mxu0 %v620
    %650 = vmatprep.subr.mxu0 0.0
    %651 = vmatpush1.msra.mxu0 %v621
    %652 = vmatprep.subr.mxu0 0.0
    %653 = vmatpush1.msra.mxu0 %v622
    %654 = vmatprep.subr.mxu0 0.0
    %655 = vmatpush1.msra.mxu0 %v623
    %656 = vmatprep.subr.mxu0 0.0
    %657 = vmatpush1.msra.mxu0 %v624
    %658 = vmatprep.subr.mxu0 0.0
    %659 = vmatpush1.msra.mxu0 %v625
    %660 = vmatprep.subr.mxu0 0.0
    %661 = vmatpush1.msra.mxu0 %v626
    %662 = vmatprep.subr.mxu0 0.0
    %663 = vmatpush1.msra.mxu0 %v627
    %664 = vmatprep.subr.mxu0 0.0
    %665 = vmatpush1.msra.mxu0 %v628
    %666 = vmatprep.subr.mxu0 0.0
    %667 = vmatpush1.msra.mxu0 %v629
    %668 = vmatprep.subr.mxu0 0.0
    %669 = vmatpush1.msra.mxu0 %v630
    %670 = vmatprep.subr.mxu0 0.0
    %671 = vmatpush1.msra.mxu0 0.0
    %672 = vmatprep.subr.mxu0 0.0
    %673 = vmatpush1.msra.mxu0 0.0
    %674 = vmatprep.subr.mxu0 0.0
    %675 = vmatpush1.msra.mxu0 0.0
    %676 = vmatprep.subr.mxu0 0.0
    %677 = vmatpush1.msra.mxu0 0.0
    %678 = vmatprep.subr.mxu0 0.0
    %679 = vmatpush1.msra.mxu0 0.0
    %680 = vmatprep.subr.mxu0 0.0
    %681 = vmatpush1.msra.mxu0 0.0
    %682 = vmatprep.subr.mxu0 0.0
    %683 = vmatpush1.msra.mxu0 0.0
    %684 = vmatprep.subr.mxu0 0.0
    %685 = vmatpush1.msra.mxu0 0.0
    %686 = vmatprep.subr.mxu0 0.0
    %687 = vmatpush1.msra.mxu0 0.0
    %688 = vmatprep.subr.mxu0 0.0
    %689 = vmatpush1.msra.mxu0 0.0
    %690 = vmatprep.subr.mxu0 0.0
    %691 = vmatpush1.msra.mxu0 0.0
    %692 = vmatprep.subr.mxu0 0.0
    %693 = vmatpush1.msra.mxu0 0.0
    %694 = vmatprep.subr.mxu0 0.0
    %695 = vmatpush1.msra.mxu0 0.0
    %696 = vmatprep.subr.mxu0 0.0
    %697 = vmatpush1.msra.mxu0 0.0
    %698 = vmatprep.subr.mxu0 0.0
    %699 = vmatpush1.msra.mxu0 0.0
    %700 = vmatprep.subr.mxu0 0.0
    %701 = vmatpush1.msra.mxu0 0.0
    %702 = vmatprep.subr.mxu0 0.0
    %703 = vmatpush1.msra.mxu0 0.0
    %704 = vmatprep.subr.mxu0 0.0
    %705 = vmatpush1.msra.mxu0 0.0
    %706 = vmatprep.subr.mxu0 0.0
    %707 = vmatpush1.msra.mxu0 0.0
    %708 = vmatprep.subr.mxu0 0.0
    %709 = vmatpush1.msra.mxu0 0.0
    %710 = vmatprep.mubr.f32.mxu0 0.0
    %711 = vmatmul.mubr.f32.gmra.mrb[0].mxu0 %v635
    %v712 = vpop.f32.mrb[0].mxu0
    %v713 = vadd.f32 0.0, %v712
    %v714 = vpop.f32.mrb[0].mxu0
    %715 = vmatprep.mubr.f32.mxu0 0.0
    %716 = vmatmul.mubr.f32.gmra.mrb[0].mxu0 %v638
    %v717 = vpop.f32.mrb[0].mxu0
    %v718 = vadd.f32 0.0, %v717
    %v719 = vpop.f32.mrb[0].mxu0
    %720 = vmatprep.mubr.f32.mxu0 0.0
    %721 = vmatmul.mubr.f32.gmra.mrb[0].mxu0 %v641
    %v722 = vpop.f32.mrb[0].mxu0
    %v723 = vadd.f32 0.0, %v722
    %v724 = vpop.f32.mrb[0].mxu0
    %725 = vmatprep.mubr.f32.mxu0 0.0
    %726 = vmatmul.mubr.f32.gmra.mrb[0].mxu0 %v644
    %v727 = vpop.f32.mrb[0].mxu0
    %v728 = vadd.f32 0.0, %v727
    %v729 = vpop.f32.mrb[0].mxu0
    %730 = vdwg.mxu0
    %v731 = vsub.f32 %v615, %v713
    %v732 = vsub.f32 %v616, %v718
    %v733 = vsub.f32 %v617, %v723
    %v734 = vsub.f32 %v618, %v728
    %v735 = vmul.f32 %v731, %v731
    %v736 = vmul.f32 %v732, %v732
    %v737 = vmul.f32 %v733, %v733
    %v738 = vmul.f32 %v734, %v734
    %v740 = vsel %vm633, %v735, 0
    %v743 = vsel %vm633, %v736, 0
    %v746 = vsel %vm633, %v737, 0
    %v749 = vsel %vm633, %v738, 0
    %751 = vmatprep.subr.mxu0 0.0
    %752 = vmatpush1.msra.mxu0 %v619
    %753 = vmatprep.subr.mxu0 0.0
    %754 = vmatpush1.msra.mxu0 %v620
    %755 = vmatprep.subr.mxu0 0.0
    %756 = vmatpush1.msra.mxu0 %v621
    %757 = vmatprep.subr.mxu0 0.0
    %758 = vmatpush1.msra.mxu0 %v622
    %759 = vmatprep.subr.mxu0 0.0
    %760 = vmatpush1.msra.mxu0 %v623
    %761 = vmatprep.subr.mxu0 0.0
    %762 = vmatpush1.msra.mxu0 %v624
    %763 = vmatprep.subr.mxu0 0.0
    %764 = vmatpush1.msra.mxu0 %v625
    %765 = vmatprep.subr.mxu0 0.0
    %766 = vmatpush1.msra.mxu0 %v626
    %767 = vmatprep.subr.mxu0 0.0
    %768 = vmatpush1.msra.mxu0 %v627
    %769 = vmatprep.subr.mxu0 0.0
    %770 = vmatpush1.msra.mxu0 %v628
    %771 = vmatprep.subr.mxu0 0.0
    %772 = vmatpush1.msra.mxu0 %v629
    %773 = vmatprep.subr.mxu0 0.0
    %774 = vmatpush1.msra.mxu0 %v630
    %775 = vmatprep.subr.mxu0 0.0
    %776 = vmatpush1.msra.mxu0 0.0
    %777 = vmatprep.subr.mxu0 0.0
    %778 = vmatpush1.msra.mxu0 0.0
    %779 = vmatprep.subr.mxu0 0.0
    %780 = vmatpush1.msra.mxu0 0.0
    %781 = vmatprep.subr.mxu0 0.0
    %782 = vmatpush1.msra.mxu0 0.0
    %783 = vmatprep.subr.mxu0 0.0
    %784 = vmatpush1.msra.mxu0 0.0
    %785 = vmatprep.subr.mxu0 0.0
    %786 = vmatpush1.msra.mxu0 0.0
    %787 = vmatprep.subr.mxu0 0.0
    %788 = vmatpush1.msra.mxu0 0.0
    %789 = vmatprep.subr.mxu0 0.0
    %790 = vmatpush1.msra.mxu0 0.0
    %791 = vmatprep.subr.mxu0 0.0
    %792 = vmatpush1.msra.mxu0 0.0
    %793 = vmatprep.subr.mxu0 0.0
    %794 = vmatpush1.msra.mxu0 0.0
    %795 = vmatprep.subr.mxu0 0.0
    %796 = vmatpush1.msra.mxu0 0.0
    %797 = vmatprep.subr.mxu0 0.0
    %798 = vmatpush1.msra.mxu0 0.0
    %799 = vmatprep.subr.mxu0 0.0
    %800 = vmatpush1.msra.mxu0 0.0
    %801 = vmatprep.subr.mxu0 0.0
    %802 = vmatpush1.msra.mxu0 0.0
    %803 = vmatprep.subr.mxu0 0.0
    %804 = vmatpush1.msra.mxu0 0.0
    %805 = vmatprep.subr.mxu0 0.0
    %806 = vmatpush1.msra.mxu0 0.0
    %807 = vmatprep.subr.mxu0 0.0
    %808 = vmatpush1.msra.mxu0 0.0
    %809 = vmatprep.subr.mxu0 0.0
    %810 = vmatpush1.msra.mxu0 0.0
    %811 = vmatprep.subr.mxu0 0.0
    %812 = vmatpush1.msra.mxu0 0.0
    %813 = vmatprep.subr.mxu0 0.0
    %814 = vmatpush1.msra.mxu0 0.0
    %815 = vmatprep.mubr.f32.mxu0 0.0
    %816 = vmatmul.mubr.f32.gmra.mrb[0].mxu0 %v740
    %v817 = vpop.f32.mrb[0].mxu0
    %v818 = vadd.f32 1e-05, %v817
    %v819 = vpop.f32.mrb[0].mxu0
    %820 = vmatprep.mubr.f32.mxu0 0.0
    %821 = vmatmul.mubr.f32.gmra.mrb[0].mxu0 %v743
    %v822 = vpop.f32.mrb[0].mxu0
    %v823 = vadd.f32 1e-05, %v822
    %v824 = vpop.f32.mrb[0].mxu0
    %825 = vmatprep.mubr.f32.mxu0 0.0
    %826 = vmatmul.mubr.f32.gmra.mrb[0].mxu0 %v746
    %v827 = vpop.f32.mrb[0].mxu0
    %v828 = vadd.f32 1e-05, %v827
    %v829 = vpop.f32.mrb[0].mxu0
    %830 = vmatprep.mubr.f32.mxu0 0.0
    %831 = vmatmul.mubr.f32.gmra.mrb[0].mxu0 %v749
    %v832 = vpop.f32.mrb[0].mxu0
    %v833 = vadd.f32 1e-05, %v832
    %v834 = vpop.f32.mrb[0].mxu0
    %835 = vdwg.mxu0
    %v836 = vrsqrt.pop %v818
    %v837 = vrsqrt.pop %v823
    %v838 = vrsqrt.pop %v828
    %v839 = vrsqrt.pop %v833
    %v840 = vmul.f32 %v731, %v836
    %v841 = vmul.f32 %v732, %v837
    %v842 = vmul.f32 %v733, %v838
    %v843 = vmul.f32 %v734, %v839
    %v844 = vmul.f32 %v840, %v631
    %v845 = vmul.f32 %v841, %v631
    %v846 = vmul.f32 %v842, %v631
    %v847 = vmul.f32 %v843, %v631
    %v848 = vadd.f32 %v844, %v632
    %v849 = vadd.f32 %v845, %v632
    %v850 = vadd.f32 %v846, %v632
    %v851 = vadd.f32 %v847, %v632
    %v852 = vld [vmem:[#allocation2 + $0x3c0] sm:$0xff]
    %v853 = vld [vmem:[#allocation2 + $0x3d0] sm:$0xff]
    %v854 = vld [vmem:[#allocation2 + $0x3e0] sm:$0xff]
    %v855 = vld [vmem:[#allocation2 + $0x3f0] sm:$0xff]
    %v856 = vld [vmem:[#allocation2 + $0x400] sm:$0xff]
    %v857 = vld [vmem:[#allocation2 + $0x410] sm:$0xff]
    %v858 = vld [vmem:[#allocation2 + $0x420] sm:$0xff]
    %v859 = vld [vmem:[#allocation2 + $0x430] sm:$0xff]
    %v860 = vld [vmem:[#allocation2 + $0x440] sm:$0xff]
    %v861 = vld [vmem:[#allocation2 + $0x450] sm:$0xff]
    %v862 = vld [vmem:[#allocation2 + $0x460] sm:$0xff]
    %v863 = vld [vmem:[#allocation2 + $0x470] sm:$0xff]
    %v864 = vld [vmem:[#allocation2 + $0x6d2] ss:$0 sm:$0xff]
    %v866 = vsel %vm633, %v848, 0
    %v869 = vsel %vm633, %v849, 0
    %v872 = vsel %vm633, %v850, 0
    %v875 = vsel %vm633, %v851, 0
    %877 = vmatprep.subr.mxu0 0.0
    %878 = vmatpush1.msra.mxu0 %v852
    %879 = vmatprep.subr.mxu0 0.0
    %880 = vmatpush1.msra.mxu0 %v853
    %881 = vmatprep.subr.mxu0 0.0
    %882 = vmatpush1.msra.mxu0 %v854
    %883 = vmatprep.subr.mxu0 0.0
    %884 = vmatpush1.msra.mxu0 %v855
    %885 = vmatprep.subr.mxu0 0.0
    %886 = vmatpush1.msra.mxu0 %v856
    %887 = vmatprep.subr.mxu0 0.0
    %888 = vmatpush1.msra.mxu0 %v857
    %889 = vmatprep.subr.mxu0 0.0
    %890 = vmatpush1.msra.mxu0 %v858
    %891 = vmatprep.subr.mxu0 0.0
    %892 = vmatpush1.msra.mxu0 %v859
    %893 = vmatprep.subr.mxu0 0.0
    %894 = vmatpush1.msra.mxu0 %v860
    %895 = vmatprep.subr.mxu0 0.0
    %896 = vmatpush1.msra.mxu0 %v861
    %897 = vmatprep.subr.mxu0 0.0
    %898 = vmatpush1.msra.mxu0 %v862
    %899 = vmatprep.subr.mxu0 0.0
    %900 = vmatpush1.msra.mxu0 %v863
    %901 = vmatprep.subr.mxu0 0.0
    %902 = vmatpush1.msra.mxu0 0.0
    %903 = vmatprep.subr.mxu0 0.0
    %904 = vmatpush1.msra.mxu0 0.0
    %905 = vmatprep.subr.mxu0 0.0
    %906 = vmatpush1.msra.mxu0 0.0
    %907 = vmatprep.subr.mxu0 0.0
    %908 = vmatpush1.msra.mxu0 0.0
    %909 = vmatprep.subr.mxu0 0.0
    %910 = vmatpush1.msra.mxu0 0.0
    %911 = vmatprep.subr.mxu0 0.0
    %912 = vmatpush1.msra.mxu0 0.0
    %913 = vmatprep.subr.mxu0 0.0
    %914 = vmatpush1.msra.mxu0 0.0
    %915 = vmatprep.subr.mxu0 0.0
    %916 = vmatpush1.msra.mxu0 0.0
    %917 = vmatprep.subr.mxu0 0.0
    %918 = vmatpush1.msra.mxu0 0.0
    %919 = vmatprep.subr.mxu0 0.0
    %920 = vmatpush1.msra.mxu0 0.0
    %921 = vmatprep.subr.mxu0 0.0
    %922 = vmatpush1.msra.mxu0 0.0
    %923 = vmatprep.subr.mxu0 0.0
    %924 = vmatpush1.msra.mxu0 0.0
    %925 = vmatprep.subr.mxu0 0.0
    %926 = vmatpush1.msra.mxu0 0.0
    %927 = vmatprep.subr.mxu0 0.0
    %928 = vmatpush1.msra.mxu0 0.0
    %929 = vmatprep.subr.mxu0 0.0
    %930 = vmatpush1.msra.mxu0 0.0
    %931 = vmatprep.subr.mxu0 0.0
    %932 = vmatpush1.msra.mxu0 0.0
    %933 = vmatprep.subr.mxu0 0.0
    %934 = vmatpush1.msra.mxu0 0.0
    %935 = vmatprep.subr.mxu0 0.0
    %936 = vmatpush1.msra.mxu0 0.0
    %937 = vmatprep.subr.mxu0 0.0
    %938 = vmatpush1.msra.mxu0 0.0
    %939 = vmatprep.subr.mxu0 0.0
    %940 = vmatpush1.msra.mxu0 0.0
    %941 = vmatprep.mubr.f32.mxu0 0.0
    %942 = vmatmul.mubr.f32.gmra.mrb[0].mxu0 %v866
    %v943 = vpop.f32.mrb[0].mxu0
    %v944 = vadd.f32 %v864, %v943
    %v945 = vpop.f32.mrb[0].mxu0
    %946 = vmatprep.mubr.f32.mxu0 0.0
    %947 = vmatmul.mubr.f32.gmra.mrb[0].mxu0 %v869
    %v948 = vpop.f32.mrb[0].mxu0
    %v949 = vadd.f32 %v864, %v948
    %v950 = vpop.f32.mrb[0].mxu0
    %951 = vmatprep.mubr.f32.mxu0 0.0
    %952 = vmatmul.mubr.f32.gmra.mrb[0].mxu0 %v872
    %v953 = vpop.f32.mrb[0].mxu0
    %v954 = vadd.f32 %v864, %v953
    %v955 = vpop.f32.mrb[0].mxu0
    %956 = vmatprep.mubr.f32.mxu0 0.0
    %957 = vmatmul.mubr.f32.gmra.mrb[0].mxu0 %v875
    %v958 = vpop.f32.mrb[0].mxu0
    %v959 = vadd.f32 %v864, %v958
    %v960 = vpop.f32.mrb[0].mxu0
    %961 = vdwg.mxu0
    %966 = vrot.lane.b32.xlu0 %v944, 32
    %v967 = vpop.permute.xlu0 %966
    %968 = vrot.lane.b32.xlu0 %v949, 32
    %v969 = vpop.permute.xlu0 %968
    %970 = vrot.lane.b32.xlu0 %v954, 32
    %v971 = vpop.permute.xlu0 %970
    %972 = vrot.lane.b32.xlu0 %v959, 32
    %v973 = vpop.permute.xlu0 %972
    %vm978 = vcmask 1047808
    %979 = vst.msk [vmem:[%s2] sm:$0xff] %vm978, %v967
    %980 = vst.msk [vmem:[%s2 + $0x10] sm:$0xff] %vm978, %v969
    %981 = vst.msk [vmem:[%s2 + $0x20] sm:$0xff] %vm978, %v971
    %982 = vst.msk [vmem:[%s2 + $0x30] sm:$0xff] %vm978, %v973
    %v983 = vmul.f32 %v944, 0.5
    %v984 = vmul.f32 %v949, 0.5
    %v985 = vmul.f32 %v954, 0.5
    %v986 = vmul.f32 %v959, 0.5
    %v987 = vmul.f32 %v983, 1.442695
    %v988 = vpow.pop %v987
    %v989 = vmul.f32 %v984, 1.442695
    %v990 = vpow.pop %v989
    %v991 = vmul.f32 %v985, 1.442695
    %v992 = vpow.pop %v991
    %v993 = vmul.f32 %v986, 1.442695
    %v994 = vpow.pop %v993
    %999 = vrot.lane.b32.xlu0 %v988, 112
    %v1000 = vpop.permute.xlu0 %999
    %1001 = vrot.lane.b32.xlu0 %v990, 112
    %v1002 = vpop.permute.xlu0 %1001
    %1003 = vrot.lane.b32.xlu0 %v992, 112
    %v1004 = vpop.permute.xlu0 %1003
    %1005 = vrot.lane.b32.xlu0 %v994, 112
    %v1006 = vpop.permute.xlu0 %1005
    %v1011 = vmul.f32 %v25, %v1000
    %v1012 = vmul.f32 %v26, %v1002
    %v1013 = vmul.f32 %v27, %v1004
    %v1014 = vmul.f32 %v28, %v1006
    %1019 = vrot.lane.b32.xlu0 %v1011, 96
    %v1020 = vpop.permute.xlu0 %1019
    %1021 = vrot.lane.b32.xlu0 %v1012, 96
    %v1022 = vpop.permute.xlu0 %1021
    %1023 = vrot.lane.b32.xlu0 %v1013, 96
    %v1024 = vpop.permute.xlu0 %1023
    %1025 = vrot.lane.b32.xlu0 %v1014, 96
    %v1026 = vpop.permute.xlu0 %1025
    %v1031 = vadd.f32 %v944, %v1020
    %v1032 = vadd.f32 %v949, %v1022
    %v1033 = vadd.f32 %v954, %v1024
    %v1034 = vadd.f32 %v959, %v1026
    %v1035 = vld [vmem:[#allocation2 + $0x5c0] sm:$0xff]
    %v1036 = vld [vmem:[#allocation2 + $0x5c8] sm:$0xff]
    %v1037 = vld [vmem:[#allocation2 + $0x5d0] sm:$0xff]
    %v1038 = vld [vmem:[#allocation2 + $0x5d8] sm:$0xff]
    %v1039 = vld [vmem:[#allocation2 + $0x5e0] sm:$0xff]
    %v1040 = vld [vmem:[#allocation2 + $0x5e8] sm:$0xff]
    %v1041 = vld [vmem:[#allocation2 + $0x5f0] sm:$0xff]
    %v1042 = vld [vmem:[#allocation2 + $0x5f8] sm:$0xff]
    %v1043 = vld [vmem:[#allocation2 + $0x600] sm:$0xff]
    %v1044 = vld [vmem:[#allocation2 + $0x608] sm:$0xff]
    %v1045 = vld [vmem:[#allocation2 + $0x610] sm:$0xff]
    %v1046 = vld [vmem:[#allocation2 + $0x618] sm:$0xff]
    %s1047 = scalar_lea.vmem [#allocation2], 1734
    %v1048 = vld [vmem:[%s1047] ss:$8 sm:$0x3]
    %v1050 = vlaneseq
    %v1051 = vshrl.u32 %v1050, 7
    %v1052 = vsub.s32 0, %v1051
    %v1053 = vrot.slane %v1048, %v1052
    %v1054 = vlaneseq
    %v1055 = vshrl.u32 %v1054, 7
    %v1056 = vsub.s32 1, %v1055
    %v1057 = vrot.slane %v1048, %v1056
    %vm1060 = vcmask 392192
    %v1062 = vsel %vm1060, %v1031, 0
    %v1065 = vsel %vm1060, %v1032, 0
    %v1068 = vsel %vm1060, %v1033, 0
    %v1071 = vsel %vm1060, %v1034, 0
    %1073 = vmatprep.subr.mxu0 %v1036
    %1074 = vmatpush1.msra.mxu0 %v1035
    %1075 = vmatprep.subr.mxu0 %v1038
    %1076 = vmatpush1.msra.mxu0 %v1037
    %1077 = vmatprep.subr.mxu0 %v1040
    %1078 = vmatpush1.msra.mxu0 %v1039
    %1079 = vmatprep.subr.mxu0 %v1042
    %1080 = vmatpush1.msra.mxu0 %v1041
    %1081 = vmatprep.subr.mxu0 %v1044
    %1082 = vmatpush1.msra.mxu0 %v1043
    %1083 = vmatprep.subr.mxu0 %v1046
    %1084 = vmatpush1.msra.mxu0 %v1045
    %1085 = vmatprep.subr.mxu0 0.0
    %1086 = vmatpush1.msra.mxu0 0.0
    %1087 = vmatprep.subr.mxu0 0.0
    %1088 = vmatpush1.msra.mxu0 0.0
    %1089 = vmatprep.subr.mxu0 0.0
    %1090 = vmatpush1.msra.mxu0 0.0
    %1091 = vmatprep.subr.mxu0 0.0
    %1092 = vmatpush1.msra.mxu0 0.0
    %1093 = vmatprep.subr.mxu0 0.0
    %1094 = vmatpush1.msra.mxu0 0.0
    %1095 = vmatprep.subr.mxu0 0.0
    %1096 = vmatpush1.msra.mxu0 0.0
    %1097 = vmatprep.subr.mxu0 0.0
    %1098 = vmatpush1.msra.mxu0 0.0
    %1099 = vmatprep.subr.mxu0 0.0
    %1100 = vmatpush1.msra.mxu0 0.0
    %1101 = vmatprep.subr.mxu0 0.0
    %1102 = vmatpush1.msra.mxu0 0.0
    %1103 = vmatprep.subr.mxu0 0.0
    %1104 = vmatpush1.msra.mxu0 0.0
    %1105 = vmatprep.subr.mxu0 0.0
    %1106 = vmatpush1.msra.mxu0 0.0
    %1107 = vmatprep.subr.mxu0 0.0
    %1108 = vmatpush1.msra.mxu0 0.0
    %1109 = vmatprep.subr.mxu0 0.0
    %1110 = vmatpush1.msra.mxu0 0.0
    %1111 = vmatprep.subr.mxu0 0.0
    %1112 = vmatpush1.msra.mxu0 0.0
    %1113 = vmatprep.subr.mxu0 0.0
    %1114 = vmatpush1.msra.mxu0 0.0
    %1115 = vmatprep.subr.mxu0 0.0
    %1116 = vmatpush1.msra.mxu0 0.0
    %1117 = vmatprep.subr.mxu0 0.0
    %1118 = vmatpush1.msra.mxu0 0.0
    %1119 = vmatprep.subr.mxu0 0.0
    %1120 = vmatpush1.msra.mxu0 0.0
    %1121 = vmatprep.subr.mxu0 0.0
    %1122 = vmatpush1.msra.mxu0 0.0
    %1123 = vmatprep.subr.mxu0 0.0
    %1124 = vmatpush1.msra.mxu0 0.0
    %1125 = vmatprep.subr.mxu0 0.0
    %1126 = vmatpush1.msra.mxu0 0.0
    %1127 = vmatprep.subr.mxu0 0.0
    %1128 = vmatpush1.msra.mxu0 0.0
    %1129 = vmatprep.subr.mxu0 0.0
    %1130 = vmatpush1.msra.mxu0 0.0
    %1131 = vmatprep.subr.mxu0 0.0
    %1132 = vmatpush1.msra.mxu0 0.0
    %1133 = vmatprep.subr.mxu0 0.0
    %1134 = vmatpush1.msra.mxu0 0.0
    %1135 = vmatprep.subr.mxu0 0.0
    %1136 = vmatpush1.msra.mxu0 0.0
    %1137 = vmatprep.mubr.f32.mxu0 0.0
    %1138 = vmatmul.mubr.f32.gmra.mrb[0].mxu0 %v1062
    %v1139 = vpop.f32.mrb[0].mxu0
    %v1140 = vadd.f32 %v1053, %v1139
    %v1141 = vpop.f32.mrb[0].mxu0
    %v1142 = vadd.f32 %v1057, %v1141
    %1143 = vmatprep.mubr.f32.mxu0 0.0
    %1144 = vmatmul.mubr.f32.gmra.mrb[0].mxu0 %v1065
    %v1145 = vpop.f32.mrb[0].mxu0
    %v1146 = vadd.f32 %v1053, %v1145
    %v1147 = vpop.f32.mrb[0].mxu0
    %v1148 = vadd.f32 %v1057, %v1147
    %1149 = vmatprep.mubr.f32.mxu0 0.0
    %1150 = vmatmul.mubr.f32.gmra.mrb[0].mxu0 %v1068
    %v1151 = vpop.f32.mrb[0].mxu0
    %v1152 = vadd.f32 %v1053, %v1151
    %v1153 = vpop.f32.mrb[0].mxu0
    %v1154 = vadd.f32 %v1057, %v1153
    %1155 = vmatprep.mubr.f32.mxu0 0.0
    %1156 = vmatmul.mubr.f32.gmra.mrb[0].mxu0 %v1071
    %v1157 = vpop.f32.mrb[0].mxu0
    %v1158 = vadd.f32 %v1053, %v1157
    %v1159 = vpop.f32.mrb[0].mxu0
    %v1160 = vadd.f32 %v1057, %v1159
    %1161 = vdwg.mxu0
    %v1162 = vld [vmem:[#allocation2 + $0x700] sm:$0xff]
    %v1163 = vld [vmem:[#allocation2 + $0x710] sm:$0xf]
    %1168 = vrot.lane.b32.xlu0 %v1140, 16
    %v1169 = vpop.permute.xlu0 %1168
    %1170 = vrot.lane.b32.xlu0 %v1146, 16
    %v1171 = vpop.permute.xlu0 %1170
    %1172 = vrot.lane.b32.xlu0 %v1152, 16
    %v1173 = vpop.permute.xlu0 %1172
    %1174 = vrot.lane.b32.xlu0 %v1158, 16
    %v1175 = vpop.permute.xlu0 %1174
    %1180 = vrot.lane.b32.xlu0 %v1140, 32
    %v1181 = vpop.permute.xlu0 %1180
    %1182 = vrot.lane.b32.xlu0 %v1146, 32
    %v1183 = vpop.permute.xlu0 %1182
    %1184 = vrot.lane.b32.xlu0 %v1152, 32
    %v1185 = vpop.permute.xlu0 %1184
    %1186 = vrot.lane.b32.xlu0 %v1158, 32
    %v1187 = vpop.permute.xlu0 %1186
    %vm1192 = vcmask 130048
    %v1193 = vsel %vm1192, %v1140, %v1169
    %v1194 = vsel %vm1192, %v1146, %v1171
    %v1195 = vsel %vm1192, %v1152, %v1173
    %v1196 = vsel %vm1192, %v1158, %v1175
    %v1197 = vsel %vm58, %v1193, %v1181
    %v1198 = vsel %vm58, %v1194, %v1183
    %v1199 = vsel %vm58, %v1195, %v1185
    %v1200 = vsel %vm58, %v1196, %v1187
    %1201 = vrot.lane.b32.xlu0 %v1140, 80
    %v1202 = vpop.permute.xlu0 %1201
    %1203 = vrot.lane.b32.xlu0 %v1146, 80
    %v1204 = vpop.permute.xlu0 %1203
    %1205 = vrot.lane.b32.xlu0 %v1152, 80
    %v1206 = vpop.permute.xlu0 %1205
    %1207 = vrot.lane.b32.xlu0 %v1158, 80
    %v1208 = vpop.permute.xlu0 %1207
    %v1213 = vmul.f32 %v1197, %v1202
    %v1214 = vmul.f32 %v1198, %v1204
    %v1215 = vmul.f32 %v1199, %v1206
    %v1216 = vmul.f32 %v1200, %v1208
    %1223 = vrot.lane.b32.xlu0 %v1036, 64
    %v1224 = vpop.permute.xlu0 %1223
    %1225 = vrot.lane.b32.xlu0 %v1038, 64
    %v1226 = vpop.permute.xlu0 %1225
    %1227 = vrot.lane.b32.xlu0 %v1040, 64
    %v1228 = vpop.permute.xlu0 %1227
    %1229 = vrot.lane.b32.xlu0 %v1042, 64
    %v1230 = vpop.permute.xlu0 %1229
    %1231 = vrot.lane.b32.xlu0 %v1044, 64
    %v1232 = vpop.permute.xlu0 %1231
    %1233 = vrot.lane.b32.xlu0 %v1046, 64
    %v1234 = vpop.permute.xlu0 %1233
    %v1242 = vsel %vm1060, %v1213, 0
    %v1245 = vsel %vm1060, %v1214, 0
    %v1248 = vsel %vm1060, %v1215, 0
    %v1251 = vsel %vm1060, %v1216, 0
    %1253 = vmatprep.subr.mxu0 0.0
    %1254 = vmatpush1.msra.mxu0 %v1224
    %1255 = vmatprep.subr.mxu0 0.0
    %1256 = vmatpush1.msra.mxu0 %v1226
    %1257 = vmatprep.subr.mxu0 0.0
    %1258 = vmatpush1.msra.mxu0 %v1228
    %1259 = vmatprep.subr.mxu0 0.0
    %1260 = vmatpush1.msra.mxu0 %v1230
    %1261 = vmatprep.subr.mxu0 0.0
    %1262 = vmatpush1.msra.mxu0 %v1232
    %1263 = vmatprep.subr.mxu0 0.0
    %1264 = vmatpush1.msra.mxu0 %v1234
    %1265 = vmatprep.subr.mxu0 0.0
    %1266 = vmatpush1.msra.mxu0 0.0
    %1267 = vmatprep.subr.mxu0 0.0
    %1268 = vmatpush1.msra.mxu0 0.0
    %1269 = vmatprep.subr.mxu0 0.0
    %1270 = vmatpush1.msra.mxu0 0.0
    %1271 = vmatprep.subr.mxu0 0.0
    %1272 = vmatpush1.msra.mxu0 0.0
    %1273 = vmatprep.subr.mxu0 0.0
    %1274 = vmatpush1.msra.mxu0 0.0
    %1275 = vmatprep.subr.mxu0 0.0
    %1276 = vmatpush1.msra.mxu0 0.0
    %1277 = vmatprep.subr.mxu0 0.0
    %1278 = vmatpush1.msra.mxu0 0.0
    %1279 = vmatprep.subr.mxu0 0.0
    %1280 = vmatpush1.msra.mxu0 0.0
    %1281 = vmatprep.subr.mxu0 0.0
    %1282 = vmatpush1.msra.mxu0 0.0
    %1283 = vmatprep.subr.mxu0 0.0
    %1284 = vmatpush1.msra.mxu0 0.0
    %1285 = vmatprep.subr.mxu0 0.0
    %1286 = vmatpush1.msra.mxu0 0.0
    %1287 = vmatprep.subr.mxu0 0.0
    %1288 = vmatpush1.msra.mxu0 0.0
    %1289 = vmatprep.subr.mxu0 0.0
    %1290 = vmatpush1.msra.mxu0 0.0
    %1291 = vmatprep.subr.mxu0 0.0
    %1292 = vmatpush1.msra.mxu0 0.0
    %1293 = vmatprep.subr.mxu0 0.0
    %1294 = vmatpush1.msra.mxu0 0.0
    %1295 = vmatprep.subr.mxu0 0.0
    %1296 = vmatpush1.msra.mxu0 0.0
    %1297 = vmatprep.subr.mxu0 0.0
    %1298 = vmatpush1.msra.mxu0 0.0
    %1299 = vmatprep.subr.mxu0 0.0
    %1300 = vmatpush1.msra.mxu0 0.0
    %1301 = vmatprep.subr.mxu0 0.0
    %1302 = vmatpush1.msra.mxu0 0.0
    %1303 = vmatprep.subr.mxu0 0.0
    %1304 = vmatpush1.msra.mxu0 0.0
    %1305 = vmatprep.subr.mxu0 0.0
    %1306 = vmatpush1.msra.mxu0 0.0
    %1307 = vmatprep.subr.mxu0 0.0
    %1308 = vmatpush1.msra.mxu0 0.0
    %1309 = vmatprep.subr.mxu0 0.0
    %1310 = vmatpush1.msra.mxu0 0.0
    %1311 = vmatprep.subr.mxu0 0.0
    %1312 = vmatpush1.msra.mxu0 0.0
    %1313 = vmatprep.subr.mxu0 0.0
    %1314 = vmatpush1.msra.mxu0 0.0
    %1315 = vmatprep.subr.mxu0 0.0
    %1316 = vmatpush1.msra.mxu0 0.0
    %1317 = vmatprep.mubr.f32.mxu0 0.0
    %1318 = vmatmul.mubr.f32.gmra.mrb[0].mxu0 %v1242
    %v1319 = vpop.f32.mrb[0].mxu0
    %v1320 = vadd.f32 0.0, %v1319
    %v1321 = vpop.f32.mrb[0].mxu0
    %1322 = vmatprep.mubr.f32.mxu0 0.0
    %1323 = vmatmul.mubr.f32.gmra.mrb[0].mxu0 %v1245
    %v1324 = vpop.f32.mrb[0].mxu0
    %v1325 = vadd.f32 0.0, %v1324
    %v1326 = vpop.f32.mrb[0].mxu0
    %1327 = vmatprep.mubr.f32.mxu0 0.0
    %1328 = vmatmul.mubr.f32.gmra.mrb[0].mxu0 %v1248
    %v1329 = vpop.f32.mrb[0].mxu0
    %v1330 = vadd.f32 0.0, %v1329
    %v1331 = vpop.f32.mrb[0].mxu0
    %1332 = vmatprep.mubr.f32.mxu0 0.0
    %1333 = vmatmul.mubr.f32.gmra.mrb[0].mxu0 %v1251
    %v1334 = vpop.f32.mrb[0].mxu0
    %v1335 = vadd.f32 0.0, %v1334
    %v1336 = vpop.f32.mrb[0].mxu0
    %1337 = vdwg.mxu0
    %1342 = vrot.lane.b32.xlu0 %v1320, 124
    %v1343 = vpop.permute.xlu0 %1342
    %1344 = vrot.lane.b32.xlu0 %v1325, 124
    %v1345 = vpop.permute.xlu0 %1344
    %1346 = vrot.lane.b32.xlu0 %v1330, 124
    %v1347 = vpop.permute.xlu0 %1346
    %1348 = vrot.lane.b32.xlu0 %v1335, 124
    %v1349 = vpop.permute.xlu0 %1348
    %v1354 = vmax.f32 %v1320, %v1343
    %v1355 = vmax.f32 %v1325, %v1345
    %v1356 = vmax.f32 %v1330, %v1347
    %v1357 = vmax.f32 %v1335, %v1349
    %1358 = vrot.lane.b32.xlu0 %v1320, 120
    %v1359 = vpop.permute.xlu0 %1358
    %1360 = vrot.lane.b32.xlu0 %v1325, 120
    %v1361 = vpop.permute.xlu0 %1360
    %1362 = vrot.lane.b32.xlu0 %v1330, 120
    %v1363 = vpop.permute.xlu0 %1362
    %1364 = vrot.lane.b32.xlu0 %v1335, 120
    %v1365 = vpop.permute.xlu0 %1364
    %v1370 = vmax.f32 %v1354, %v1359
    %v1371 = vmax.f32 %v1355, %v1361
    %v1372 = vmax.f32 %v1356, %v1363
    %v1373 = vmax.f32 %v1357, %v1365
    %1378 = vrot.lane.b32.xlu0 %v1370, 4
    %v1379 = vpop.permute.xlu0 %1378
    %1380 = vrot.lane.b32.xlu0 %v1371, 4
    %v1381 = vpop.permute.xlu0 %1380
    %1382 = vrot.lane.b32.xlu0 %v1372, 4
    %v1383 = vpop.permute.xlu0 %1382
    %1384 = vrot.lane.b32.xlu0 %v1373, 4
    %v1385 = vpop.permute.xlu0 %1384
    %1390 = vrot.lane.b32.xlu0 %v1370, 8
    %v1391 = vpop.permute.xlu0 %1390
    %1392 = vrot.lane.b32.xlu0 %v1371, 8
    %v1393 = vpop.permute.xlu0 %1392
    %1394 = vrot.lane.b32.xlu0 %v1372, 8
    %v1395 = vpop.permute.xlu0 %1394
    %1396 = vrot.lane.b32.xlu0 %v1373, 8
    %v1397 = vpop.permute.xlu0 %1396
    %vm1402 = vcmask 31744
    %v1403 = vsel %vm1402, %v1370, %v1379
    %v1404 = vsel %vm1402, %v1371, %v1381
    %v1405 = vsel %vm1402, %v1372, %v1383
    %v1406 = vsel %vm1402, %v1373, %v1385
    %vm1407 = vcmask 64512
    %v1408 = vsel %vm1407, %v1403, %v1391
    %v1409 = vsel %vm1407, %v1404, %v1393
    %v1410 = vsel %vm1407, %v1405, %v1395
    %v1411 = vsel %vm1407, %v1406, %v1397
    %v1412 = vsub.f32 %v1320, %v1408
    %v1413 = vsub.f32 %v1325, %v1409
    %v1414 = vsub.f32 %v1330, %v1410
    %v1415 = vsub.f32 %v1335, %v1411
    %v1416 = vmul.f32 %v1412, 1.442695
    %v1417 = vpow.pop %v1416
    %v1418 = vmul.f32 %v1413, 1.442695
    %v1419 = vpow.pop %v1418
    %v1420 = vmul.f32 %v1414, 1.442695
    %v1421 = vpow.pop %v1420
    %v1422 = vmul.f32 %v1415, 1.442695
    %v1423 = vpow.pop %v1422
    %1428 = vrot.lane.b32.xlu0 %v1417, 124
    %v1429 = vpop.permute.xlu0 %1428
    %1430 = vrot.lane.b32.xlu0 %v1419, 124
    %v1431 = vpop.permute.xlu0 %1430
    %1432 = vrot.lane.b32.xlu0 %v1421, 124
    %v1433 = vpop.permute.xlu0 %1432
    %1434 = vrot.lane.b32.xlu0 %v1423, 124
    %v1435 = vpop.permute.xlu0 %1434
    %v1440 = vadd.f32 %v1417, %v1429
    %v1441 = vadd.f32 %v1419, %v1431
    %v1442 = vadd.f32 %v1421, %v1433
    %v1443 = vadd.f32 %v1423, %v1435
    %1444 = vrot.lane.b32.xlu0 %v1417, 120
    %v1445 = vpop.permute.xlu0 %1444
    %1446 = vrot.lane.b32.xlu0 %v1419, 120
    %v1447 = vpop.permute.xlu0 %1446
    %1448 = vrot.lane.b32.xlu0 %v1421, 120
    %v1449 = vpop.permute.xlu0 %1448
    %1450 = vrot.lane.b32.xlu0 %v1423, 120
    %v1451 = vpop.permute.xlu0 %1450
    %v1456 = vadd.f32 %v1440, %v1445
    %v1457 = vadd.f32 %v1441, %v1447
    %v1458 = vadd.f32 %v1442, %v1449
    %v1459 = vadd.f32 %v1443, %v1451
    %1464 = vrot.lane.b32.xlu0 %v1456, 4
    %v1465 = vpop.permute.xlu0 %1464
    %1466 = vrot.lane.b32.xlu0 %v1457, 4
    %v1467 = vpop.permute.xlu0 %1466
    %1468 = vrot.lane.b32.xlu0 %v1458, 4
    %v1469 = vpop.permute.xlu0 %1468
    %1470 = vrot.lane.b32.xlu0 %v1459, 4
    %v1471 = vpop.permute.xlu0 %1470
    %1476 = vrot.lane.b32.xlu0 %v1456, 8
    %v1477 = vpop.permute.xlu0 %1476
    %1478 = vrot.lane.b32.xlu0 %v1457, 8
    %v1479 = vpop.permute.xlu0 %1478
    %1480 = vrot.lane.b32.xlu0 %v1458, 8
    %v1481 = vpop.permute.xlu0 %1480
    %1482 = vrot.lane.b32.xlu0 %v1459, 8
    %v1483 = vpop.permute.xlu0 %1482
    %v1488 = vsel %vm1402, %v1456, %v1465
    %v1489 = vsel %vm1402, %v1457, %v1467
    %v1490 = vsel %vm1402, %v1458, %v1469
    %v1491 = vsel %vm1402, %v1459, %v1471
    %v1492 = vsel %vm1407, %v1488, %v1477
    %v1493 = vsel %vm1407, %v1489, %v1479
    %v1494 = vsel %vm1407, %v1490, %v1481
    %v1495 = vsel %vm1407, %v1491, %v1483
    %v1496 = vrcp.pop %v1492
    %v1497 = vmul.f32 %v1417, %v1496
    %v1498 = vrcp.pop %v1493
    %v1499 = vmul.f32 %v1419, %v1498
    %v1500 = vrcp.pop %v1494
    %v1501 = vmul.f32 %v1421, %v1500
    %v1502 = vrcp.pop %v1495
    %v1503 = vmul.f32 %v1423, %v1502
    %vm1504 = vcmask 97280
    %v1506 = vsel %vm1504, %v1497, 0
    %v1509 = vsel %vm1504, %v1499, 0
    %v1512 = vsel %vm1504, %v1501, 0
    %v1515 = vsel %vm1504, %v1503, 0
    %vm1517 = vcmask 1043456
    %v1519 = vsel %vm1517, %v1163, 0
    %1521 = vmatprep.subr.mxu0 0.0
    %1522 = vmatpush1.msra.mxu0 %v1162
    %1523 = vmatprep.subr.mxu0 0.0
    %1524 = vmatpush1.msra.mxu0 %v1519
    %1525 = vmatprep.subr.mxu0 0.0
    %1526 = vmatpush1.msra.mxu0 0.0
    %1527 = vmatprep.subr.mxu0 0.0
    %1528 = vmatpush1.msra.mxu0 0.0
    %1529 = vmatprep.subr.mxu0 0.0
    %1530 = vmatpush1.msra.mxu0 0.0
    %1531 = vmatprep.subr.mxu0 0.0
    %1532 = vmatpush1.msra.mxu0 0.0
    %1533 = vmatprep.subr.mxu0 0.0
    %1534 = vmatpush1.msra.mxu0 0.0
    %1535 = vmatprep.subr.mxu0 0.0
    %1536 = vmatpush1.msra.mxu0 0.0
    %1537 = vmatprep.subr.mxu0 0.0
    %1538 = vmatpush1.msra.mxu0 0.0
    %1539 = vmatprep.subr.mxu0 0.0
    %1540 = vmatpush1.msra.mxu0 0.0
    %1541 = vmatprep.subr.mxu0 0.0
    %1542 = vmatpush1.msra.mxu0 0.0
    %1543 = vmatprep.subr.mxu0 0.0
    %1544 = vmatpush1.msra.mxu0 0.0
    %1545 = vmatprep.subr.mxu0 0.0
    %1546 = vmatpush1.msra.mxu0 0.0
    %1547 = vmatprep.subr.mxu0 0.0
    %1548 = vmatpush1.msra.mxu0 0.0
    %1549 = vmatprep.subr.mxu0 0.0
    %1550 = vmatpush1.msra.mxu0 0.0
    %1551 = vmatprep.subr.mxu0 0.0
    %1552 = vmatpush1.msra.mxu0 0.0
    %1553 = vmatprep.subr.mxu0 0.0
    %1554 = vmatpush1.msra.mxu0 0.0
    %1555 = vmatprep.subr.mxu0 0.0
    %1556 = vmatpush1.msra.mxu0 0.0
    %1557 = vmatprep.subr.mxu0 0.0
    %1558 = vmatpush1.msra.mxu0 0.0
    %1559 = vmatprep.subr.mxu0 0.0
    %1560 = vmatpush1.msra.mxu0 0.0
    %1561 = vmatprep.subr.mxu0 0.0
    %1562 = vmatpush1.msra.mxu0 0.0
    %1563 = vmatprep.subr.mxu0 0.0
    %1564 = vmatpush1.msra.mxu0 0.0
    %1565 = vmatprep.subr.mxu0 0.0
    %1566 = vmatpush1.msra.mxu0 0.0
    %1567 = vmatprep.subr.mxu0 0.0
    %1568 = vmatpush1.msra.mxu0 0.0
    %1569 = vmatprep.subr.mxu0 0.0
    %1570 = vmatpush1.msra.mxu0 0.0
    %1571 = vmatprep.subr.mxu0 0.0
    %1572 = vmatpush1.msra.mxu0 0.0
    %1573 = vmatprep.subr.mxu0 0.0
    %1574 = vmatpush1.msra.mxu0 0.0
    %1575 = vmatprep.subr.mxu0 0.0
    %1576 = vmatpush1.msra.mxu0 0.0
    %1577 = vmatprep.subr.mxu0 0.0
    %1578 = vmatpush1.msra.mxu0 0.0
    %1579 = vmatprep.subr.mxu0 0.0
    %1580 = vmatpush1.msra.mxu0 0.0
    %1581 = vmatprep.subr.mxu0 0.0
    %1582 = vmatpush1.msra.mxu0 0.0
    %1583 = vmatprep.subr.mxu0 0.0
    %1584 = vmatpush1.msra.mxu0 0.0
    %1585 = vmatprep.mubr.f32.mxu0 0.0
    %1586 = vmatmul.mubr.f32.gmra.mrb[0].mxu0 %v1506
    %v1587 = vpop.f32.mrb[0].mxu0
    %v1588 = vadd.f32 0.0, %v1587
    %v1589 = vpop.f32.mrb[0].mxu0
    %1590 = vmatprep.mubr.f32.mxu0 0.0
    %1591 = vmatmul.mubr.f32.gmra.mrb[0].mxu0 %v1509
    %v1592 = vpop.f32.mrb[0].mxu0
    %v1593 = vadd.f32 0.0, %v1592
    %v1594 = vpop.f32.mrb[0].mxu0
    %1595 = vmatprep.mubr.f32.mxu0 0.0
    %1596 = vmatmul.mubr.f32.gmra.mrb[0].mxu0 %v1512
    %v1597 = vpop.f32.mrb[0].mxu0
    %v1598 = vadd.f32 0.0, %v1597
    %v1599 = vpop.f32.mrb[0].mxu0
    %1600 = vmatprep.mubr.f32.mxu0 0.0
    %1601 = vmatmul.mubr.f32.gmra.mrb[0].mxu0 %v1515
    %v1602 = vpop.f32.mrb[0].mxu0
    %v1603 = vadd.f32 0.0, %v1602
    %v1604 = vpop.f32.mrb[0].mxu0
    %1605 = vdwg.mxu0
    %1610 = vrot.lane.b32.xlu0 %v1142, 32
    %v1611 = vpop.permute.xlu0 %1610
    %1612 = vrot.lane.b32.xlu0 %v1148, 32
    %v1613 = vpop.permute.xlu0 %1612
    %1614 = vrot.lane.b32.xlu0 %v1154, 32
    %v1615 = vpop.permute.xlu0 %1614
    %1616 = vrot.lane.b32.xlu0 %v1160, 32
    %v1617 = vpop.permute.xlu0 %1616
    %v1618 = vsel %vm58, %v1181, %v1611
    %v1619 = vsel %vm58, %v1183, %v1613
    %v1620 = vsel %vm58, %v1185, %v1615
    %v1621 = vsel %vm58, %v1187, %v1617
    %v1626 = vmul.f32 %v1588, %v1618
    %v1627 = vmul.f32 %v1593, %v1619
    %v1628 = vmul.f32 %v1598, %v1620
    %v1629 = vmul.f32 %v1603, %v1621
    %1630 = vrot.lane.b32.xlu0 %v1036, 52
    %v1631 = vpop.permute.xlu0 %1630
    %1632 = vrot.lane.b32.xlu0 %v1038, 52
    %v1633 = vpop.permute.xlu0 %1632
    %1634 = vrot.lane.b32.xlu0 %v1040, 52
    %v1635 = vpop.permute.xlu0 %1634
    %1636 = vrot.lane.b32.xlu0 %v1042, 52
    %v1637 = vpop.permute.xlu0 %1636
    %1638 = vrot.lane.b32.xlu0 %v1044, 52
    %v1639 = vpop.permute.xlu0 %1638
    %1640 = vrot.lane.b32.xlu0 %v1046, 52
    %v1641 = vpop.permute.xlu0 %1640
    %v1649 = vsel %vm1060, %v1626, 0
    %v1652 = vsel %vm1060, %v1627, 0
    %v1655 = vsel %vm1060, %v1628, 0
    %v1658 = vsel %vm1060, %v1629, 0
    %1660 = vmatprep.subr.mxu0 0.0
    %1661 = vmatpush1.msra.mxu0 %v1631
    %1662 = vmatprep.subr.mxu0 0.0
    %1663 = vmatpush1.msra.mxu0 %v1633
    %1664 = vmatprep.subr.mxu0 0.0
    %1665 = vmatpush1.msra.mxu0 %v1635
    %1666 = vmatprep.subr.mxu0 0.0
    %1667 = vmatpush1.msra.mxu0 %v1637
    %1668 = vmatprep.subr.mxu0 0.0
    %1669 = vmatpush1.msra.mxu0 %v1639
    %1670 = vmatprep.subr.mxu0 0.0
    %1671 = vmatpush1.msra.mxu0 %v1641
    %1672 = vmatprep.subr.mxu0 0.0
    %1673 = vmatpush1.msra.mxu0 0.0
    %1674 = vmatprep.subr.mxu0 0.0
    %1675 = vmatpush1.msra.mxu0 0.0
    %1676 = vmatprep.subr.mxu0 0.0
    %1677 = vmatpush1.msra.mxu0 0.0
    %1678 = vmatprep.subr.mxu0 0.0
    %1679 = vmatpush1.msra.mxu0 0.0
    %1680 = vmatprep.subr.mxu0 0.0
    %1681 = vmatpush1.msra.mxu0 0.0
    %1682 = vmatprep.subr.mxu0 0.0
    %1683 = vmatpush1.msra.mxu0 0.0
    %1684 = vmatprep.subr.mxu0 0.0
    %1685 = vmatpush1.msra.mxu0 0.0
    %1686 = vmatprep.subr.mxu0 0.0
    %1687 = vmatpush1.msra.mxu0 0.0
    %1688 = vmatprep.subr.mxu0 0.0
    %1689 = vmatpush1.msra.mxu0 0.0
    %1690 = vmatprep.subr.mxu0 0.0
    %1691 = vmatpush1.msra.mxu0 0.0
    %1692 = vmatprep.subr.mxu0 0.0
    %1693 = vmatpush1.msra.mxu0 0.0
    %1694 = vmatprep.subr.mxu0 0.0
    %1695 = vmatpush1.msra.mxu0 0.0
    %1696 = vmatprep.subr.mxu0 0.0
    %1697 = vmatpush1.msra.mxu0 0.0
    %1698 = vmatprep.subr.mxu0 0.0
    %1699 = vmatpush1.msra.mxu0 0.0
    %1700 = vmatprep.subr.mxu0 0.0
    %1701 = vmatpush1.msra.mxu0 0.0
    %1702 = vmatprep.subr.mxu0 0.0
    %1703 = vmatpush1.msra.mxu0 0.0
    %1704 = vmatprep.subr.mxu0 0.0
    %1705 = vmatpush1.msra.mxu0 0.0
    %1706 = vmatprep.subr.mxu0 0.0
    %1707 = vmatpush1.msra.mxu0 0.0
    %1708 = vmatprep.subr.mxu0 0.0
    %1709 = vmatpush1.msra.mxu0 0.0
    %1710 = vmatprep.subr.mxu0 0.0
    %1711 = vmatpush1.msra.mxu0 0.0
    %1712 = vmatprep.subr.mxu0 0.0
    %1713 = vmatpush1.msra.mxu0 0.0
    %1714 = vmatprep.subr.mxu0 0.0
    %1715 = vmatpush1.msra.mxu0 0.0
    %1716 = vmatprep.subr.mxu0 0.0
    %1717 = vmatpush1.msra.mxu0 0.0
    %1718 = vmatprep.subr.mxu0 0.0
    %1719 = vmatpush1.msra.mxu0 0.0
    %1720 = vmatprep.subr.mxu0 0.0
    %1721 = vmatpush1.msra.mxu0 0.0
    %1722 = vmatprep.subr.mxu0 0.0
    %1723 = vmatpush1.msra.mxu0 0.0
    %1724 = vmatprep.mubr.f32.mxu0 0.0
    %1725 = vmatmul.mubr.f32.gmra.mrb[0].mxu0 %v1649
    %v1726 = vpop.f32.mrb[0].mxu0
    %v1727 = vadd.f32 0.0, %v1726
    %v1728 = vpop.f32.mrb[0].mxu0
    %1729 = vmatprep.mubr.f32.mxu0 0.0
    %1730 = vmatmul.mubr.f32.gmra.mrb[0].mxu0 %v1652
    %v1731 = vpop.f32.mrb[0].mxu0
    %v1732 = vadd.f32 0.0, %v1731
    %v1733 = vpop.f32.mrb[0].mxu0
    %1734 = vmatprep.mubr.f32.mxu0 0.0
    %1735 = vmatmul.mubr.f32.gmra.mrb[0].mxu0 %v1655
    %v1736 = vpop.f32.mrb[0].mxu0
    %v1737 = vadd.f32 0.0, %v1736
    %v1738 = vpop.f32.mrb[0].mxu0
    %1739 = vmatprep.mubr.f32.mxu0 0.0
    %1740 = vmatmul.mubr.f32.gmra.mrb[0].mxu0 %v1658
    %v1741 = vpop.f32.mrb[0].mxu0
    %v1742 = vadd.f32 0.0, %v1741
    %v1743 = vpop.f32.mrb[0].mxu0
    %1744 = vdwg.mxu0
    %1745 = vrot.lane.b32.xlu0 %v1140, 112
    %v1746 = vpop.permute.xlu0 %1745
    %1747 = vrot.lane.b32.xlu0 %v1146, 112
    %v1748 = vpop.permute.xlu0 %1747
    %1749 = vrot.lane.b32.xlu0 %v1152, 112
    %v1750 = vpop.permute.xlu0 %1749
    %1751 = vrot.lane.b32.xlu0 %v1158, 112
    %v1752 = vpop.permute.xlu0 %1751
    %v1757 = vsel %vm1192, %v1746, %v1140
    %v1758 = vsel %vm1192, %v1748, %v1146
    %v1759 = vsel %vm1192, %v1750, %v1152
    %v1760 = vsel %vm1192, %v1752, %v1158
    %v1761 = vsel %vm58, %v1757, %v1169
    %v1762 = vsel %vm58, %v1758, %v1171
    %v1763 = vsel %vm58, %v1759, %v1173
    %v1764 = vsel %vm58, %v1760, %v1175
    %v1765 = vmul.f32 %v1761, %v1202
    %v1766 = vmul.f32 %v1762, %v1204
    %v1767 = vmul.f32 %v1763, %v1206
    %v1768 = vmul.f32 %v1764, %v1208
    %v1770 = vsel %vm1060, %v1765, 0
    %v1773 = vsel %vm1060, %v1766, 0
    %v1776 = vsel %vm1060, %v1767, 0
    %v1779 = vsel %vm1060, %v1768, 0
    %1781 = vmatprep.subr.mxu0 0.0
    %1782 = vmatpush1.msra.mxu0 %v1224
    %1783 = vmatprep.subr.mxu0 0.0
    %1784 = vmatpush1.msra.mxu0 %v1226
    %1785 = vmatprep.subr.mxu0 0.0
    %1786 = vmatpush1.msra.mxu0 %v1228
    %1787 = vmatprep.subr.mxu0 0.0
    %1788 = vmatpush1.msra.mxu0 %v1230
    %1789 = vmatprep.subr.mxu0 0.0
    %1790 = vmatpush1.msra.mxu0 %v1232
    %1791 = vmatprep.subr.mxu0 0.0
    %1792 = vmatpush1.msra.mxu0 %v1234
    %1793 = vmatprep.subr.mxu0 0.0
    %1794 = vmatpush1.msra.mxu0 0.0
    %1795 = vmatprep.subr.mxu0 0.0
    %1796 = vmatpush1.msra.mxu0 0.0
    %1797 = vmatprep.subr.mxu0 0.0
    %1798 = vmatpush1.msra.mxu0 0.0
    %1799 = vmatprep.subr.mxu0 0.0
    %1800 = vmatpush1.msra.mxu0 0.0
    %1801 = vmatprep.subr.mxu0 0.0
    %1802 = vmatpush1.msra.mxu0 0.0
    %1803 = vmatprep.subr.mxu0 0.0
    %1804 = vmatpush1.msra.mxu0 0.0
    %1805 = vmatprep.subr.mxu0 0.0
    %1806 = vmatpush1.msra.mxu0 0.0
    %1807 = vmatprep.subr.mxu0 0.0
    %1808 = vmatpush1.msra.mxu0 0.0
    %1809 = vmatprep.subr.mxu0 0.0
    %1810 = vmatpush1.msra.mxu0 0.0
    %1811 = vmatprep.subr.mxu0 0.0
    %1812 = vmatpush1.msra.mxu0 0.0
    %1813 = vmatprep.subr.mxu0 0.0
    %1814 = vmatpush1.msra.mxu0 0.0
    %1815 = vmatprep.subr.mxu0 0.0
    %1816 = vmatpush1.msra.mxu0 0.0
    %1817 = vmatprep.subr.mxu0 0.0
    %1818 = vmatpush1.msra.mxu0 0.0
    %1819 = vmatprep.subr.mxu0 0.0
    %1820 = vmatpush1.msra.mxu0 0.0
    %1821 = vmatprep.subr.mxu0 0.0
    %1822 = vmatpush1.msra.mxu0 0.0
    %1823 = vmatprep.subr.mxu0 0.0
    %1824 = vmatpush1.msra.mxu0 0.0
    %1825 = vmatprep.subr.mxu0 0.0
    %1826 = vmatpush1.msra.mxu0 0.0
    %1827 = vmatprep.subr.mxu0 0.0
    %1828 = vmatpush1.msra.mxu0 0.0
    %1829 = vmatprep.subr.mxu0 0.0
    %1830 = vmatpush1.msra.mxu0 0.0
    %1831 = vmatprep.subr.mxu0 0.0
    %1832 = vmatpush1.msra.mxu0 0.0
    %1833 = vmatprep.subr.mxu0 0.0
    %1834 = vmatpush1.msra.mxu0 0.0
    %1835 = vmatprep.subr.mxu0 0.0
    %1836 = vmatpush1.msra.mxu0 0.0
    %1837 = vmatprep.subr.mxu0 0.0
    %1838 = vmatpush1.msra.mxu0 0.0
    %1839 = vmatprep.subr.mxu0 0.0
    %1840 = vmatpush1.msra.mxu0 0.0
    %1841 = vmatprep.subr.mxu0 0.0
    %1842 = vmatpush1.msra.mxu0 0.0
    %1843 = vmatprep.subr.mxu0 0.0
    %1844 = vmatpush1.msra.mxu0 0.0
    %1845 = vmatprep.mubr.f32.mxu0 0.0
    %1846 = vmatmul.mubr.f32.gmra.mrb[0].mxu0 %v1770
    %v1847 = vpop.f32.mrb[0].mxu0
    %v1848 = vadd.f32 0.0, %v1847
    %v1849 = vpop.f32.mrb[0].mxu0
    %1850 = vmatprep.mubr.f32.mxu0 0.0
    %1851 = vmatmul.mubr.f32.gmra.mrb[0].mxu0 %v1773
    %v1852 = vpop.f32.mrb[0].mxu0
    %v1853 = vadd.f32 0.0, %v1852
    %v1854 = vpop.f32.mrb[0].mxu0
    %1855 = vmatprep.mubr.f32.mxu0 0.0
    %1856 = vmatmul.mubr.f32.gmra.mrb[0].mxu0 %v1776
    %v1857 = vpop.f32.mrb[0].mxu0
    %v1858 = vadd.f32 0.0, %v1857
    %v1859 = vpop.f32.mrb[0].mxu0
    %1860 = vmatprep.mubr.f32.mxu0 0.0
    %1861 = vmatmul.mubr.f32.gmra.mrb[0].mxu0 %v1779
    %v1862 = vpop.f32.mrb[0].mxu0
    %v1863 = vadd.f32 0.0, %v1862
    %v1864 = vpop.f32.mrb[0].mxu0
    %1865 = vdwg.mxu0
    %1870 = vrot.lane.b32.xlu0 %v1848, 124
    %v1871 = vpop.permute.xlu0 %1870
    %1872 = vrot.lane.b32.xlu0 %v1853, 124
    %v1873 = vpop.permute.xlu0 %1872
    %1874 = vrot.lane.b32.xlu0 %v1858, 124
    %v1875 = vpop.permute.xlu0 %1874
    %1876 = vrot.lane.b32.xlu0 %v1863, 124
    %v1877 = vpop.permute.xlu0 %1876
    %v1882 = vmax.f32 %v1848, %v1871
    %v1883 = vmax.f32 %v1853, %v1873
    %v1884 = vmax.f32 %v1858, %v1875
    %v1885 = vmax.f32 %v1863, %v1877
    %1886 = vrot.lane.b32.xlu0 %v1848, 120
    %v1887 = vpop.permute.xlu0 %1886
    %1888 = vrot.lane.b32.xlu0 %v1853, 120
    %v1889 = vpop.permute.xlu0 %1888
    %1890 = vrot.lane.b32.xlu0 %v1858, 120
    %v1891 = vpop.permute.xlu0 %1890
    %1892 = vrot.lane.b32.xlu0 %v1863, 120
    %v1893 = vpop.permute.xlu0 %1892
    %v1898 = vmax.f32 %v1882, %v1887
    %v1899 = vmax.f32 %v1883, %v1889
    %v1900 = vmax.f32 %v1884, %v1891
    %v1901 = vmax.f32 %v1885, %v1893
    %1906 = vrot.lane.b32.xlu0 %v1898, 4
    %v1907 = vpop.permute.xlu0 %1906
    %1908 = vrot.lane.b32.xlu0 %v1899, 4
    %v1909 = vpop.permute.xlu0 %1908
    %1910 = vrot.lane.b32.xlu0 %v1900, 4
    %v1911 = vpop.permute.xlu0 %1910
    %1912 = vrot.lane.b32.xlu0 %v1901, 4
    %v1913 = vpop.permute.xlu0 %1912
    %1918 = vrot.lane.b32.xlu0 %v1898, 8
    %v1919 = vpop.permute.xlu0 %1918
    %1920 = vrot.lane.b32.xlu0 %v1899, 8
    %v1921 = vpop.permute.xlu0 %1920
    %1922 = vrot.lane.b32.xlu0 %v1900, 8
    %v1923 = vpop.permute.xlu0 %1922
    %1924 = vrot.lane.b32.xlu0 %v1901, 8
    %v1925 = vpop.permute.xlu0 %1924
    %v1930 = vsel %vm1402, %v1898, %v1907
    %v1931 = vsel %vm1402, %v1899, %v1909
    %v1932 = vsel %vm1402, %v1900, %v1911
    %v1933 = vsel %vm1402, %v1901, %v1913
    %v1934 = vsel %vm1407, %v1930, %v1919
    %v1935 = vsel %vm1407, %v1931, %v1921
    %v1936 = vsel %vm1407, %v1932, %v1923
    %v1937 = vsel %vm1407, %v1933, %v1925
    %v1938 = vsub.f32 %v1848, %v1934
    %v1939 = vsub.f32 %v1853, %v1935
    %v1940 = vsub.f32 %v1858, %v1936
    %v1941 = vsub.f32 %v1863, %v1937
    %v1942 = vmul.f32 %v1938, 1.442695
    %v1943 = vpow.pop %v1942
    %v1944 = vmul.f32 %v1939, 1.442695
    %v1945 = vpow.pop %v1944
    %v1946 = vmul.f32 %v1940, 1.442695
    %v1947 = vpow.pop %v1946
    %v1948 = vmul.f32 %v1941, 1.442695
    %v1949 = vpow.pop %v1948
    %1954 = vrot.lane.b32.xlu0 %v1943, 124
    %v1955 = vpop.permute.xlu0 %1954
    %1956 = vrot.lane.b32.xlu0 %v1945, 124
    %v1957 = vpop.permute.xlu0 %1956
    %1958 = vrot.lane.b32.xlu0 %v1947, 124
    %v1959 = vpop.permute.xlu0 %1958
    %1960 = vrot.lane.b32.xlu0 %v1949, 124
    %v1961 = vpop.permute.xlu0 %1960
    %v1966 = vadd.f32 %v1943, %v1955
    %v1967 = vadd.f32 %v1945, %v1957
    %v1968 = vadd.f32 %v1947, %v1959
    %v1969 = vadd.f32 %v1949, %v1961
    %1970 = vrot.lane.b32.xlu0 %v1943, 120
    %v1971 = vpop.permute.xlu0 %1970
    %1972 = vrot.lane.b32.xlu0 %v1945, 120
    %v1973 = vpop.permute.xlu0 %1972
    %1974 = vrot.lane.b32.xlu0 %v1947, 120
    %v1975 = vpop.permute.xlu0 %1974
    %1976 = vrot.lane.b32.xlu0 %v1949, 120
    %v1977 = vpop.permute.xlu0 %1976
    %v1982 = vadd.f32 %v1966, %v1971
    %v1983 = vadd.f32 %v1967, %v1973
    %v1984 = vadd.f32 %v1968, %v1975
    %v1985 = vadd.f32 %v1969, %v1977
    %1990 = vrot.lane.b32.xlu0 %v1982, 4
    %v1991 = vpop.permute.xlu0 %1990
    %1992 = vrot.lane.b32.xlu0 %v1983, 4
    %v1993 = vpop.permute.xlu0 %1992
    %1994 = vrot.lane.b32.xlu0 %v1984, 4
    %v1995 = vpop.permute.xlu0 %1994
    %1996 = vrot.lane.b32.xlu0 %v1985, 4
    %v1997 = vpop.permute.xlu0 %1996
    %2002 = vrot.lane.b32.xlu0 %v1982, 8
    %v2003 = vpop.permute.xlu0 %2002
    %2004 = vrot.lane.b32.xlu0 %v1983, 8
    %v2005 = vpop.permute.xlu0 %2004
    %2006 = vrot.lane.b32.xlu0 %v1984, 8
    %v2007 = vpop.permute.xlu0 %2006
    %2008 = vrot.lane.b32.xlu0 %v1985, 8
    %v2009 = vpop.permute.xlu0 %2008
    %v2014 = vsel %vm1402, %v1982, %v1991
    %v2015 = vsel %vm1402, %v1983, %v1993
    %v2016 = vsel %vm1402, %v1984, %v1995
    %v2017 = vsel %vm1402, %v1985, %v1997
    %v2018 = vsel %vm1407, %v2014, %v2003
    %v2019 = vsel %vm1407, %v2015, %v2005
    %v2020 = vsel %vm1407, %v2016, %v2007
    %v2021 = vsel %vm1407, %v2017, %v2009
    %v2022 = vrcp.pop %v2018
    %v2023 = vmul.f32 %v1943, %v2022
    %v2024 = vrcp.pop %v2019
    %v2025 = vmul.f32 %v1945, %v2024
    %v2026 = vrcp.pop %v2020
    %v2027 = vmul.f32 %v1947, %v2026
    %v2028 = vrcp.pop %v2021
    %v2029 = vmul.f32 %v1949, %v2028
    %v2031 = vsel %vm1504, %v2023, 0
    %v2034 = vsel %vm1504, %v2025, 0
    %v2037 = vsel %vm1504, %v2027, 0
    %v2040 = vsel %vm1504, %v2029, 0
    %2042 = vmatprep.subr.mxu0 0.0
    %2043 = vmatpush1.msra.mxu0 %v1162
    %2044 = vmatprep.subr.mxu0 0.0
    %2045 = vmatpush1.msra.mxu0 %v1519
    %2046 = vmatprep.subr.mxu0 0.0
    %2047 = vmatpush1.msra.mxu0 0.0
    %2048 = vmatprep.subr.mxu0 0.0
    %2049 = vmatpush1.msra.mxu0 0.0
    %2050 = vmatprep.subr.mxu0 0.0
    %2051 = vmatpush1.msra.mxu0 0.0
    %2052 = vmatprep.subr.mxu0 0.0
    %2053 = vmatpush1.msra.mxu0 0.0
    %2054 = vmatprep.subr.mxu0 0.0
    %2055 = vmatpush1.msra.mxu0 0.0
    %2056 = vmatprep.subr.mxu0 0.0
    %2057 = vmatpush1.msra.mxu0 0.0
    %2058 = vmatprep.subr.mxu0 0.0
    %2059 = vmatpush1.msra.mxu0 0.0
    %2060 = vmatprep.subr.mxu0 0.0
    %2061 = vmatpush1.msra.mxu0 0.0
    %2062 = vmatprep.subr.mxu0 0.0
    %2063 = vmatpush1.msra.mxu0 0.0
    %2064 = vmatprep.subr.mxu0 0.0
    %2065 = vmatpush1.msra.mxu0 0.0
    %2066 = vmatprep.subr.mxu0 0.0
    %2067 = vmatpush1.msra.mxu0 0.0
    %2068 = vmatprep.subr.mxu0 0.0
    %2069 = vmatpush1.msra.mxu0 0.0
    %2070 = vmatprep.subr.mxu0 0.0
    %2071 = vmatpush1.msra.mxu0 0.0
    %2072 = vmatprep.subr.mxu0 0.0
    %2073 = vmatpush1.msra.mxu0 0.0
    %2074 = vmatprep.subr.mxu0 0.0
    %2075 = vmatpush1.msra.mxu0 0.0
    %2076 = vmatprep.subr.mxu0 0.0
    %2077 = vmatpush1.msra.mxu0 0.0
    %2078 = vmatprep.subr.mxu0 0.0
    %2079 = vmatpush1.msra.mxu0 0.0
    %2080 = vmatprep.subr.mxu0 0.0
    %2081 = vmatpush1.msra.mxu0 0.0
    %2082 = vmatprep.subr.mxu0 0.0
    %2083 = vmatpush1.msra.mxu0 0.0
    %2084 = vmatprep.subr.mxu0 0.0
    %2085 = vmatpush1.msra.mxu0 0.0
    %2086 = vmatprep.subr.mxu0 0.0
    %2087 = vmatpush1.msra.mxu0 0.0
    %2088 = vmatprep.subr.mxu0 0.0
    %2089 = vmatpush1.msra.mxu0 0.0
    %2090 = vmatprep.subr.mxu0 0.0
    %2091 = vmatpush1.msra.mxu0 0.0
    %2092 = vmatprep.subr.mxu0 0.0
    %2093 = vmatpush1.msra.mxu0 0.0
    %2094 = vmatprep.subr.mxu0 0.0
    %2095 = vmatpush1.msra.mxu0 0.0
    %2096 = vmatprep.subr.mxu0 0.0
    %2097 = vmatpush1.msra.mxu0 0.0
    %2098 = vmatprep.subr.mxu0 0.0
    %2099 = vmatpush1.msra.mxu0 0.0
    %2100 = vmatprep.subr.mxu0 0.0
    %2101 = vmatpush1.msra.mxu0 0.0
    %2102 = vmatprep.subr.mxu0 0.0
    %2103 = vmatpush1.msra.mxu0 0.0
    %2104 = vmatprep.subr.mxu0 0.0
    %2105 = vmatpush1.msra.mxu0 0.0
    %2106 = vmatprep.mubr.f32.mxu0 0.0
    %2107 = vmatmul.mubr.f32.gmra.mrb[0].mxu0 %v2031
    %v2108 = vpop.f32.mrb[0].mxu0
    %v2109 = vadd.f32 0.0, %v2108
    %v2110 = vpop.f32.mrb[0].mxu0
    %2111 = vmatprep.mubr.f32.mxu0 0.0
    %2112 = vmatmul.mubr.f32.gmra.mrb[0].mxu0 %v2034
    %v2113 = vpop.f32.mrb[0].mxu0
    %v2114 = vadd.f32 0.0, %v2113
    %v2115 = vpop.f32.mrb[0].mxu0
    %2116 = vmatprep.mubr.f32.mxu0 0.0
    %2117 = vmatmul.mubr.f32.gmra.mrb[0].mxu0 %v2037
    %v2118 = vpop.f32.mrb[0].mxu0
    %v2119 = vadd.f32 0.0, %v2118
    %v2120 = vpop.f32.mrb[0].mxu0
    %2121 = vmatprep.mubr.f32.mxu0 0.0
    %2122 = vmatmul.mubr.f32.gmra.mrb[0].mxu0 %v2040
    %v2123 = vpop.f32.mrb[0].mxu0
    %v2124 = vadd.f32 0.0, %v2123
    %v2125 = vpop.f32.mrb[0].mxu0
    %2126 = vdwg.mxu0
    %v2127 = vmul.f32 %v2109, %v1618
    %v2128 = vmul.f32 %v2114, %v1619
    %v2129 = vmul.f32 %v2119, %v1620
    %v2130 = vmul.f32 %v2124, %v1621
    %v2132 = vsel %vm1060, %v2127, 0
    %v2135 = vsel %vm1060, %v2128, 0
    %v2138 = vsel %vm1060, %v2129, 0
    %v2141 = vsel %vm1060, %v2130, 0
    %2143 = vmatprep.subr.mxu0 0.0
    %2144 = vmatpush1.msra.mxu0 %v1631
    %2145 = vmatprep.subr.mxu0 0.0
    %2146 = vmatpush1.msra.mxu0 %v1633
    %2147 = vmatprep.subr.mxu0 0.0
    %2148 = vmatpush1.msra.mxu0 %v1635
    %2149 = vmatprep.subr.mxu0 0.0
    %2150 = vmatpush1.msra.mxu0 %v1637
    %2151 = vmatprep.subr.mxu0 0.0
    %2152 = vmatpush1.msra.mxu0 %v1639
    %2153 = vmatprep.subr.mxu0 0.0
    %2154 = vmatpush1.msra.mxu0 %v1641
    %2155 = vmatprep.subr.mxu0 0.0
    %2156 = vmatpush1.msra.mxu0 0.0
    %2157 = vmatprep.subr.mxu0 0.0
    %2158 = vmatpush1.msra.mxu0 0.0
    %2159 = vmatprep.subr.mxu0 0.0
    %2160 = vmatpush1.msra.mxu0 0.0
    %2161 = vmatprep.subr.mxu0 0.0
    %2162 = vmatpush1.msra.mxu0 0.0
    %2163 = vmatprep.subr.mxu0 0.0
    %2164 = vmatpush1.msra.mxu0 0.0
    %2165 = vmatprep.subr.mxu0 0.0
    %2166 = vmatpush1.msra.mxu0 0.0
    %2167 = vmatprep.subr.mxu0 0.0
    %2168 = vmatpush1.msra.mxu0 0.0
    %2169 = vmatprep.subr.mxu0 0.0
    %2170 = vmatpush1.msra.mxu0 0.0
    %2171 = vmatprep.subr.mxu0 0.0
    %2172 = vmatpush1.msra.mxu0 0.0
    %2173 = vmatprep.subr.mxu0 0.0
    %2174 = vmatpush1.msra.mxu0 0.0
    %2175 = vmatprep.subr.mxu0 0.0
    %2176 = vmatpush1.msra.mxu0 0.0
    %2177 = vmatprep.subr.mxu0 0.0
    %2178 = vmatpush1.msra.mxu0 0.0
    %2179 = vmatprep.subr.mxu0 0.0
    %2180 = vmatpush1.msra.mxu0 0.0
    %2181 = vmatprep.subr.mxu0 0.0
    %2182 = vmatpush1.msra.mxu0 0.0
    %2183 = vmatprep.subr.mxu0 0.0
    %2184 = vmatpush1.msra.mxu0 0.0
    %2185 = vmatprep.subr.mxu0 0.0
    %2186 = vmatpush1.msra.mxu0 0.0
    %2187 = vmatprep.subr.mxu0 0.0
    %2188 = vmatpush1.msra.mxu0 0.0
    %2189 = vmatprep.subr.mxu0 0.0
    %2190 = vmatpush1.msra.mxu0 0.0
    %2191 = vmatprep.subr.mxu0 0.0
    %2192 = vmatpush1.msra.mxu0 0.0
    %2193 = vmatprep.subr.mxu0 0.0
    %2194 = vmatpush1.msra.mxu0 0.0
    %2195 = vmatprep.subr.mxu0 0.0
    %2196 = vmatpush1.msra.mxu0 0.0
    %2197 = vmatprep.subr.mxu0 0.0
    %2198 = vmatpush1.msra.mxu0 0.0
    %2199 = vmatprep.subr.mxu0 0.0
    %2200 = vmatpush1.msra.mxu0 0.0
    %2201 = vmatprep.subr.mxu0 0.0
    %2202 = vmatpush1.msra.mxu0 0.0
    %2203 = vmatprep.subr.mxu0 0.0
    %2204 = vmatpush1.msra.mxu0 0.0
    %2205 = vmatprep.subr.mxu0 0.0
    %2206 = vmatpush1.msra.mxu0 0.0
    %2207 = vmatprep.mubr.f32.mxu0 0.0
    %2208 = vmatmul.mubr.f32.gmra.mrb[0].mxu0 %v2132
    %v2209 = vpop.f32.mrb[0].mxu0
    %v2210 = vadd.f32 0.0, %v2209
    %v2211 = vpop.f32.mrb[0].mxu0
    %2212 = vmatprep.mubr.f32.mxu0 0.0
    %2213 = vmatmul.mubr.f32.gmra.mrb[0].mxu0 %v2135
    %v2214 = vpop.f32.mrb[0].mxu0
    %v2215 = vadd.f32 0.0, %v2214
    %v2216 = vpop.f32.mrb[0].mxu0
    %2217 = vmatprep.mubr.f32.mxu0 0.0
    %2218 = vmatmul.mubr.f32.gmra.mrb[0].mxu0 %v2138
    %v2219 = vpop.f32.mrb[0].mxu0
    %v2220 = vadd.f32 0.0, %v2219
    %v2221 = vpop.f32.mrb[0].mxu0
    %2222 = vmatprep.mubr.f32.mxu0 0.0
    %2223 = vmatmul.mubr.f32.gmra.mrb[0].mxu0 %v2141
    %v2224 = vpop.f32.mrb[0].mxu0
    %v2225 = vadd.f32 0.0, %v2224
    %v2226 = vpop.f32.mrb[0].mxu0
    %2227 = vdwg.mxu0
    %2228 = vrot.lane.b32.xlu0 %v1140, 96
    %v2229 = vpop.permute.xlu0 %2228
    %2230 = vrot.lane.b32.xlu0 %v1146, 96
    %v2231 = vpop.permute.xlu0 %2230
    %2232 = vrot.lane.b32.xlu0 %v1152, 96
    %v2233 = vpop.permute.xlu0 %2232
    %2234 = vrot.lane.b32.xlu0 %v1158, 96
    %v2235 = vpop.permute.xlu0 %2234
    %v2240 = vsel %vm1192, %v2229, %v1746
    %v2241 = vsel %vm1192, %v2231, %v1748
    %v2242 = vsel %vm1192, %v2233, %v1750
    %v2243 = vsel %vm1192, %v2235, %v1752
    %v2244 = vsel %vm58, %v2240, %v1140
    %v2245 = vsel %vm58, %v2241, %v1146
    %v2246 = vsel %vm58, %v2242, %v1152
    %v2247 = vsel %vm58, %v2243, %v1158
    %v2248 = vmul.f32 %v2244, %v1202
    %v2249 = vmul.f32 %v2245, %v1204
    %v2250 = vmul.f32 %v2246, %v1206
    %v2251 = vmul.f32 %v2247, %v1208
    %v2253 = vsel %vm1060, %v2248, 0
    %v2256 = vsel %vm1060, %v2249, 0
    %v2259 = vsel %vm1060, %v2250, 0
    %v2262 = vsel %vm1060, %v2251, 0
    %2264 = vmatprep.subr.mxu0 0.0
    %2265 = vmatpush1.msra.mxu0 %v1224
    %2266 = vmatprep.subr.mxu0 0.0
    %2267 = vmatpush1.msra.mxu0 %v1226
    %2268 = vmatprep.subr.mxu0 0.0
    %2269 = vmatpush1.msra.mxu0 %v1228
    %2270 = vmatprep.subr.mxu0 0.0
    %2271 = vmatpush1.msra.mxu0 %v1230
    %2272 = vmatprep.subr.mxu0 0.0
    %2273 = vmatpush1.msra.mxu0 %v1232
    %2274 = vmatprep.subr.mxu0 0.0
    %2275 = vmatpush1.msra.mxu0 %v1234
    %2276 = vmatprep.subr.mxu0 0.0
    %2277 = vmatpush1.msra.mxu0 0.0
    %2278 = vmatprep.subr.mxu0 0.0
    %2279 = vmatpush1.msra.mxu0 0.0
    %2280 = vmatprep.subr.mxu0 0.0
    %2281 = vmatpush1.msra.mxu0 0.0
    %2282 = vmatprep.subr.mxu0 0.0
    %2283 = vmatpush1.msra.mxu0 0.0
    %2284 = vmatprep.subr.mxu0 0.0
    %2285 = vmatpush1.msra.mxu0 0.0
    %2286 = vmatprep.subr.mxu0 0.0
    %2287 = vmatpush1.msra.mxu0 0.0
    %2288 = vmatprep.subr.mxu0 0.0
    %2289 = vmatpush1.msra.mxu0 0.0
    %2290 = vmatprep.subr.mxu0 0.0
    %2291 = vmatpush1.msra.mxu0 0.0
    %2292 = vmatprep.subr.mxu0 0.0
    %2293 = vmatpush1.msra.mxu0 0.0
    %2294 = vmatprep.subr.mxu0 0.0
    %2295 = vmatpush1.msra.mxu0 0.0
    %2296 = vmatprep.subr.mxu0 0.0
    %2297 = vmatpush1.msra.mxu0 0.0
    %2298 = vmatprep.subr.mxu0 0.0
    %2299 = vmatpush1.msra.mxu0 0.0
    %2300 = vmatprep.subr.mxu0 0.0
    %2301 = vmatpush1.msra.mxu0 0.0
    %2302 = vmatprep.subr.mxu0 0.0
    %2303 = vmatpush1.msra.mxu0 0.0
    %2304 = vmatprep.subr.mxu0 0.0
    %2305 = vmatpush1.msra.mxu0 0.0
    %2306 = vmatprep.subr.mxu0 0.0
    %2307 = vmatpush1.msra.mxu0 0.0
    %2308 = vmatprep.subr.mxu0 0.0
    %2309 = vmatpush1.msra.mxu0 0.0
    %2310 = vmatprep.subr.mxu0 0.0
    %2311 = vmatpush1.msra.mxu0 0.0
    %2312 = vmatprep.subr.mxu0 0.0
    %2313 = vmatpush1.msra.mxu0 0.0
    %2314 = vmatprep.subr.mxu0 0.0
    %2315 = vmatpush1.msra.mxu0 0.0
    %2316 = vmatprep.subr.mxu0 0.0
    %2317 = vmatpush1.msra.mxu0 0.0
    %2318 = vmatprep.subr.mxu0 0.0
    %2319 = vmatpush1.msra.mxu0 0.0
    %2320 = vmatprep.subr.mxu0 0.0
    %2321 = vmatpush1.msra.mxu0 0.0
    %2322 = vmatprep.subr.mxu0 0.0
    %2323 = vmatpush1.msra.mxu0 0.0
    %2324 = vmatprep.subr.mxu0 0.0
    %2325 = vmatpush1.msra.mxu0 0.0
    %2326 = vmatprep.subr.mxu0 0.0
    %2327 = vmatpush1.msra.mxu0 0.0
    %2328 = vmatprep.mubr.f32.mxu0 0.0
    %2329 = vmatmul.mubr.f32.gmra.mrb[0].mxu0 %v2253
    %v2330 = vpop.f32.mrb[0].mxu0
    %v2331 = vadd.f32 0.0, %v2330
    %v2332 = vpop.f32.mrb[0].mxu0
    %2333 = vmatprep.mubr.f32.mxu0 0.0
    %2334 = vmatmul.mubr.f32.gmra.mrb[0].mxu0 %v2256
    %v2335 = vpop.f32.mrb[0].mxu0
    %v2336 = vadd.f32 0.0, %v2335
    %v2337 = vpop.f32.mrb[0].mxu0
    %2338 = vmatprep.mubr.f32.mxu0 0.0
    %2339 = vmatmul.mubr.f32.gmra.mrb[0].mxu0 %v2259
    %v2340 = vpop.f32.mrb[0].mxu0
    %v2341 = vadd.f32 0.0, %v2340
    %v2342 = vpop.f32.mrb[0].mxu0
    %2343 = vmatprep.mubr.f32.mxu0 0.0
    %2344 = vmatmul.mubr.f32.gmra.mrb[0].mxu0 %v2262
    %v2345 = vpop.f32.mrb[0].mxu0
    %v2346 = vadd.f32 0.0, %v2345
    %v2347 = vpop.f32.mrb[0].mxu0
    %2348 = vdwg.mxu0
    %2353 = vrot.lane.b32.xlu0 %v2331, 124
    %v2354 = vpop.permute.xlu0 %2353
    %2355 = vrot.lane.b32.xlu0 %v2336, 124
    %v2356 = vpop.permute.xlu0 %2355
    %2357 = vrot.lane.b32.xlu0 %v2341, 124
    %v2358 = vpop.permute.xlu0 %2357
    %2359 = vrot.lane.b32.xlu0 %v2346, 124
    %v2360 = vpop.permute.xlu0 %2359
    %v2365 = vmax.f32 %v2331, %v2354
    %v2366 = vmax.f32 %v2336, %v2356
    %v2367 = vmax.f32 %v2341, %v2358
    %v2368 = vmax.f32 %v2346, %v2360
    %2369 = vrot.lane.b32.xlu0 %v2331, 120
    %v2370 = vpop.permute.xlu0 %2369
    %2371 = vrot.lane.b32.xlu0 %v2336, 120
    %v2372 = vpop.permute.xlu0 %2371
    %2373 = vrot.lane.b32.xlu0 %v2341, 120
    %v2374 = vpop.permute.xlu0 %2373
    %2375 = vrot.lane.b32.xlu0 %v2346, 120
    %v2376 = vpop.permute.xlu0 %2375
    %v2381 = vmax.f32 %v2365, %v2370
    %v2382 = vmax.f32 %v2366, %v2372
    %v2383 = vmax.f32 %v2367, %v2374
    %v2384 = vmax.f32 %v2368, %v2376
    %2389 = vrot.lane.b32.xlu0 %v2381, 4
    %v2390 = vpop.permute.xlu0 %2389
    %2391 = vrot.lane.b32.xlu0 %v2382, 4
    %v2392 = vpop.permute.xlu0 %2391
    %2393 = vrot.lane.b32.xlu0 %v2383, 4
    %v2394 = vpop.permute.xlu0 %2393
    %2395 = vrot.lane.b32.xlu0 %v2384, 4
    %v2396 = vpop.permute.xlu0 %2395
    %2401 = vrot.lane.b32.xlu0 %v2381, 8
    %v2402 = vpop.permute.xlu0 %2401
    %2403 = vrot.lane.b32.xlu0 %v2382, 8
    %v2404 = vpop.permute.xlu0 %2403
    %2405 = vrot.lane.b32.xlu0 %v2383, 8
    %v2406 = vpop.permute.xlu0 %2405
    %2407 = vrot.lane.b32.xlu0 %v2384, 8
    %v2408 = vpop.permute.xlu0 %2407
    %v2413 = vsel %vm1402, %v2381, %v2390
    %v2414 = vsel %vm1402, %v2382, %v2392
    %v2415 = vsel %vm1402, %v2383, %v2394
    %v2416 = vsel %vm1402, %v2384, %v2396
    %v2417 = vsel %vm1407, %v2413, %v2402
    %v2418 = vsel %vm1407, %v2414, %v2404
    %v2419 = vsel %vm1407, %v2415, %v2406
    %v2420 = vsel %vm1407, %v2416, %v2408
    %v2421 = vsub.f32 %v2331, %v2417
    %v2422 = vsub.f32 %v2336, %v2418
    %v2423 = vsub.f32 %v2341, %v2419
    %v2424 = vsub.f32 %v2346, %v2420
    %v2425 = vmul.f32 %v2421, 1.442695
    %v2426 = vpow.pop %v2425
    %v2427 = vmul.f32 %v2422, 1.442695
    %v2428 = vpow.pop %v2427
    %v2429 = vmul.f32 %v2423, 1.442695
    %v2430 = vpow.pop %v2429
    %v2431 = vmul.f32 %v2424, 1.442695
    %v2432 = vpow.pop %v2431
    %2437 = vrot.lane.b32.xlu0 %v2426, 124
    %v2438 = vpop.permute.xlu0 %2437
    %2439 = vrot.lane.b32.xlu0 %v2428, 124
    %v2440 = vpop.permute.xlu0 %2439
    %2441 = vrot.lane.b32.xlu0 %v2430, 124
    %v2442 = vpop.permute.xlu0 %2441
    %2443 = vrot.lane.b32.xlu0 %v2432, 124
    %v2444 = vpop.permute.xlu0 %2443
    %v2449 = vadd.f32 %v2426, %v2438
    %v2450 = vadd.f32 %v2428, %v2440
    %v2451 = vadd.f32 %v2430, %v2442
    %v2452 = vadd.f32 %v2432, %v2444
    %2453 = vrot.lane.b32.xlu0 %v2426, 120
    %v2454 = vpop.permute.xlu0 %2453
    %2455 = vrot.lane.b32.xlu0 %v2428, 120
    %v2456 = vpop.permute.xlu0 %2455
    %2457 = vrot.lane.b32.xlu0 %v2430, 120
    %v2458 = vpop.permute.xlu0 %2457
    %2459 = vrot.lane.b32.xlu0 %v2432, 120
    %v2460 = vpop.permute.xlu0 %2459
    %v2465 = vadd.f32 %v2449, %v2454
    %v2466 = vadd.f32 %v2450, %v2456
    %v2467 = vadd.f32 %v2451, %v2458
    %v2468 = vadd.f32 %v2452, %v2460
    %2473 = vrot.lane.b32.xlu0 %v2465, 4
    %v2474 = vpop.permute.xlu0 %2473
    %2475 = vrot.lane.b32.xlu0 %v2466, 4
    %v2476 = vpop.permute.xlu0 %2475
    %2477 = vrot.lane.b32.xlu0 %v2467, 4
    %v2478 = vpop.permute.xlu0 %2477
    %2479 = vrot.lane.b32.xlu0 %v2468, 4
    %v2480 = vpop.permute.xlu0 %2479
    %2485 = vrot.lane.b32.xlu0 %v2465, 8
    %v2486 = vpop.permute.xlu0 %2485
    %2487 = vrot.lane.b32.xlu0 %v2466, 8
    %v2488 = vpop.permute.xlu0 %2487
    %2489 = vrot.lane.b32.xlu0 %v2467, 8
    %v2490 = vpop.permute.xlu0 %2489
    %2491 = vrot.lane.b32.xlu0 %v2468, 8
    %v2492 = vpop.permute.xlu0 %2491
    %v2497 = vsel %vm1402, %v2465, %v2474
    %v2498 = vsel %vm1402, %v2466, %v2476
    %v2499 = vsel %vm1402, %v2467, %v2478
    %v2500 = vsel %vm1402, %v2468, %v2480
    %v2501 = vsel %vm1407, %v2497, %v2486
    %v2502 = vsel %vm1407, %v2498, %v2488
    %v2503 = vsel %vm1407, %v2499, %v2490
    %v2504 = vsel %vm1407, %v2500, %v2492
    %v2505 = vrcp.pop %v2501
    %v2506 = vmul.f32 %v2426, %v2505
    %v2507 = vrcp.pop %v2502
    %v2508 = vmul.f32 %v2428, %v2507
    %v2509 = vrcp.pop %v2503
    %v2510 = vmul.f32 %v2430, %v2509
    %v2511 = vrcp.pop %v2504
    %v2512 = vmul.f32 %v2432, %v2511
    %v2514 = vsel %vm1504, %v2506, 0
    %v2517 = vsel %vm1504, %v2508, 0
    %v2520 = vsel %vm1504, %v2510, 0
    %v2523 = vsel %vm1504, %v2512, 0
    %2525 = vmatprep.subr.mxu0 0.0
    %2526 = vmatpush1.msra.mxu0 %v1162
    %2527 = vmatprep.subr.mxu0 0.0
    %2528 = vmatpush1.msra.mxu0 %v1519
    %2529 = vmatprep.subr.mxu0 0.0
    %2530 = vmatpush1.msra.mxu0 0.0
    %2531 = vmatprep.subr.mxu0 0.0
    %2532 = vmatpush1.msra.mxu0 0.0
    %2533 = vmatprep.subr.mxu0 0.0
    %2534 = vmatpush1.msra.mxu0 0.0
    %2535 = vmatprep.subr.mxu0 0.0
    %2536 = vmatpush1.msra.mxu0 0.0
    %2537 = vmatprep.subr.mxu0 0.0
    %2538 = vmatpush1.msra.mxu0 0.0
    %2539 = vmatprep.subr.mxu0 0.0
    %2540 = vmatpush1.msra.mxu0 0.0
    %2541 = vmatprep.subr.mxu0 0.0
    %2542 = vmatpush1.msra.mxu0 0.0
    %2543 = vmatprep.subr.mxu0 0.0
    %2544 = vmatpush1.msra.mxu0 0.0
    %2545 = vmatprep.subr.mxu0 0.0
    %2546 = vmatpush1.msra.mxu0 0.0
    %2547 = vmatprep.subr.mxu0 0.0
    %2548 = vmatpush1.msra.mxu0 0.0
    %2549 = vmatprep.subr.mxu0 0.0
    %2550 = vmatpush1.msra.mxu0 0.0
    %2551 = vmatprep.subr.mxu0 0.0
    %2552 = vmatpush1.msra.mxu0 0.0
    %2553 = vmatprep.subr.mxu0 0.0
    %2554 = vmatpush1.msra.mxu0 0.0
    %2555 = vmatprep.subr.mxu0 0.0
    %2556 = vmatpush1.msra.mxu0 0.0
    %2557 = vmatprep.subr.mxu0 0.0
    %2558 = vmatpush1.msra.mxu0 0.0
    %2559 = vmatprep.subr.mxu0 0.0
    %2560 = vmatpush1.msra.mxu0 0.0
    %2561 = vmatprep.subr.mxu0 0.0
    %2562 = vmatpush1.msra.mxu0 0.0
    %2563 = vmatprep.subr.mxu0 0.0
    %2564 = vmatpush1.msra.mxu0 0.0
    %2565 = vmatprep.subr.mxu0 0.0
    %2566 = vmatpush1.msra.mxu0 0.0
    %2567 = vmatprep.subr.mxu0 0.0
    %2568 = vmatpush1.msra.mxu0 0.0
    %2569 = vmatprep.subr.mxu0 0.0
    %2570 = vmatpush1.msra.mxu0 0.0
    %2571 = vmatprep.subr.mxu0 0.0
    %2572 = vmatpush1.msra.mxu0 0.0
    %2573 = vmatprep.subr.mxu0 0.0
    %2574 = vmatpush1.msra.mxu0 0.0
    %2575 = vmatprep.subr.mxu0 0.0
    %2576 = vmatpush1.msra.mxu0 0.0
    %2577 = vmatprep.subr.mxu0 0.0
    %2578 = vmatpush1.msra.mxu0 0.0
    %2579 = vmatprep.subr.mxu0 0.0
    %2580 = vmatpush1.msra.mxu0 0.0
    %2581 = vmatprep.subr.mxu0 0.0
    %2582 = vmatpush1.msra.mxu0 0.0
    %2583 = vmatprep.subr.mxu0 0.0
    %2584 = vmatpush1.msra.mxu0 0.0
    %2585 = vmatprep.subr.mxu0 0.0
    %2586 = vmatpush1.msra.mxu0 0.0
    %2587 = vmatprep.subr.mxu0 0.0
    %2588 = vmatpush1.msra.mxu0 0.0
    %2589 = vmatprep.mubr.f32.mxu0 0.0
    %2590 = vmatmul.mubr.f32.gmra.mrb[0].mxu0 %v2514
    %v2591 = vpop.f32.mrb[0].mxu0
    %v2592 = vadd.f32 0.0, %v2591
    %v2593 = vpop.f32.mrb[0].mxu0
    %2594 = vmatprep.mubr.f32.mxu0 0.0
    %2595 = vmatmul.mubr.f32.gmra.mrb[0].mxu0 %v2517
    %v2596 = vpop.f32.mrb[0].mxu0
    %v2597 = vadd.f32 0.0, %v2596
    %v2598 = vpop.f32.mrb[0].mxu0
    %2599 = vmatprep.mubr.f32.mxu0 0.0
    %2600 = vmatmul.mubr.f32.gmra.mrb[0].mxu0 %v2520
    %v2601 = vpop.f32.mrb[0].mxu0
    %v2602 = vadd.f32 0.0, %v2601
    %v2603 = vpop.f32.mrb[0].mxu0
    %2604 = vmatprep.mubr.f32.mxu0 0.0
    %2605 = vmatmul.mubr.f32.gmra.mrb[0].mxu0 %v2523
    %v2606 = vpop.f32.mrb[0].mxu0
    %v2607 = vadd.f32 0.0, %v2606
    %v2608 = vpop.f32.mrb[0].mxu0
    %2609 = vdwg.mxu0
    %v2610 = vmul.f32 %v2592, %v1618
    %v2611 = vmul.f32 %v2597, %v1619
    %v2612 = vmul.f32 %v2602, %v1620
    %v2613 = vmul.f32 %v2607, %v1621
    %v2615 = vsel %vm1060, %v2610, 0
    %v2618 = vsel %vm1060, %v2611, 0
    %v2621 = vsel %vm1060, %v2612, 0
    %v2624 = vsel %vm1060, %v2613, 0
    %2626 = vmatprep.subr.mxu0 0.0
    %2627 = vmatpush1.msra.mxu0 %v1631
    %2628 = vmatprep.subr.mxu0 0.0
    %2629 = vmatpush1.msra.mxu0 %v1633
    %2630 = vmatprep.subr.mxu0 0.0
    %2631 = vmatpush1.msra.mxu0 %v1635
    %2632 = vmatprep.subr.mxu0 0.0
    %2633 = vmatpush1.msra.mxu0 %v1637
    %2634 = vmatprep.subr.mxu0 0.0
    %2635 = vmatpush1.msra.mxu0 %v1639
    %2636 = vmatprep.subr.mxu0 0.0
    %2637 = vmatpush1.msra.mxu0 %v1641
    %2638 = vmatprep.subr.mxu0 0.0
    %2639 = vmatpush1.msra.mxu0 0.0
    %2640 = vmatprep.subr.mxu0 0.0
    %2641 = vmatpush1.msra.mxu0 0.0
    %2642 = vmatprep.subr.mxu0 0.0
    %2643 = vmatpush1.msra.mxu0 0.0
    %2644 = vmatprep.subr.mxu0 0.0
    %2645 = vmatpush1.msra.mxu0 0.0
    %2646 = vmatprep.subr.mxu0 0.0
    %2647 = vmatpush1.msra.mxu0 0.0
    %2648 = vmatprep.subr.mxu0 0.0
    %2649 = vmatpush1.msra.mxu0 0.0
    %2650 = vmatprep.subr.mxu0 0.0
    %2651 = vmatpush1.msra.mxu0 0.0
    %2652 = vmatprep.subr.mxu0 0.0
    %2653 = vmatpush1.msra.mxu0 0.0
    %2654 = vmatprep.subr.mxu0 0.0
    %2655 = vmatpush1.msra.mxu0 0.0
    %2656 = vmatprep.subr.mxu0 0.0
    %2657 = vmatpush1.msra.mxu0 0.0
    %2658 = vmatprep.subr.mxu0 0.0
    %2659 = vmatpush1.msra.mxu0 0.0
    %2660 = vmatprep.subr.mxu0 0.0
    %2661 = vmatpush1.msra.mxu0 0.0
    %2662 = vmatprep.subr.mxu0 0.0
    %2663 = vmatpush1.msra.mxu0 0.0
    %2664 = vmatprep.subr.mxu0 0.0
    %2665 = vmatpush1.msra.mxu0 0.0
    %2666 = vmatprep.subr.mxu0 0.0
    %2667 = vmatpush1.msra.mxu0 0.0
    %2668 = vmatprep.subr.mxu0 0.0
    %2669 = vmatpush1.msra.mxu0 0.0
    %2670 = vmatprep.subr.mxu0 0.0
    %2671 = vmatpush1.msra.mxu0 0.0
    %2672 = vmatprep.subr.mxu0 0.0
    %2673 = vmatpush1.msra.mxu0 0.0
    %2674 = vmatprep.subr.mxu0 0.0
    %2675 = vmatpush1.msra.mxu0 0.0
    %2676 = vmatprep.subr.mxu0 0.0
    %2677 = vmatpush1.msra.mxu0 0.0
    %2678 = vmatprep.subr.mxu0 0.0
    %2679 = vmatpush1.msra.mxu0 0.0
    %2680 = vmatprep.subr.mxu0 0.0
    %2681 = vmatpush1.msra.mxu0 0.0
    %2682 = vmatprep.subr.mxu0 0.0
    %2683 = vmatpush1.msra.mxu0 0.0
    %2684 = vmatprep.subr.mxu0 0.0
    %2685 = vmatpush1.msra.mxu0 0.0
    %2686 = vmatprep.subr.mxu0 0.0
    %2687 = vmatpush1.msra.mxu0 0.0
    %2688 = vmatprep.subr.mxu0 0.0
    %2689 = vmatpush1.msra.mxu0 0.0
    %2690 = vmatprep.mubr.f32.mxu0 0.0
    %2691 = vmatmul.mubr.f32.gmra.mrb[0].mxu0 %v2615
    %v2692 = vpop.f32.mrb[0].mxu0
    %v2693 = vadd.f32 0.0, %v2692
    %v2694 = vpop.f32.mrb[0].mxu0
    %2695 = vmatprep.mubr.f32.mxu0 0.0
    %2696 = vmatmul.mubr.f32.gmra.mrb[0].mxu0 %v2618
    %v2697 = vpop.f32.mrb[0].mxu0
    %v2698 = vadd.f32 0.0, %v2697
    %v2699 = vpop.f32.mrb[0].mxu0
    %2700 = vmatprep.mubr.f32.mxu0 0.0
    %2701 = vmatmul.mubr.f32.gmra.mrb[0].mxu0 %v2621
    %v2702 = vpop.f32.mrb[0].mxu0
    %v2703 = vadd.f32 0.0, %v2702
    %v2704 = vpop.f32.mrb[0].mxu0
    %2705 = vmatprep.mubr.f32.mxu0 0.0
    %2706 = vmatmul.mubr.f32.gmra.mrb[0].mxu0 %v2624
    %v2707 = vpop.f32.mrb[0].mxu0
    %v2708 = vadd.f32 0.0, %v2707
    %v2709 = vpop.f32.mrb[0].mxu0
    %2710 = vdwg.mxu0
    %2715 = vrot.lane.b32.xlu0 %v2210, 16
    %v2716 = vpop.permute.xlu0 %2715
    %2717 = vrot.lane.b32.xlu0 %v2215, 16
    %v2718 = vpop.permute.xlu0 %2717
    %2719 = vrot.lane.b32.xlu0 %v2220, 16
    %v2720 = vpop.permute.xlu0 %2719
    %2721 = vrot.lane.b32.xlu0 %v2225, 16
    %v2722 = vpop.permute.xlu0 %2721
    %2731 = vrot.lane.b32.xlu0 %v2693, 32
    %v2732 = vpop.permute.xlu0 %2731
    %2733 = vrot.lane.b32.xlu0 %v2698, 32
    %v2734 = vpop.permute.xlu0 %2733
    %2735 = vrot.lane.b32.xlu0 %v2703, 32
    %v2736 = vpop.permute.xlu0 %2735
    %2737 = vrot.lane.b32.xlu0 %v2708, 32
    %v2738 = vpop.permute.xlu0 %2737
    %v2743 = vsel %vm1192, %v1727, %v2716
    %v2744 = vsel %vm1192, %v1732, %v2718
    %v2745 = vsel %vm1192, %v1737, %v2720
    %v2746 = vsel %vm1192, %v1742, %v2722
    %v2747 = vsel %vm58, %v2743, %v2732
    %v2748 = vsel %vm58, %v2744, %v2734
    %v2749 = vsel %vm58, %v2745, %v2736
    %v2750 = vsel %vm58, %v2746, %v2738
    %v2751 = vld [vmem:[#allocation2 + $0x6e4] ss:$0 sm:$0xff]
    %2752 = vrot.lane.b32.xlu0 %v1036, 112
    %v2753 = vpop.permute.xlu0 %2752
    %2754 = vrot.lane.b32.xlu0 %v1038, 112
    %v2755 = vpop.permute.xlu0 %2754
    %2756 = vrot.lane.b32.xlu0 %v1040, 112
    %v2757 = vpop.permute.xlu0 %2756
    %2758 = vrot.lane.b32.xlu0 %v1042, 112
    %v2759 = vpop.permute.xlu0 %2758
    %2760 = vrot.lane.b32.xlu0 %v1044, 112
    %v2761 = vpop.permute.xlu0 %2760
    %2762 = vrot.lane.b32.xlu0 %v1046, 112
    %v2763 = vpop.permute.xlu0 %2762
    %v2771 = vsel %vm1060, %v2747, 0
    %v2774 = vsel %vm1060, %v2748, 0
    %v2777 = vsel %vm1060, %v2749, 0
    %v2780 = vsel %vm1060, %v2750, 0
    %2782 = vmatprep.subr.mxu0 0.0
    %2783 = vmatpush1.msra.mxu0 %v2753
    %2784 = vmatprep.subr.mxu0 0.0
    %2785 = vmatpush1.msra.mxu0 %v2755
    %2786 = vmatprep.subr.mxu0 0.0
    %2787 = vmatpush1.msra.mxu0 %v2757
    %2788 = vmatprep.subr.mxu0 0.0
    %2789 = vmatpush1.msra.mxu0 %v2759
    %2790 = vmatprep.subr.mxu0 0.0
    %2791 = vmatpush1.msra.mxu0 %v2761
    %2792 = vmatprep.subr.mxu0 0.0
    %2793 = vmatpush1.msra.mxu0 %v2763
    %2794 = vmatprep.subr.mxu0 0.0
    %2795 = vmatpush1.msra.mxu0 0.0
    %2796 = vmatprep.subr.mxu0 0.0
    %2797 = vmatpush1.msra.mxu0 0.0
    %2798 = vmatprep.subr.mxu0 0.0
    %2799 = vmatpush1.msra.mxu0 0.0
    %2800 = vmatprep.subr.mxu0 0.0
    %2801 = vmatpush1.msra.mxu0 0.0
    %2802 = vmatprep.subr.mxu0 0.0
    %2803 = vmatpush1.msra.mxu0 0.0
    %2804 = vmatprep.subr.mxu0 0.0
    %2805 = vmatpush1.msra.mxu0 0.0
    %2806 = vmatprep.subr.mxu0 0.0
    %2807 = vmatpush1.msra.mxu0 0.0
    %2808 = vmatprep.subr.mxu0 0.0
    %2809 = vmatpush1.msra.mxu0 0.0
    %2810 = vmatprep.subr.mxu0 0.0
    %2811 = vmatpush1.msra.mxu0 0.0
    %2812 = vmatprep.subr.mxu0 0.0
    %2813 = vmatpush1.msra.mxu0 0.0
    %2814 = vmatprep.subr.mxu0 0.0
    %2815 = vmatpush1.msra.mxu0 0.0
    %2816 = vmatprep.subr.mxu0 0.0
    %2817 = vmatpush1.msra.mxu0 0.0
    %2818 = vmatprep.subr.mxu0 0.0
    %2819 = vmatpush1.msra.mxu0 0.0
    %2820 = vmatprep.subr.mxu0 0.0
    %2821 = vmatpush1.msra.mxu0 0.0
    %2822 = vmatprep.subr.mxu0 0.0
    %2823 = vmatpush1.msra.mxu0 0.0
    %2824 = vmatprep.subr.mxu0 0.0
    %2825 = vmatpush1.msra.mxu0 0.0
    %2826 = vmatprep.subr.mxu0 0.0
    %2827 = vmatpush1.msra.mxu0 0.0
    %2828 = vmatprep.subr.mxu0 0.0
    %2829 = vmatpush1.msra.mxu0 0.0
    %2830 = vmatprep.subr.mxu0 0.0
    %2831 = vmatpush1.msra.mxu0 0.0
    %2832 = vmatprep.subr.mxu0 0.0
    %2833 = vmatpush1.msra.mxu0 0.0
    %2834 = vmatprep.subr.mxu0 0.0
    %2835 = vmatpush1.msra.mxu0 0.0
    %2836 = vmatprep.subr.mxu0 0.0
    %2837 = vmatpush1.msra.mxu0 0.0
    %2838 = vmatprep.subr.mxu0 0.0
    %2839 = vmatpush1.msra.mxu0 0.0
    %2840 = vmatprep.subr.mxu0 0.0
    %2841 = vmatpush1.msra.mxu0 0.0
    %2842 = vmatprep.subr.mxu0 0.0
    %2843 = vmatpush1.msra.mxu0 0.0
    %2844 = vmatprep.subr.mxu0 0.0
    %2845 = vmatpush1.msra.mxu0 0.0
    %2846 = vmatprep.mubr.f32.mxu0 0.0
    %2847 = vmatmul.mubr.f32.gmra.mrb[0].mxu0 %v2771
    %v2848 = vpop.f32.mrb[0].mxu0
    %v2849 = vadd.f32 %v2751, %v2848
    %v2850 = vpop.f32.mrb[0].mxu0
    %2851 = vmatprep.mubr.f32.mxu0 0.0
    %2852 = vmatmul.mubr.f32.gmra.mrb[0].mxu0 %v2774
    %v2853 = vpop.f32.mrb[0].mxu0
    %v2854 = vadd.f32 %v2751, %v2853
    %v2855 = vpop.f32.mrb[0].mxu0
    %2856 = vmatprep.mubr.f32.mxu0 0.0
    %2857 = vmatmul.mubr.f32.gmra.mrb[0].mxu0 %v2777
    %v2858 = vpop.f32.mrb[0].mxu0
    %v2859 = vadd.f32 %v2751, %v2858
    %v2860 = vpop.f32.mrb[0].mxu0
    %2861 = vmatprep.mubr.f32.mxu0 0.0
    %2862 = vmatmul.mubr.f32.gmra.mrb[0].mxu0 %v2780
    %v2863 = vpop.f32.mrb[0].mxu0
    %v2864 = vadd.f32 %v2751, %v2863
    %v2865 = vpop.f32.mrb[0].mxu0
    %2866 = vdwg.mxu0
    %2867 = vrot.lane.b32.xlu0 %v2023, 12
    %v2868 = vpop.permute.xlu0 %2867
    %2869 = vrot.lane.b32.xlu0 %v2025, 12
    %v2870 = vpop.permute.xlu0 %2869
    %2871 = vrot.lane.b32.xlu0 %v2027, 12
    %v2872 = vpop.permute.xlu0 %2871
    %2873 = vrot.lane.b32.xlu0 %v2029, 12
    %v2874 = vpop.permute.xlu0 %2873
    %2879 = vrot.lane.b32.xlu0 %v2506, 24
    %v2880 = vpop.permute.xlu0 %2879
    %2881 = vrot.lane.b32.xlu0 %v2508, 24
    %v2882 = vpop.permute.xlu0 %2881
    %2883 = vrot.lane.b32.xlu0 %v2510, 24
    %v2884 = vpop.permute.xlu0 %2883
    %2885 = vrot.lane.b32.xlu0 %v2512, 24
    %v2886 = vpop.permute.xlu0 %2885
    %v2891 = vsel %vm1504, %v1497, %v2868
    %v2892 = vsel %vm1504, %v1499, %v2870
    %v2893 = vsel %vm1504, %v1501, %v2872
    %v2894 = vsel %vm1504, %v1503, %v2874
    %vm2895 = vcmask 195584
    %v2896 = vsel %vm2895, %v2891, %v2880
    %v2897 = vsel %vm2895, %v2892, %v2882
    %v2898 = vsel %vm2895, %v2893, %v2884
    %v2899 = vsel %vm2895, %v2894, %v2886
    %v2900 = vld [vmem:[#allocation2 + $0x628] sm:$0xff]
    %v2901 = vld [vmem:[#allocation2 + $0x638] sm:$0xff]
    %v2902 = vld [vmem:[#allocation2 + $0x648] sm:$0xff]
    %v2903 = vld [vmem:[#allocation2 + $0x658] sm:$0xff]
    %v2904 = vld [vmem:[#allocation2 + $0x668] sm:$0xf]
    %vm2905 = vcmask 293888
    %v2907 = vsel %vm2905, %v2896, 0
    %v2910 = vsel %vm2905, %v2897, 0
    %v2913 = vsel %vm2905, %v2898, 0
    %v2916 = vsel %vm2905, %v2899, 0
    %v2919 = vsel %vm1517, %v2904, 0
    %2921 = vmatprep.subr.mxu0 0.0
    %2922 = vmatpush1.msra.mxu0 %v2900
    %2923 = vmatprep.subr.mxu0 0.0
    %2924 = vmatpush1.msra.mxu0 %v2901
    %2925 = vmatprep.subr.mxu0 0.0
    %2926 = vmatpush1.msra.mxu0 %v2902
    %2927 = vmatprep.subr.mxu0 0.0
    %2928 = vmatpush1.msra.mxu0 %v2903
    %2929 = vmatprep.subr.mxu0 0.0
    %2930 = vmatpush1.msra.mxu0 %v2919
    %2931 = vmatprep.subr.mxu0 0.0
    %2932 = vmatpush1.msra.mxu0 0.0
    %2933 = vmatprep.subr.mxu0 0.0
    %2934 = vmatpush1.msra.mxu0 0.0
    %2935 = vmatprep.subr.mxu0 0.0
    %2936 = vmatpush1.msra.mxu0 0.0
    %2937 = vmatprep.subr.mxu0 0.0
    %2938 = vmatpush1.msra.mxu0 0.0
    %2939 = vmatprep.subr.mxu0 0.0
    %2940 = vmatpush1.msra.mxu0 0.0
    %2941 = vmatprep.subr.mxu0 0.0
    %2942 = vmatpush1.msra.mxu0 0.0
    %2943 = vmatprep.subr.mxu0 0.0
    %2944 = vmatpush1.msra.mxu0 0.0
    %2945 = vmatprep.subr.mxu0 0.0
    %2946 = vmatpush1.msra.mxu0 0.0
    %2947 = vmatprep.subr.mxu0 0.0
    %2948 = vmatpush1.msra.mxu0 0.0
    %2949 = vmatprep.subr.mxu0 0.0
    %2950 = vmatpush1.msra.mxu0 0.0
    %2951 = vmatprep.subr.mxu0 0.0
    %2952 = vmatpush1.msra.mxu0 0.0
    %2953 = vmatprep.subr.mxu0 0.0
    %2954 = vmatpush1.msra.mxu0 0.0
    %2955 = vmatprep.subr.mxu0 0.0
    %2956 = vmatpush1.msra.mxu0 0.0
    %2957 = vmatprep.subr.mxu0 0.0
    %2958 = vmatpush1.msra.mxu0 0.0
    %2959 = vmatprep.subr.mxu0 0.0
    %2960 = vmatpush1.msra.mxu0 0.0
    %2961 = vmatprep.subr.mxu0 0.0
    %2962 = vmatpush1.msra.mxu0 0.0
    %2963 = vmatprep.subr.mxu0 0.0
    %2964 = vmatpush1.msra.mxu0 0.0
    %2965 = vmatprep.subr.mxu0 0.0
    %2966 = vmatpush1.msra.mxu0 0.0
    %2967 = vmatprep.subr.mxu0 0.0
    %2968 = vmatpush1.msra.mxu0 0.0
    %2969 = vmatprep.subr.mxu0 0.0
    %2970 = vmatpush1.msra.mxu0 0.0
    %2971 = vmatprep.subr.mxu0 0.0
    %2972 = vmatpush1.msra.mxu0 0.0
    %2973 = vmatprep.subr.mxu0 0.0
    %2974 = vmatpush1.msra.mxu0 0.0
    %2975 = vmatprep.subr.mxu0 0.0
    %2976 = vmatpush1.msra.mxu0 0.0
    %2977 = vmatprep.subr.mxu0 0.0
    %2978 = vmatpush1.msra.mxu0 0.0
    %2979 = vmatprep.subr.mxu0 0.0
    %2980 = vmatpush1.msra.mxu0 0.0
    %2981 = vmatprep.subr.mxu0 0.0
    %2982 = vmatpush1.msra.mxu0 0.0
    %2983 = vmatprep.subr.mxu0 0.0
    %2984 = vmatpush1.msra.mxu0 0.0
    %2985 = vmatprep.mubr.f32.mxu0 0.0
    %2986 = vmatmul.mubr.f32.gmra.mrb[0].mxu0 %v2907
    %v2987 = vpop.f32.mrb[0].mxu0
    %v2988 = vadd.f32 0.0, %v2987
    %v2989 = vpop.f32.mrb[0].mxu0
    %2990 = vmatprep.mubr.f32.mxu0 0.0
    %2991 = vmatmul.mubr.f32.gmra.mrb[0].mxu0 %v2910
    %v2992 = vpop.f32.mrb[0].mxu0
    %v2993 = vadd.f32 0.0, %v2992
    %v2994 = vpop.f32.mrb[0].mxu0
    %2995 = vmatprep.mubr.f32.mxu0 0.0
    %2996 = vmatmul.mubr.f32.gmra.mrb[0].mxu0 %v2913
    %v2997 = vpop.f32.mrb[0].mxu0
    %v2998 = vadd.f32 0.0, %v2997
    %v2999 = vpop.f32.mrb[0].mxu0
    %3000 = vmatprep.mubr.f32.mxu0 0.0
    %3001 = vmatmul.mubr.f32.gmra.mrb[0].mxu0 %v2916
    %v3002 = vpop.f32.mrb[0].mxu0
    %v3003 = vadd.f32 0.0, %v3002
    %v3004 = vpop.f32.mrb[0].mxu0
    %3005 = vdwg.mxu0
    %3010 = vrot.lane.b32.xlu0 %v2988, 96
    %v3011 = vpop.permute.xlu0 %3010
    %3012 = vrot.lane.b32.xlu0 %v2993, 96
    %v3013 = vpop.permute.xlu0 %3012
    %3014 = vrot.lane.b32.xlu0 %v2998, 96
    %v3015 = vpop.permute.xlu0 %3014
    %3016 = vrot.lane.b32.xlu0 %v3003, 96
    %v3017 = vpop.permute.xlu0 %3016
    %vm3022 = vcmask 859904
    %3023 = vst.msk [vmem:[%s2 + $0x8] sm:$0xff] %vm3022, %v3011
    %3024 = vst.msk [vmem:[%s2 + $0x18] sm:$0xff] %vm3022, %v3013
    %3025 = vst.msk [vmem:[%s2 + $0x28] sm:$0xff] %vm3022, %v3015
    %3026 = vst.msk [vmem:[%s2 + $0x38] sm:$0xff] %vm3022, %v3017
    %v3027 = vld [vmem:[#allocation2 + $0x620] sm:$0xff]
    %v3028 = vld [vmem:[#allocation2 + $0x630] sm:$0xff]
    %v3029 = vld [vmem:[#allocation2 + $0x640] sm:$0xff]
    %v3030 = vld [vmem:[#allocation2 + $0x650] sm:$0xff]
    %v3031 = vld [vmem:[#allocation2 + $0x660] sm:$0xff]
    %v3032 = vld [vmem:[#allocation2 + $0x670] sm:$0xff]
    %v3033 = vld [vmem:[#allocation2 + $0x6d3] ss:$0 sm:$0xff]
    %3034 = vmatprep.subr.mxu0 0.0
    %3035 = vmatpush1.msra.mxu0 %v3027
    %3036 = vmatprep.subr.mxu0 0.0
    %3037 = vmatpush1.msra.mxu0 %v3028
    %3038 = vmatprep.subr.mxu0 0.0
    %3039 = vmatpush1.msra.mxu0 %v3029
    %3040 = vmatprep.subr.mxu0 0.0
    %3041 = vmatpush1.msra.mxu0 %v3030
    %3042 = vmatprep.subr.mxu0 0.0
    %3043 = vmatpush1.msra.mxu0 %v3031
    %3044 = vmatprep.subr.mxu0 0.0
    %3045 = vmatpush1.msra.mxu0 %v3032
    %3046 = vmatprep.subr.mxu0 0.0
    %3047 = vmatpush1.msra.mxu0 0.0
    %3048 = vmatprep.subr.mxu0 0.0
    %3049 = vmatpush1.msra.mxu0 0.0
    %3050 = vmatprep.subr.mxu0 0.0
    %3051 = vmatpush1.msra.mxu0 0.0
    %3052 = vmatprep.subr.mxu0 0.0
    %3053 = vmatpush1.msra.mxu0 0.0
    %3054 = vmatprep.subr.mxu0 0.0
    %3055 = vmatpush1.msra.mxu0 0.0
    %3056 = vmatprep.subr.mxu0 0.0
    %3057 = vmatpush1.msra.mxu0 0.0
    %3058 = vmatprep.subr.mxu0 0.0
    %3059 = vmatpush1.msra.mxu0 0.0
    %3060 = vmatprep.subr.mxu0 0.0
    %3061 = vmatpush1.msra.mxu0 0.0
    %3062 = vmatprep.subr.mxu0 0.0
    %3063 = vmatpush1.msra.mxu0 0.0
    %3064 = vmatprep.subr.mxu0 0.0
    %3065 = vmatpush1.msra.mxu0 0.0
    %3066 = vmatprep.subr.mxu0 0.0
    %3067 = vmatpush1.msra.mxu0 0.0
    %3068 = vmatprep.subr.mxu0 0.0
    %3069 = vmatpush1.msra.mxu0 0.0
    %3070 = vmatprep.subr.mxu0 0.0
    %3071 = vmatpush1.msra.mxu0 0.0
    %3072 = vmatprep.subr.mxu0 0.0
    %3073 = vmatpush1.msra.mxu0 0.0
    %3074 = vmatprep.subr.mxu0 0.0
    %3075 = vmatpush1.msra.mxu0 0.0
    %3076 = vmatprep.subr.mxu0 0.0
    %3077 = vmatpush1.msra.mxu0 0.0
    %3078 = vmatprep.subr.mxu0 0.0
    %3079 = vmatpush1.msra.mxu0 0.0
    %3080 = vmatprep.subr.mxu0 0.0
    %3081 = vmatpush1.msra.mxu0 0.0
    %3082 = vmatprep.subr.mxu0 0.0
    %3083 = vmatpush1.msra.mxu0 0.0
    %3084 = vmatprep.subr.mxu0 0.0
    %3085 = vmatpush1.msra.mxu0 0.0
    %3086 = vmatprep.subr.mxu0 0.0
    %3087 = vmatpush1.msra.mxu0 0.0
    %3088 = vmatprep.subr.mxu0 0.0
    %3089 = vmatpush1.msra.mxu0 0.0
    %3090 = vmatprep.subr.mxu0 0.0
    %3091 = vmatpush1.msra.mxu0 0.0
    %3092 = vmatprep.subr.mxu0 0.0
    %3093 = vmatpush1.msra.mxu0 0.0
    %3094 = vmatprep.subr.mxu0 0.0
    %3095 = vmatpush1.msra.mxu0 0.0
    %3096 = vmatprep.subr.mxu0 0.0
    %3097 = vmatpush1.msra.mxu0 0.0
    %3098 = vmatprep.mubr.f32.mxu0 0.0
    %3099 = vmatmul.mubr.f32.gmra.mrb[0].mxu0 %v1062
    %v3100 = vpop.f32.mrb[0].mxu0
    %v3101 = vadd.f32 %v3033, %v3100
    %v3102 = vpop.f32.mrb[0].mxu0
    %3103 = vmatprep.mubr.f32.mxu0 0.0
    %3104 = vmatmul.mubr.f32.gmra.mrb[0].mxu0 %v1065
    %v3105 = vpop.f32.mrb[0].mxu0
    %v3106 = vadd.f32 %v3033, %v3105
    %v3107 = vpop.f32.mrb[0].mxu0
    %3108 = vmatprep.mubr.f32.mxu0 0.0
    %3109 = vmatmul.mubr.f32.gmra.mrb[0].mxu0 %v1068
    %v3110 = vpop.f32.mrb[0].mxu0
    %v3111 = vadd.f32 %v3033, %v3110
    %v3112 = vpop.f32.mrb[0].mxu0
    %3113 = vmatprep.mubr.f32.mxu0 0.0
    %3114 = vmatmul.mubr.f32.gmra.mrb[0].mxu0 %v1071
    %v3115 = vpop.f32.mrb[0].mxu0
    %v3116 = vadd.f32 %v3033, %v3115
    %v3117 = vpop.f32.mrb[0].mxu0
    %3118 = vdwg.mxu0
    %v3119 = vmax.f32 %v3101, 0.0
    %v3120 = vmax.f32 %v3106, 0.0
    %v3121 = vmax.f32 %v3111, 0.0
    %v3122 = vmax.f32 %v3116, 0.0
    %v3123 = vld [vmem:[#allocation2 + $0x480] sm:$0xff]
    %v3124 = vld [vmem:[#allocation2 + $0x490] sm:$0xff]
    %v3125 = vld [vmem:[#allocation2 + $0x4a0] sm:$0xff]
    %v3126 = vld [vmem:[#allocation2 + $0x4b0] sm:$0xff]
    %v3127 = vld [vmem:[#allocation2 + $0x4c0] sm:$0xff]
    %v3128 = vld [vmem:[#allocation2 + $0x4d0] sm:$0xff]
    %v3129 = vld [vmem:[#allocation2 + $0x4e0] sm:$0xff]
    %v3130 = vld [vmem:[#allocation2 + $0x4f0] sm:$0xff]
    %v3131 = vld [vmem:[#allocation2 + $0x500] sm:$0xff]
    %v3132 = vld [vmem:[#allocation2 + $0x510] sm:$0xff]
    %v3133 = vld [vmem:[#allocation2 + $0x520] sm:$0xff]
    %v3134 = vld [vmem:[#allocation2 + $0x530] sm:$0xff]
    %v3135 = vld [vmem:[#allocation2 + $0x6d4] ss:$0 sm:$0xff]
    %v3136 = vld [vmem:[#allocation2 + $0x6d5] ss:$0 sm:$0xff]
    %v3138 = vsel %vm633, %v3119, 0
    %v3141 = vsel %vm633, %v3120, 0
    %v3144 = vsel %vm633, %v3121, 0
    %v3147 = vsel %vm633, %v3122, 0
    %3149 = vmatprep.subr.mxu0 0.0
    %3150 = vmatpush1.msra.mxu0 %v3123
    %3151 = vmatprep.subr.mxu0 0.0
    %3152 = vmatpush1.msra.mxu0 %v3124
    %3153 = vmatprep.subr.mxu0 0.0
    %3154 = vmatpush1.msra.mxu0 %v3125
    %3155 = vmatprep.subr.mxu0 0.0
    %3156 = vmatpush1.msra.mxu0 %v3126
    %3157 = vmatprep.subr.mxu0 0.0
    %3158 = vmatpush1.msra.mxu0 %v3127
    %3159 = vmatprep.subr.mxu0 0.0
    %3160 = vmatpush1.msra.mxu0 %v3128
    %3161 = vmatprep.subr.mxu0 0.0
    %3162 = vmatpush1.msra.mxu0 %v3129
    %3163 = vmatprep.subr.mxu0 0.0
    %3164 = vmatpush1.msra.mxu0 %v3130
    %3165 = vmatprep.subr.mxu0 0.0
    %3166 = vmatpush1.msra.mxu0 %v3131
    %3167 = vmatprep.subr.mxu0 0.0
    %3168 = vmatpush1.msra.mxu0 %v3132
    %3169 = vmatprep.subr.mxu0 0.0
    %3170 = vmatpush1.msra.mxu0 %v3133
    %3171 = vmatprep.subr.mxu0 0.0
    %3172 = vmatpush1.msra.mxu0 %v3134
    %3173 = vmatprep.subr.mxu0 0.0
    %3174 = vmatpush1.msra.mxu0 0.0
    %3175 = vmatprep.subr.mxu0 0.0
    %3176 = vmatpush1.msra.mxu0 0.0
    %3177 = vmatprep.subr.mxu0 0.0
    %3178 = vmatpush1.msra.mxu0 0.0
    %3179 = vmatprep.subr.mxu0 0.0
    %3180 = vmatpush1.msra.mxu0 0.0
    %3181 = vmatprep.subr.mxu0 0.0
    %3182 = vmatpush1.msra.mxu0 0.0
    %3183 = vmatprep.subr.mxu0 0.0
    %3184 = vmatpush1.msra.mxu0 0.0
    %3185 = vmatprep.subr.mxu0 0.0
    %3186 = vmatpush1.msra.mxu0 0.0
    %3187 = vmatprep.subr.mxu0 0.0
    %3188 = vmatpush1.msra.mxu0 0.0
    %3189 = vmatprep.subr.mxu0 0.0
    %3190 = vmatpush1.msra.mxu0 0.0
    %3191 = vmatprep.subr.mxu0 0.0
    %3192 = vmatpush1.msra.mxu0 0.0
    %3193 = vmatprep.subr.mxu0 0.0
    %3194 = vmatpush1.msra.mxu0 0.0
    %3195 = vmatprep.subr.mxu0 0.0
    %3196 = vmatpush1.msra.mxu0 0.0
    %3197 = vmatprep.subr.mxu0 0.0
    %3198 = vmatpush1.msra.mxu0 0.0
    %3199 = vmatprep.subr.mxu0 0.0
    %3200 = vmatpush1.msra.mxu0 0.0
    %3201 = vmatprep.subr.mxu0 0.0
    %3202 = vmatpush1.msra.mxu0 0.0
    %3203 = vmatprep.subr.mxu0 0.0
    %3204 = vmatpush1.msra.mxu0 0.0
    %3205 = vmatprep.subr.mxu0 0.0
    %3206 = vmatpush1.msra.mxu0 0.0
    %3207 = vmatprep.subr.mxu0 0.0
    %3208 = vmatpush1.msra.mxu0 0.0
    %3209 = vmatprep.subr.mxu0 0.0
    %3210 = vmatpush1.msra.mxu0 0.0
    %3211 = vmatprep.subr.mxu0 0.0
    %3212 = vmatpush1.msra.mxu0 0.0
    %3213 = vmatprep.mubr.f32.mxu0 0.0
    %3214 = vmatmul.mubr.f32.gmra.mrb[0].mxu0 %v3138
    %v3215 = vpop.f32.mrb[0].mxu0
    %v3216 = vadd.f32 0.0, %v3215
    %v3217 = vpop.f32.mrb[0].mxu0
    %3218 = vmatprep.mubr.f32.mxu0 0.0
    %3219 = vmatmul.mubr.f32.gmra.mrb[0].mxu0 %v3141
    %v3220 = vpop.f32.mrb[0].mxu0
    %v3221 = vadd.f32 0.0, %v3220
    %v3222 = vpop.f32.mrb[0].mxu0
    %3223 = vmatprep.mubr.f32.mxu0 0.0
    %3224 = vmatmul.mubr.f32.gmra.mrb[0].mxu0 %v3144
    %v3225 = vpop.f32.mrb[0].mxu0
    %v3226 = vadd.f32 0.0, %v3225
    %v3227 = vpop.f32.mrb[0].mxu0
    %3228 = vmatprep.mubr.f32.mxu0 0.0
    %3229 = vmatmul.mubr.f32.gmra.mrb[0].mxu0 %v3147
    %v3230 = vpop.f32.mrb[0].mxu0
    %v3231 = vadd.f32 0.0, %v3230
    %v3232 = vpop.f32.mrb[0].mxu0
    %3233 = vdwg.mxu0
    %v3234 = vsub.f32 %v3119, %v3216
    %v3235 = vsub.f32 %v3120, %v3221
    %v3236 = vsub.f32 %v3121, %v3226
    %v3237 = vsub.f32 %v3122, %v3231
    %v3238 = vmul.f32 %v3234, %v3234
    %v3239 = vmul.f32 %v3235, %v3235
    %v3240 = vmul.f32 %v3236, %v3236
    %v3241 = vmul.f32 %v3237, %v3237
    %v3243 = vsel %vm633, %v3238, 0
    %v3246 = vsel %vm633, %v3239, 0
    %v3249 = vsel %vm633, %v3240, 0
    %v3252 = vsel %vm633, %v3241, 0
    %3254 = vmatprep.subr.mxu0 0.0
    %3255 = vmatpush1.msra.mxu0 %v3123
    %3256 = vmatprep.subr.mxu0 0.0
    %3257 = vmatpush1.msra.mxu0 %v3124
    %3258 = vmatprep.subr.mxu0 0.0
    %3259 = vmatpush1.msra.mxu0 %v3125
    %3260 = vmatprep.subr.mxu0 0.0
    %3261 = vmatpush1.msra.mxu0 %v3126
    %3262 = vmatprep.subr.mxu0 0.0
    %3263 = vmatpush1.msra.mxu0 %v3127
    %3264 = vmatprep.subr.mxu0 0.0
    %3265 = vmatpush1.msra.mxu0 %v3128
    %3266 = vmatprep.subr.mxu0 0.0
    %3267 = vmatpush1.msra.mxu0 %v3129
    %3268 = vmatprep.subr.mxu0 0.0
    %3269 = vmatpush1.msra.mxu0 %v3130
    %3270 = vmatprep.subr.mxu0 0.0
    %3271 = vmatpush1.msra.mxu0 %v3131
    %3272 = vmatprep.subr.mxu0 0.0
    %3273 = vmatpush1.msra.mxu0 %v3132
    %3274 = vmatprep.subr.mxu0 0.0
    %3275 = vmatpush1.msra.mxu0 %v3133
    %3276 = vmatprep.subr.mxu0 0.0
    %3277 = vmatpush1.msra.mxu0 %v3134
    %3278 = vmatprep.subr.mxu0 0.0
    %3279 = vmatpush1.msra.mxu0 0.0
    %3280 = vmatprep.subr.mxu0 0.0
    %3281 = vmatpush1.msra.mxu0 0.0
    %3282 = vmatprep.subr.mxu0 0.0
    %3283 = vmatpush1.msra.mxu0 0.0
    %3284 = vmatprep.subr.mxu0 0.0
    %3285 = vmatpush1.msra.mxu0 0.0
    %3286 = vmatprep.subr.mxu0 0.0
    %3287 = vmatpush1.msra.mxu0 0.0
    %3288 = vmatprep.subr.mxu0 0.0
    %3289 = vmatpush1.msra.mxu0 0.0
    %3290 = vmatprep.subr.mxu0 0.0
    %3291 = vmatpush1.msra.mxu0 0.0
    %3292 = vmatprep.subr.mxu0 0.0
    %3293 = vmatpush1.msra.mxu0 0.0
    %3294 = vmatprep.subr.mxu0 0.0
    %3295 = vmatpush1.msra.mxu0 0.0
    %3296 = vmatprep.subr.mxu0 0.0
    %3297 = vmatpush1.msra.mxu0 0.0
    %3298 = vmatprep.subr.mxu0 0.0
    %3299 = vmatpush1.msra.mxu0 0.0
    %3300 = vmatprep.subr.mxu0 0.0
    %3301 = vmatpush1.msra.mxu0 0.0
    %3302 = vmatprep.subr.mxu0 0.0
    %3303 = vmatpush1.msra.mxu0 0.0
    %3304 = vmatprep.subr.mxu0 0.0
    %3305 = vmatpush1.msra.mxu0 0.0
    %3306 = vmatprep.subr.mxu0 0.0
    %3307 = vmatpush1.msra.mxu0 0.0
    %3308 = vmatprep.subr.mxu0 0.0
    %3309 = vmatpush1.msra.mxu0 0.0
    %3310 = vmatprep.subr.mxu0 0.0
    %3311 = vmatpush1.msra.mxu0 0.0
    %3312 = vmatprep.subr.mxu0 0.0
    %3313 = vmatpush1.msra.mxu0 0.0
    %3314 = vmatprep.subr.mxu0 0.0
    %3315 = vmatpush1.msra.mxu0 0.0
    %3316 = vmatprep.subr.mxu0 0.0
    %3317 = vmatpush1.msra.mxu0 0.0
    %3318 = vmatprep.mubr.f32.mxu0 0.0
    %3319 = vmatmul.mubr.f32.gmra.mrb[0].mxu0 %v3243
    %v3320 = vpop.f32.mrb[0].mxu0
    %v3321 = vadd.f32 1e-05, %v3320
    %v3322 = vpop.f32.mrb[0].mxu0
    %3323 = vmatprep.mubr.f32.mxu0 0.0
    %3324 = vmatmul.mubr.f32.gmra.mrb[0].mxu0 %v3246
    %v3325 = vpop.f32.mrb[0].mxu0
    %v3326 = vadd.f32 1e-05, %v3325
    %v3327 = vpop.f32.mrb[0].mxu0
    %3328 = vmatprep.mubr.f32.mxu0 0.0
    %3329 = vmatmul.mubr.f32.gmra.mrb[0].mxu0 %v3249
    %v3330 = vpop.f32.mrb[0].mxu0
    %v3331 = vadd.f32 1e-05, %v3330
    %v3332 = vpop.f32.mrb[0].mxu0
    %3333 = vmatprep.mubr.f32.mxu0 0.0
    %3334 = vmatmul.mubr.f32.gmra.mrb[0].mxu0 %v3252
    %v3335 = vpop.f32.mrb[0].mxu0
    %v3336 = vadd.f32 1e-05, %v3335
    %v3337 = vpop.f32.mrb[0].mxu0
    %3338 = vdwg.mxu0
    %v3339 = vrsqrt.pop %v3321
    %v3340 = vrsqrt.pop %v3326
    %v3341 = vrsqrt.pop %v3331
    %v3342 = vrsqrt.pop %v3336
    %v3343 = vmul.f32 %v3234, %v3339
    %v3344 = vmul.f32 %v3235, %v3340
    %v3345 = vmul.f32 %v3236, %v3341
    %v3346 = vmul.f32 %v3237, %v3342
    %v3347 = vmul.f32 %v3343, %v3135
    %v3348 = vmul.f32 %v3344, %v3135
    %v3349 = vmul.f32 %v3345, %v3135
    %v3350 = vmul.f32 %v3346, %v3135
    %v3351 = vadd.f32 %v3347, %v3136
    %v3352 = vadd.f32 %v3348, %v3136
    %v3353 = vadd.f32 %v3349, %v3136
    %v3354 = vadd.f32 %v3350, %v3136
    %v3355 = vld [vmem:[#allocation2 + $0x300] sm:$0xff]
    %v3356 = vld [vmem:[#allocation2 + $0x308] sm:$0xff]
    %v3357 = vld [vmem:[#allocation2 + $0x310] sm:$0xff]
    %v3358 = vld [vmem:[#allocation2 + $0x318] sm:$0xff]
    %v3359 = vld [vmem:[#allocation2 + $0x320] sm:$0xff]
    %v3360 = vld [vmem:[#allocation2 + $0x328] sm:$0xff]
    %v3361 = vld [vmem:[#allocation2 + $0x330] sm:$0xff]
    %v3362 = vld [vmem:[#allocation2 + $0x338] sm:$0xff]
    %v3363 = vld [vmem:[#allocation2 + $0x340] sm:$0xff]
    %v3364 = vld [vmem:[#allocation2 + $0x348] sm:$0xff]
    %v3365 = vld [vmem:[#allocation2 + $0x350] sm:$0xff]
    %v3366 = vld [vmem:[#allocation2 + $0x358] sm:$0xff]
    %v3367 = vld [vmem:[#allocation2 + $0x360] sm:$0xff]
    %v3368 = vld [vmem:[#allocation2 + $0x368] sm:$0xff]
    %v3369 = vld [vmem:[#allocation2 + $0x370] sm:$0xff]
    %v3370 = vld [vmem:[#allocation2 + $0x378] sm:$0xff]
    %v3371 = vld [vmem:[#allocation2 + $0x380] sm:$0xff]
    %v3372 = vld [vmem:[#allocation2 + $0x388] sm:$0xff]
    %v3373 = vld [vmem:[#allocation2 + $0x390] sm:$0xff]
    %v3374 = vld [vmem:[#allocation2 + $0x398] sm:$0xff]
    %v3375 = vld [vmem:[#allocation2 + $0x3a0] sm:$0xff]
    %v3376 = vld [vmem:[#allocation2 + $0x3a8] sm:$0xff]
    %v3377 = vld [vmem:[#allocation2 + $0x3b0] sm:$0xff]
    %v3378 = vld [vmem:[#allocation2 + $0x3b8] sm:$0xff]
    %s3379 = scalar_lea.vmem [#allocation2], 1731
    %v3380 = vld [vmem:[%s3379] ss:$8 sm:$0x3]
    %v3382 = vlaneseq
    %v3383 = vshrl.u32 %v3382, 7
    %v3384 = vsub.s32 0, %v3383
    %v3385 = vrot.slane %v3380, %v3384
    %v3386 = vlaneseq
    %v3387 = vshrl.u32 %v3386, 7
    %v3388 = vsub.s32 1, %v3387
    %v3389 = vrot.slane %v3380, %v3388
    %v3393 = vsel %vm633, %v3351, 0
    %v3396 = vsel %vm633, %v3352, 0
    %v3399 = vsel %vm633, %v3353, 0
    %v3402 = vsel %vm633, %v3354, 0
    %3404 = vmatprep.subr.mxu0 %v3356
    %3405 = vmatpush1.msra.mxu0 %v3355
    %3406 = vmatprep.subr.mxu0 %v3358
    %3407 = vmatpush1.msra.mxu0 %v3357
    %3408 = vmatprep.subr.mxu0 %v3360
    %3409 = vmatpush1.msra.mxu0 %v3359
    %3410 = vmatprep.subr.mxu0 %v3362
    %3411 = vmatpush1.msra.mxu0 %v3361
    %3412 = vmatprep.subr.mxu0 %v3364
    %3413 = vmatpush1.msra.mxu0 %v3363
    %3414 = vmatprep.subr.mxu0 %v3366
    %3415 = vmatpush1.msra.mxu0 %v3365
    %3416 = vmatprep.subr.mxu0 %v3368
    %3417 = vmatpush1.msra.mxu0 %v3367
    %3418 = vmatprep.subr.mxu0 %v3370
    %3419 = vmatpush1.msra.mxu0 %v3369
    %3420 = vmatprep.subr.mxu0 %v3372
    %3421 = vmatpush1.msra.mxu0 %v3371
    %3422 = vmatprep.subr.mxu0 %v3374
    %3423 = vmatpush1.msra.mxu0 %v3373
    %3424 = vmatprep.subr.mxu0 %v3376
    %3425 = vmatpush1.msra.mxu0 %v3375
    %3426 = vmatprep.subr.mxu0 %v3378
    %3427 = vmatpush1.msra.mxu0 %v3377
    %3428 = vmatprep.subr.mxu0 0.0
    %3429 = vmatpush1.msra.mxu0 0.0
    %3430 = vmatprep.subr.mxu0 0.0
    %3431 = vmatpush1.msra.mxu0 0.0
    %3432 = vmatprep.subr.mxu0 0.0
    %3433 = vmatpush1.msra.mxu0 0.0
    %3434 = vmatprep.subr.mxu0 0.0
    %3435 = vmatpush1.msra.mxu0 0.0
    %3436 = vmatprep.subr.mxu0 0.0
    %3437 = vmatpush1.msra.mxu0 0.0
    %3438 = vmatprep.subr.mxu0 0.0
    %3439 = vmatpush1.msra.mxu0 0.0
    %3440 = vmatprep.subr.mxu0 0.0
    %3441 = vmatpush1.msra.mxu0 0.0
    %3442 = vmatprep.subr.mxu0 0.0
    %3443 = vmatpush1.msra.mxu0 0.0
    %3444 = vmatprep.subr.mxu0 0.0
    %3445 = vmatpush1.msra.mxu0 0.0
    %3446 = vmatprep.subr.mxu0 0.0
    %3447 = vmatpush1.msra.mxu0 0.0
    %3448 = vmatprep.subr.mxu0 0.0
    %3449 = vmatpush1.msra.mxu0 0.0
    %3450 = vmatprep.subr.mxu0 0.0
    %3451 = vmatpush1.msra.mxu0 0.0
    %3452 = vmatprep.subr.mxu0 0.0
    %3453 = vmatpush1.msra.mxu0 0.0
    %3454 = vmatprep.subr.mxu0 0.0
    %3455 = vmatpush1.msra.mxu0 0.0
    %3456 = vmatprep.subr.mxu0 0.0
    %3457 = vmatpush1.msra.mxu0 0.0
    %3458 = vmatprep.subr.mxu0 0.0
    %3459 = vmatpush1.msra.mxu0 0.0
    %3460 = vmatprep.subr.mxu0 0.0
    %3461 = vmatpush1.msra.mxu0 0.0
    %3462 = vmatprep.subr.mxu0 0.0
    %3463 = vmatpush1.msra.mxu0 0.0
    %3464 = vmatprep.subr.mxu0 0.0
    %3465 = vmatpush1.msra.mxu0 0.0
    %3466 = vmatprep.subr.mxu0 0.0
    %3467 = vmatpush1.msra.mxu0 0.0
    %3468 = vmatprep.mubr.f32.mxu0 0.0
    %3469 = vmatmul.mubr.f32.gmra.mrb[0].mxu0 %v3393
    %v3470 = vpop.f32.mrb[0].mxu0
    %v3471 = vadd.f32 %v3385, %v3470
    %v3472 = vpop.f32.mrb[0].mxu0
    %v3473 = vadd.f32 %v3389, %v3472
    %3474 = vmatprep.mubr.f32.mxu0 0.0
    %3475 = vmatmul.mubr.f32.gmra.mrb[0].mxu0 %v3396
    %v3476 = vpop.f32.mrb[0].mxu0
    %v3477 = vadd.f32 %v3385, %v3476
    %v3478 = vpop.f32.mrb[0].mxu0
    %v3479 = vadd.f32 %v3389, %v3478
    %3480 = vmatprep.mubr.f32.mxu0 0.0
    %3481 = vmatmul.mubr.f32.gmra.mrb[0].mxu0 %v3399
    %v3482 = vpop.f32.mrb[0].mxu0
    %v3483 = vadd.f32 %v3385, %v3482
    %v3484 = vpop.f32.mrb[0].mxu0
    %v3485 = vadd.f32 %v3389, %v3484
    %3486 = vmatprep.mubr.f32.mxu0 0.0
    %3487 = vmatmul.mubr.f32.gmra.mrb[0].mxu0 %v3402
    %v3488 = vpop.f32.mrb[0].mxu0
    %v3489 = vadd.f32 %v3385, %v3488
    %v3490 = vpop.f32.mrb[0].mxu0
    %v3491 = vadd.f32 %v3389, %v3490
    %3492 = vdwg.mxu0
    %v3493 = vmax.f32 %v3471, 0.0
    %v3494 = vmax.f32 %v3473, 0.0
    %v3495 = vmax.f32 %v3477, 0.0
    %v3496 = vmax.f32 %v3479, 0.0
    %v3497 = vmax.f32 %v3483, 0.0
    %v3498 = vmax.f32 %v3485, 0.0
    %v3499 = vmax.f32 %v3489, 0.0
    %v3500 = vmax.f32 %v3491, 0.0
    %v3501 = vld [vmem:[#allocation2] sm:$0xff]
    %v3502 = vld [vmem:[#allocation2 + $0x8] sm:$0xff]
    %v3503 = vld [vmem:[#allocation2 + $0x10] sm:$0xff]
    %v3504 = vld [vmem:[#allocation2 + $0x18] sm:$0xff]
    %v3505 = vld [vmem:[#allocation2 + $0x20] sm:$0xff]
    %v3506 = vld [vmem:[#allocation2 + $0x28] sm:$0xff]
    %v3507 = vld [vmem:[#allocation2 + $0x30] sm:$0xff]
    %v3508 = vld [vmem:[#allocation2 + $0x38] sm:$0xff]
    %v3509 = vld [vmem:[#allocation2 + $0x40] sm:$0xff]
    %v3510 = vld [vmem:[#allocation2 + $0x48] sm:$0xff]
    %v3511 = vld [vmem:[#allocation2 + $0x50] sm:$0xff]
    %v3512 = vld [vmem:[#allocation2 + $0x58] sm:$0xff]
    %v3513 = vld [vmem:[#allocation2 + $0x60] sm:$0xff]
    %v3514 = vld [vmem:[#allocation2 + $0x68] sm:$0xff]
    %v3515 = vld [vmem:[#allocation2 + $0x70] sm:$0xff]
    %v3516 = vld [vmem:[#allocation2 + $0x78] sm:$0xff]
    %v3517 = vld [vmem:[#allocation2 + $0x80] sm:$0xff]
    %v3518 = vld [vmem:[#allocation2 + $0x88] sm:$0xff]
    %v3519 = vld [vmem:[#allocation2 + $0x90] sm:$0xff]
    %v3520 = vld [vmem:[#allocation2 + $0x98] sm:$0xff]
    %v3521 = vld [vmem:[#allocation2 + $0xa0] sm:$0xff]
    %v3522 = vld [vmem:[#allocation2 + $0xa8] sm:$0xff]
    %v3523 = vld [vmem:[#allocation2 + $0xb0] sm:$0xff]
    %v3524 = vld [vmem:[#allocation2 + $0xb8] sm:$0xff]
    %v3525 = vld [vmem:[#allocation2 + $0xc0] sm:$0xff]
    %v3526 = vld [vmem:[#allocation2 + $0xc8] sm:$0xff]
    %v3527 = vld [vmem:[#allocation2 + $0xd0] sm:$0xff]
    %v3528 = vld [vmem:[#allocation2 + $0xd8] sm:$0xff]
    %v3529 = vld [vmem:[#allocation2 + $0xe0] sm:$0xff]
    %v3530 = vld [vmem:[#allocation2 + $0xe8] sm:$0xff]
    %v3531 = vld [vmem:[#allocation2 + $0xf0] sm:$0xff]
    %v3532 = vld [vmem:[#allocation2 + $0xf8] sm:$0xff]
    %v3533 = vld [vmem:[#allocation2 + $0x100] sm:$0xff]
    %v3534 = vld [vmem:[#allocation2 + $0x108] sm:$0xff]
    %v3535 = vld [vmem:[#allocation2 + $0x110] sm:$0xff]
    %v3536 = vld [vmem:[#allocation2 + $0x118] sm:$0xff]
    %v3537 = vld [vmem:[#allocation2 + $0x120] sm:$0xff]
    %v3538 = vld [vmem:[#allocation2 + $0x128] sm:$0xff]
    %v3539 = vld [vmem:[#allocation2 + $0x130] sm:$0xff]
    %v3540 = vld [vmem:[#allocation2 + $0x138] sm:$0xff]
    %v3541 = vld [vmem:[#allocation2 + $0x140] sm:$0xff]
    %v3542 = vld [vmem:[#allocation2 + $0x148] sm:$0xff]
    %v3543 = vld [vmem:[#allocation2 + $0x150] sm:$0xff]
    %v3544 = vld [vmem:[#allocation2 + $0x158] sm:$0xff]
    %v3545 = vld [vmem:[#allocation2 + $0x160] sm:$0xff]
    %v3546 = vld [vmem:[#allocation2 + $0x168] sm:$0xff]
    %v3547 = vld [vmem:[#allocation2 + $0x170] sm:$0xff]
    %v3548 = vld [vmem:[#allocation2 + $0x178] sm:$0xff]
    %s3549 = scalar_lea.vmem [#allocation2], 1732
    %v3550 = vld [vmem:[%s3549] ss:$8 sm:$0x3]
    %s3551 = scalar_lea.vmem [#allocation2], 1733
    %v3552 = vld [vmem:[%s3551] ss:$8 sm:$0x3]
    %v3554 = vsel %vm220, %v3494, 0
    %v3557 = vsel %vm220, %v3496, 0
    %v3560 = vsel %vm220, %v3498, 0
    %v3563 = vsel %vm220, %v3500, 0
    %3565 = vmatprep.subr.mxu0 %v3502
    %3566 = vmatpush1.msra.mxu0 %v3501
    %3567 = vmatprep.subr.mxu0 %v3504
    %3568 = vmatpush1.msra.mxu0 %v3503
    %3569 = vmatprep.subr.mxu0 %v3506
    %3570 = vmatpush1.msra.mxu0 %v3505
    %3571 = vmatprep.subr.mxu0 %v3508
    %3572 = vmatpush1.msra.mxu0 %v3507
    %3573 = vmatprep.subr.mxu0 %v3510
    %3574 = vmatpush1.msra.mxu0 %v3509
    %3575 = vmatprep.subr.mxu0 %v3512
    %3576 = vmatpush1.msra.mxu0 %v3511
    %3577 = vmatprep.subr.mxu0 %v3514
    %3578 = vmatpush1.msra.mxu0 %v3513
    %3579 = vmatprep.subr.mxu0 %v3516
    %3580 = vmatpush1.msra.mxu0 %v3515
    %3581 = vmatprep.subr.mxu0 %v3518
    %3582 = vmatpush1.msra.mxu0 %v3517
    %3583 = vmatprep.subr.mxu0 %v3520
    %3584 = vmatpush1.msra.mxu0 %v3519
    %3585 = vmatprep.subr.mxu0 %v3522
    %3586 = vmatpush1.msra.mxu0 %v3521
    %3587 = vmatprep.subr.mxu0 %v3524
    %3588 = vmatpush1.msra.mxu0 %v3523
    %3589 = vmatprep.subr.mxu0 %v3526
    %3590 = vmatpush1.msra.mxu0 %v3525
    %3591 = vmatprep.subr.mxu0 %v3528
    %3592 = vmatpush1.msra.mxu0 %v3527
    %3593 = vmatprep.subr.mxu0 %v3530
    %3594 = vmatpush1.msra.mxu0 %v3529
    %3595 = vmatprep.subr.mxu0 %v3532
    %3596 = vmatpush1.msra.mxu0 %v3531
    %3597 = vmatprep.subr.mxu0 %v3534
    %3598 = vmatpush1.msra.mxu0 %v3533
    %3599 = vmatprep.subr.mxu0 %v3536
    %3600 = vmatpush1.msra.mxu0 %v3535
    %3601 = vmatprep.subr.mxu0 %v3538
    %3602 = vmatpush1.msra.mxu0 %v3537
    %3603 = vmatprep.subr.mxu0 %v3540
    %3604 = vmatpush1.msra.mxu0 %v3539
    %3605 = vmatprep.subr.mxu0 %v3542
    %3606 = vmatpush1.msra.mxu0 %v3541
    %3607 = vmatprep.subr.mxu0 %v3544
    %3608 = vmatpush1.msra.mxu0 %v3543
    %3609 = vmatprep.subr.mxu0 %v3546
    %3610 = vmatpush1.msra.mxu0 %v3545
    %3611 = vmatprep.subr.mxu0 %v3548
    %3612 = vmatpush1.msra.mxu0 %v3547
    %3613 = vmatprep.subr.mxu0 0.0
    %3614 = vmatpush1.msra.mxu0 0.0
    %3615 = vmatprep.subr.mxu0 0.0
    %3616 = vmatpush1.msra.mxu0 0.0
    %3617 = vmatprep.subr.mxu0 0.0
    %3618 = vmatpush1.msra.mxu0 0.0
    %3619 = vmatprep.subr.mxu0 0.0
    %3620 = vmatpush1.msra.mxu0 0.0
    %3621 = vmatprep.subr.mxu0 0.0
    %3622 = vmatpush1.msra.mxu0 0.0
    %3623 = vmatprep.subr.mxu0 0.0
    %3624 = vmatpush1.msra.mxu0 0.0
    %3625 = vmatprep.subr.mxu0 0.0
    %3626 = vmatpush1.msra.mxu0 0.0
    %3627 = vmatprep.subr.mxu0 0.0
    %3628 = vmatpush1.msra.mxu0 0.0
    %3629 = vmatprep.mubr.f32.mxu0 %v3554
    %3630 = vmatmul.mubr.f32.gmra.mrb[0].mxu0 %v3493
    %v3631 = vpop.f32.mrb[0].mxu0
    %v3632 = vadd.f32 0.0, %v3631
    %v3633 = vpop.f32.mrb[0].mxu0
    %v3634 = vadd.f32 0.0, %v3633
    %3635 = vmatprep.mubr.f32.mxu0 %v3557
    %3636 = vmatmul.mubr.f32.gmra.mrb[0].mxu0 %v3495
    %v3637 = vpop.f32.mrb[0].mxu0
    %v3638 = vadd.f32 0.0, %v3637
    %v3639 = vpop.f32.mrb[0].mxu0
    %v3640 = vadd.f32 0.0, %v3639
    %3641 = vmatprep.mubr.f32.mxu0 %v3560
    %3642 = vmatmul.mubr.f32.gmra.mrb[0].mxu0 %v3497
    %v3643 = vpop.f32.mrb[0].mxu0
    %v3644 = vadd.f32 0.0, %v3643
    %v3645 = vpop.f32.mrb[0].mxu0
    %v3646 = vadd.f32 0.0, %v3645
    %3647 = vmatprep.mubr.f32.mxu0 %v3563
    %3648 = vmatmul.mubr.f32.gmra.mrb[0].mxu0 %v3499
    %v3649 = vpop.f32.mrb[0].mxu0
    %v3650 = vadd.f32 0.0, %v3649
    %v3651 = vpop.f32.mrb[0].mxu0
    %v3652 = vadd.f32 0.0, %v3651
    %3653 = vdwg.mxu0
    %v3654 = vsub.f32 %v3493, %v3632
    %v3655 = vsub.f32 %v3494, %v3634
    %v3656 = vsub.f32 %v3495, %v3638
    %v3657 = vsub.f32 %v3496, %v3640
    %v3658 = vsub.f32 %v3497, %v3644
    %v3659 = vsub.f32 %v3498, %v3646
    %v3660 = vsub.f32 %v3499, %v3650
    %v3661 = vsub.f32 %v3500, %v3652
    %v3662 = vmul.f32 %v3654, %v3654
    %v3663 = vmul.f32 %v3655, %v3655
    %v3664 = vmul.f32 %v3656, %v3656
    %v3665 = vmul.f32 %v3657, %v3657
    %v3666 = vmul.f32 %v3658, %v3658
    %v3667 = vmul.f32 %v3659, %v3659
    %v3668 = vmul.f32 %v3660, %v3660
    %v3669 = vmul.f32 %v3661, %v3661
    %v3671 = vsel %vm220, %v3663, 0
    %v3674 = vsel %vm220, %v3665, 0
    %v3677 = vsel %vm220, %v3667, 0
    %v3680 = vsel %vm220, %v3669, 0
    %3682 = vmatprep.subr.mxu0 %v3502
    %3683 = vmatpush1.msra.mxu0 %v3501
    %3684 = vmatprep.subr.mxu0 %v3504
    %3685 = vmatpush1.msra.mxu0 %v3503
    %3686 = vmatprep.subr.mxu0 %v3506
    %3687 = vmatpush1.msra.mxu0 %v3505
    %3688 = vmatprep.subr.mxu0 %v3508
    %3689 = vmatpush1.msra.mxu0 %v3507
    %3690 = vmatprep.subr.mxu0 %v3510
    %3691 = vmatpush1.msra.mxu0 %v3509
    %3692 = vmatprep.subr.mxu0 %v3512
    %3693 = vmatpush1.msra.mxu0 %v3511
    %3694 = vmatprep.subr.mxu0 %v3514
    %3695 = vmatpush1.msra.mxu0 %v3513
    %3696 = vmatprep.subr.mxu0 %v3516
    %3697 = vmatpush1.msra.mxu0 %v3515
    %3698 = vmatprep.subr.mxu0 %v3518
    %3699 = vmatpush1.msra.mxu0 %v3517
    %3700 = vmatprep.subr.mxu0 %v3520
    %3701 = vmatpush1.msra.mxu0 %v3519
    %3702 = vmatprep.subr.mxu0 %v3522
    %3703 = vmatpush1.msra.mxu0 %v3521
    %3704 = vmatprep.subr.mxu0 %v3524
    %3705 = vmatpush1.msra.mxu0 %v3523
    %3706 = vmatprep.subr.mxu0 %v3526
    %3707 = vmatpush1.msra.mxu0 %v3525
    %3708 = vmatprep.subr.mxu0 %v3528
    %3709 = vmatpush1.msra.mxu0 %v3527
    %3710 = vmatprep.subr.mxu0 %v3530
    %3711 = vmatpush1.msra.mxu0 %v3529
    %3712 = vmatprep.subr.mxu0 %v3532
    %3713 = vmatpush1.msra.mxu0 %v3531
    %3714 = vmatprep.subr.mxu0 %v3534
    %3715 = vmatpush1.msra.mxu0 %v3533
    %3716 = vmatprep.subr.mxu0 %v3536
    %3717 = vmatpush1.msra.mxu0 %v3535
    %3718 = vmatprep.subr.mxu0 %v3538
    %3719 = vmatpush1.msra.mxu0 %v3537
    %3720 = vmatprep.subr.mxu0 %v3540
    %3721 = vmatpush1.msra.mxu0 %v3539
    %3722 = vmatprep.subr.mxu0 %v3542
    %3723 = vmatpush1.msra.mxu0 %v3541
    %3724 = vmatprep.subr.mxu0 %v3544
    %3725 = vmatpush1.msra.mxu0 %v3543
    %3726 = vmatprep.subr.mxu0 %v3546
    %3727 = vmatpush1.msra.mxu0 %v3545
    %3728 = vmatprep.subr.mxu0 %v3548
    %3729 = vmatpush1.msra.mxu0 %v3547
    %3730 = vmatprep.subr.mxu0 0.0
    %3731 = vmatpush1.msra.mxu0 0.0
    %3732 = vmatprep.subr.mxu0 0.0
    %3733 = vmatpush1.msra.mxu0 0.0
    %3734 = vmatprep.subr.mxu0 0.0
    %3735 = vmatpush1.msra.mxu0 0.0
    %3736 = vmatprep.subr.mxu0 0.0
    %3737 = vmatpush1.msra.mxu0 0.0
    %3738 = vmatprep.subr.mxu0 0.0
    %3739 = vmatpush1.msra.mxu0 0.0
    %3740 = vmatprep.subr.mxu0 0.0
    %3741 = vmatpush1.msra.mxu0 0.0
    %3742 = vmatprep.subr.mxu0 0.0
    %3743 = vmatpush1.msra.mxu0 0.0
    %3744 = vmatprep.subr.mxu0 0.0
    %3745 = vmatpush1.msra.mxu0 0.0
    %3746 = vmatprep.mubr.f32.mxu0 %v3671
    %3747 = vmatmul.mubr.f32.gmra.mrb[0].mxu0 %v3662
    %v3748 = vpop.f32.mrb[0].mxu0
    %v3749 = vadd.f32 1e-05, %v3748
    %v3750 = vpop.f32.mrb[0].mxu0
    %v3751 = vadd.f32 1e-05, %v3750
    %3752 = vmatprep.mubr.f32.mxu0 %v3674
    %3753 = vmatmul.mubr.f32.gmra.mrb[0].mxu0 %v3664
    %v3754 = vpop.f32.mrb[0].mxu0
    %v3755 = vadd.f32 1e-05, %v3754
    %v3756 = vpop.f32.mrb[0].mxu0
    %v3757 = vadd.f32 1e-05, %v3756
    %3758 = vmatprep.mubr.f32.mxu0 %v3677
    %3759 = vmatmul.mubr.f32.gmra.mrb[0].mxu0 %v3666
    %v3760 = vpop.f32.mrb[0].mxu0
    %v3761 = vadd.f32 1e-05, %v3760
    %v3762 = vpop.f32.mrb[0].mxu0
    %v3763 = vadd.f32 1e-05, %v3762
    %3764 = vmatprep.mubr.f32.mxu0 %v3680
    %3765 = vmatmul.mubr.f32.gmra.mrb[0].mxu0 %v3668
    %v3766 = vpop.f32.mrb[0].mxu0
    %v3767 = vadd.f32 1e-05, %v3766
    %v3768 = vpop.f32.mrb[0].mxu0
    %v3769 = vadd.f32 1e-05, %v3768
    %3770 = vdwg.mxu0
    %v3771 = vrsqrt.pop %v3749
    %v3772 = vrsqrt.pop %v3751
    %v3773 = vrsqrt.pop %v3755
    %v3774 = vrsqrt.pop %v3757
    %v3775 = vrsqrt.pop %v3761
    %v3776 = vrsqrt.pop %v3763
    %v3777 = vrsqrt.pop %v3767
    %v3778 = vrsqrt.pop %v3769
    %v3779 = vmul.f32 %v3654, %v3771
    %v3780 = vmul.f32 %v3655, %v3772
    %v3781 = vmul.f32 %v3656, %v3773
    %v3782 = vmul.f32 %v3657, %v3774
    %v3783 = vmul.f32 %v3658, %v3775
    %v3784 = vmul.f32 %v3659, %v3776
    %v3785 = vmul.f32 %v3660, %v3777
    %v3786 = vmul.f32 %v3661, %v3778
    %v3788 = vlaneseq
    %v3789 = vshrl.u32 %v3788, 7
    %v3790 = vsub.s32 0, %v3789
    %v3791 = vrot.slane %v3550, %v3790
    %v3792 = vlaneseq
    %v3793 = vshrl.u32 %v3792, 7
    %v3794 = vsub.s32 1, %v3793
    %v3795 = vrot.slane %v3550, %v3794
    %v3798 = vmul.f32 %v3779, %v3791
    %v3799 = vmul.f32 %v3780, %v3795
    %v3800 = vmul.f32 %v3781, %v3791
    %v3801 = vmul.f32 %v3782, %v3795
    %v3802 = vmul.f32 %v3783, %v3791
    %v3803 = vmul.f32 %v3784, %v3795
    %v3804 = vmul.f32 %v3785, %v3791
    %v3805 = vmul.f32 %v3786, %v3795
    %v3807 = vlaneseq
    %v3808 = vshrl.u32 %v3807, 7
    %v3809 = vsub.s32 0, %v3808
    %v3810 = vrot.slane %v3552, %v3809
    %v3811 = vlaneseq
    %v3812 = vshrl.u32 %v3811, 7
    %v3813 = vsub.s32 1, %v3812
    %v3814 = vrot.slane %v3552, %v3813
    %v3817 = vadd.f32 %v3798, %v3810
    %v3818 = vadd.f32 %v3799, %v3814
    %v3819 = vadd.f32 %v3800, %v3810
    %v3820 = vadd.f32 %v3801, %v3814
    %v3821 = vadd.f32 %v3802, %v3810
    %v3822 = vadd.f32 %v3803, %v3814
    %v3823 = vadd.f32 %v3804, %v3810
    %v3824 = vadd.f32 %v3805, %v3814
    %v3825 = vld [vmem:[#allocation2 + $0x188] sm:$0xff]
    %v3826 = vld [vmem:[#allocation2 + $0x198] sm:$0xff]
    %v3827 = vld [vmem:[#allocation2 + $0x1a8] sm:$0xff]
    %v3828 = vld [vmem:[#allocation2 + $0x1b8] sm:$0xff]
    %v3829 = vld [vmem:[#allocation2 + $0x1c8] sm:$0xff]
    %v3830 = vld [vmem:[#allocation2 + $0x1d8] sm:$0xff]
    %v3831 = vld [vmem:[#allocation2 + $0x1e8] sm:$0xff]
    %v3832 = vld [vmem:[#allocation2 + $0x1f8] sm:$0xff]
    %v3833 = vld [vmem:[#allocation2 + $0x208] sm:$0xff]
    %v3834 = vld [vmem:[#allocation2 + $0x218] sm:$0xff]
    %v3835 = vld [vmem:[#allocation2 + $0x228] sm:$0xff]
    %v3836 = vld [vmem:[#allocation2 + $0x238] sm:$0xff]
    %v3837 = vld [vmem:[#allocation2 + $0x248] sm:$0xff]
    %v3838 = vld [vmem:[#allocation2 + $0x258] sm:$0xff]
    %v3839 = vld [vmem:[#allocation2 + $0x268] sm:$0xff]
    %v3840 = vld [vmem:[#allocation2 + $0x278] sm:$0xff]
    %v3841 = vld [vmem:[#allocation2 + $0x288] sm:$0xff]
    %v3842 = vld [vmem:[#allocation2 + $0x298] sm:$0xff]
    %v3843 = vld [vmem:[#allocation2 + $0x2a8] sm:$0xff]
    %v3844 = vld [vmem:[#allocation2 + $0x2b8] sm:$0xff]
    %v3845 = vld [vmem:[#allocation2 + $0x2c8] sm:$0xff]
    %v3846 = vld [vmem:[#allocation2 + $0x2d8] sm:$0xff]
    %v3847 = vld [vmem:[#allocation2 + $0x2e8] sm:$0xff]
    %v3848 = vld [vmem:[#allocation2 + $0x2f8] sm:$0xff]
    %v3849 = vld [vmem:[#allocation2 + $0x6d6] ss:$0 sm:$0xff]
    %v3851 = vsel %vm220, %v3818, 0
    %v3854 = vsel %vm220, %v3820, 0
    %v3857 = vsel %vm220, %v3822, 0
    %v3860 = vsel %vm220, %v3824, 0
    %3862 = vmatprep.subr.mxu0 0.0
    %3863 = vmatpush1.msra.mxu0 %v3825
    %3864 = vmatprep.subr.mxu0 0.0
    %3865 = vmatpush1.msra.mxu0 %v3826
    %3866 = vmatprep.subr.mxu0 0.0
    %3867 = vmatpush1.msra.mxu0 %v3827
    %3868 = vmatprep.subr.mxu0 0.0
    %3869 = vmatpush1.msra.mxu0 %v3828
    %3870 = vmatprep.subr.mxu0 0.0
    %3871 = vmatpush1.msra.mxu0 %v3829
    %3872 = vmatprep.subr.mxu0 0.0
    %3873 = vmatpush1.msra.mxu0 %v3830
    %3874 = vmatprep.subr.mxu0 0.0
    %3875 = vmatpush1.msra.mxu0 %v3831
    %3876 = vmatprep.subr.mxu0 0.0
    %3877 = vmatpush1.msra.mxu0 %v3832
    %3878 = vmatprep.subr.mxu0 0.0
    %3879 = vmatpush1.msra.mxu0 %v3833
    %3880 = vmatprep.subr.mxu0 0.0
    %3881 = vmatpush1.msra.mxu0 %v3834
    %3882 = vmatprep.subr.mxu0 0.0
    %3883 = vmatpush1.msra.mxu0 %v3835
    %3884 = vmatprep.subr.mxu0 0.0
    %3885 = vmatpush1.msra.mxu0 %v3836
    %3886 = vmatprep.subr.mxu0 0.0
    %3887 = vmatpush1.msra.mxu0 %v3837
    %3888 = vmatprep.subr.mxu0 0.0
    %3889 = vmatpush1.msra.mxu0 %v3838
    %3890 = vmatprep.subr.mxu0 0.0
    %3891 = vmatpush1.msra.mxu0 %v3839
    %3892 = vmatprep.subr.mxu0 0.0
    %3893 = vmatpush1.msra.mxu0 %v3840
    %3894 = vmatprep.subr.mxu0 0.0
    %3895 = vmatpush1.msra.mxu0 %v3841
    %3896 = vmatprep.subr.mxu0 0.0
    %3897 = vmatpush1.msra.mxu0 %v3842
    %3898 = vmatprep.subr.mxu0 0.0
    %3899 = vmatpush1.msra.mxu0 %v3843
    %3900 = vmatprep.subr.mxu0 0.0
    %3901 = vmatpush1.msra.mxu0 %v3844
    %3902 = vmatprep.subr.mxu0 0.0
    %3903 = vmatpush1.msra.mxu0 %v3845
    %3904 = vmatprep.subr.mxu0 0.0
    %3905 = vmatpush1.msra.mxu0 %v3846
    %3906 = vmatprep.subr.mxu0 0.0
    %3907 = vmatpush1.msra.mxu0 %v3847
    %3908 = vmatprep.subr.mxu0 0.0
    %3909 = vmatpush1.msra.mxu0 %v3848
    %3910 = vmatprep.subr.mxu0 0.0
    %3911 = vmatpush1.msra.mxu0 0.0
    %3912 = vmatprep.subr.mxu0 0.0
    %3913 = vmatpush1.msra.mxu0 0.0
    %3914 = vmatprep.subr.mxu0 0.0
    %3915 = vmatpush1.msra.mxu0 0.0
    %3916 = vmatprep.subr.mxu0 0.0
    %3917 = vmatpush1.msra.mxu0 0.0
    %3918 = vmatprep.subr.mxu0 0.0
    %3919 = vmatpush1.msra.mxu0 0.0
    %3920 = vmatprep.subr.mxu0 0.0
    %3921 = vmatpush1.msra.mxu0 0.0
    %3922 = vmatprep.subr.mxu0 0.0
    %3923 = vmatpush1.msra.mxu0 0.0
    %3924 = vmatprep.subr.mxu0 0.0
    %3925 = vmatpush1.msra.mxu0 0.0
    %3926 = vmatprep.mubr.f32.mxu0 %v3851
    %3927 = vmatmul.mubr.f32.gmra.mrb[0].mxu0 %v3817
    %v3928 = vpop.f32.mrb[0].mxu0
    %v3929 = vadd.f32 %v3849, %v3928
    %v3930 = vpop.f32.mrb[0].mxu0
    %3931 = vmatprep.mubr.f32.mxu0 %v3854
    %3932 = vmatmul.mubr.f32.gmra.mrb[0].mxu0 %v3819
    %v3933 = vpop.f32.mrb[0].mxu0
    %v3934 = vadd.f32 %v3849, %v3933
    %v3935 = vpop.f32.mrb[0].mxu0
    %3936 = vmatprep.mubr.f32.mxu0 %v3857
    %3937 = vmatmul.mubr.f32.gmra.mrb[0].mxu0 %v3821
    %v3938 = vpop.f32.mrb[0].mxu0
    %v3939 = vadd.f32 %v3849, %v3938
    %v3940 = vpop.f32.mrb[0].mxu0
    %3941 = vmatprep.mubr.f32.mxu0 %v3860
    %3942 = vmatmul.mubr.f32.gmra.mrb[0].mxu0 %v3823
    %v3943 = vpop.f32.mrb[0].mxu0
    %v3944 = vadd.f32 %v3849, %v3943
    %v3945 = vpop.f32.mrb[0].mxu0
    %3946 = vdwg.mxu0
    %v3947 = vld [vmem:[#allocation2 + $0x6d7] ss:$0 sm:$0xff]
    %v3948 = vld [vmem:[#allocation2 + $0x6e0] ss:$0 sm:$0xff]
    %v3950 = vsel %vm633, %v3929, 0
    %v3953 = vsel %vm633, %v3934, 0
    %v3956 = vsel %vm633, %v3939, 0
    %v3959 = vsel %vm633, %v3944, 0
    %3961 = vmatprep.subr.mxu0 0.0
    %3962 = vmatpush1.msra.mxu0 %v3123
    %3963 = vmatprep.subr.mxu0 0.0
    %3964 = vmatpush1.msra.mxu0 %v3124
    %3965 = vmatprep.subr.mxu0 0.0
    %3966 = vmatpush1.msra.mxu0 %v3125
    %3967 = vmatprep.subr.mxu0 0.0
    %3968 = vmatpush1.msra.mxu0 %v3126
    %3969 = vmatprep.subr.mxu0 0.0
    %3970 = vmatpush1.msra.mxu0 %v3127
    %3971 = vmatprep.subr.mxu0 0.0
    %3972 = vmatpush1.msra.mxu0 %v3128
    %3973 = vmatprep.subr.mxu0 0.0
    %3974 = vmatpush1.msra.mxu0 %v3129
    %3975 = vmatprep.subr.mxu0 0.0
    %3976 = vmatpush1.msra.mxu0 %v3130
    %3977 = vmatprep.subr.mxu0 0.0
    %3978 = vmatpush1.msra.mxu0 %v3131
    %3979 = vmatprep.subr.mxu0 0.0
    %3980 = vmatpush1.msra.mxu0 %v3132
    %3981 = vmatprep.subr.mxu0 0.0
    %3982 = vmatpush1.msra.mxu0 %v3133
    %3983 = vmatprep.subr.mxu0 0.0
    %3984 = vmatpush1.msra.mxu0 %v3134
    %3985 = vmatprep.subr.mxu0 0.0
    %3986 = vmatpush1.msra.mxu0 0.0
    %3987 = vmatprep.subr.mxu0 0.0
    %3988 = vmatpush1.msra.mxu0 0.0
    %3989 = vmatprep.subr.mxu0 0.0
    %3990 = vmatpush1.msra.mxu0 0.0
    %3991 = vmatprep.subr.mxu0 0.0
    %3992 = vmatpush1.msra.mxu0 0.0
    %3993 = vmatprep.subr.mxu0 0.0
    %3994 = vmatpush1.msra.mxu0 0.0
    %3995 = vmatprep.subr.mxu0 0.0
    %3996 = vmatpush1.msra.mxu0 0.0
    %3997 = vmatprep.subr.mxu0 0.0
    %3998 = vmatpush1.msra.mxu0 0.0
    %3999 = vmatprep.subr.mxu0 0.0
    %4000 = vmatpush1.msra.mxu0 0.0
    %4001 = vmatprep.subr.mxu0 0.0
    %4002 = vmatpush1.msra.mxu0 0.0
    %4003 = vmatprep.subr.mxu0 0.0
    %4004 = vmatpush1.msra.mxu0 0.0
    %4005 = vmatprep.subr.mxu0 0.0
    %4006 = vmatpush1.msra.mxu0 0.0
    %4007 = vmatprep.subr.mxu0 0.0
    %4008 = vmatpush1.msra.mxu0 0.0
    %4009 = vmatprep.subr.mxu0 0.0
    %4010 = vmatpush1.msra.mxu0 0.0
    %4011 = vmatprep.subr.mxu0 0.0
    %4012 = vmatpush1.msra.mxu0 0.0
    %4013 = vmatprep.subr.mxu0 0.0
    %4014 = vmatpush1.msra.mxu0 0.0
    %4015 = vmatprep.subr.mxu0 0.0
    %4016 = vmatpush1.msra.mxu0 0.0
    %4017 = vmatprep.subr.mxu0 0.0
    %4018 = vmatpush1.msra.mxu0 0.0
    %4019 = vmatprep.subr.mxu0 0.0
    %4020 = vmatpush1.msra.mxu0 0.0
    %4021 = vmatprep.subr.mxu0 0.0
    %4022 = vmatpush1.msra.mxu0 0.0
    %4023 = vmatprep.subr.mxu0 0.0
    %4024 = vmatpush1.msra.mxu0 0.0
    %4025 = vmatprep.mubr.f32.mxu0 0.0
    %4026 = vmatmul.mubr.f32.gmra.mrb[0].mxu0 %v3950
    %v4027 = vpop.f32.mrb[0].mxu0
    %v4028 = vadd.f32 0.0, %v4027
    %v4029 = vpop.f32.mrb[0].mxu0
    %4030 = vmatprep.mubr.f32.mxu0 0.0
    %4031 = vmatmul.mubr.f32.gmra.mrb[0].mxu0 %v3953
    %v4032 = vpop.f32.mrb[0].mxu0
    %v4033 = vadd.f32 0.0, %v4032
    %v4034 = vpop.f32.mrb[0].mxu0
    %4035 = vmatprep.mubr.f32.mxu0 0.0
    %4036 = vmatmul.mubr.f32.gmra.mrb[0].mxu0 %v3956
    %v4037 = vpop.f32.mrb[0].mxu0
    %v4038 = vadd.f32 0.0, %v4037
    %v4039 = vpop.f32.mrb[0].mxu0
    %4040 = vmatprep.mubr.f32.mxu0 0.0
    %4041 = vmatmul.mubr.f32.gmra.mrb[0].mxu0 %v3959
    %v4042 = vpop.f32.mrb[0].mxu0
    %v4043 = vadd.f32 0.0, %v4042
    %v4044 = vpop.f32.mrb[0].mxu0
    %4045 = vdwg.mxu0
    %v4046 = vsub.f32 %v3929, %v4028
    %v4047 = vsub.f32 %v3934, %v4033
    %v4048 = vsub.f32 %v3939, %v4038
    %v4049 = vsub.f32 %v3944, %v4043
    %v4050 = vmul.f32 %v4046, %v4046
    %v4051 = vmul.f32 %v4047, %v4047
    %v4052 = vmul.f32 %v4048, %v4048
    %v4053 = vmul.f32 %v4049, %v4049
    %v4055 = vsel %vm633, %v4050, 0
    %v4058 = vsel %vm633, %v4051, 0
    %v4061 = vsel %vm633, %v4052, 0
    %v4064 = vsel %vm633, %v4053, 0
    %4066 = vmatprep.subr.mxu0 0.0
    %4067 = vmatpush1.msra.mxu0 %v3123
    %4068 = vmatprep.subr.mxu0 0.0
    %4069 = vmatpush1.msra.mxu0 %v3124
    %4070 = vmatprep.subr.mxu0 0.0
    %4071 = vmatpush1.msra.mxu0 %v3125
    %4072 = vmatprep.subr.mxu0 0.0
    %4073 = vmatpush1.msra.mxu0 %v3126
    %4074 = vmatprep.subr.mxu0 0.0
    %4075 = vmatpush1.msra.mxu0 %v3127
    %4076 = vmatprep.subr.mxu0 0.0
    %4077 = vmatpush1.msra.mxu0 %v3128
    %4078 = vmatprep.subr.mxu0 0.0
    %4079 = vmatpush1.msra.mxu0 %v3129
    %4080 = vmatprep.subr.mxu0 0.0
    %4081 = vmatpush1.msra.mxu0 %v3130
    %4082 = vmatprep.subr.mxu0 0.0
    %4083 = vmatpush1.msra.mxu0 %v3131
    %4084 = vmatprep.subr.mxu0 0.0
    %4085 = vmatpush1.msra.mxu0 %v3132
    %4086 = vmatprep.subr.mxu0 0.0
    %4087 = vmatpush1.msra.mxu0 %v3133
    %4088 = vmatprep.subr.mxu0 0.0
    %4089 = vmatpush1.msra.mxu0 %v3134
    %4090 = vmatprep.subr.mxu0 0.0
    %4091 = vmatpush1.msra.mxu0 0.0
    %4092 = vmatprep.subr.mxu0 0.0
    %4093 = vmatpush1.msra.mxu0 0.0
    %4094 = vmatprep.subr.mxu0 0.0
    %4095 = vmatpush1.msra.mxu0 0.0
    %4096 = vmatprep.subr.mxu0 0.0
    %4097 = vmatpush1.msra.mxu0 0.0
    %4098 = vmatprep.subr.mxu0 0.0
    %4099 = vmatpush1.msra.mxu0 0.0
    %4100 = vmatprep.subr.mxu0 0.0
    %4101 = vmatpush1.msra.mxu0 0.0
    %4102 = vmatprep.subr.mxu0 0.0
    %4103 = vmatpush1.msra.mxu0 0.0
    %4104 = vmatprep.subr.mxu0 0.0
    %4105 = vmatpush1.msra.mxu0 0.0
    %4106 = vmatprep.subr.mxu0 0.0
    %4107 = vmatpush1.msra.mxu0 0.0
    %4108 = vmatprep.subr.mxu0 0.0
    %4109 = vmatpush1.msra.mxu0 0.0
    %4110 = vmatprep.subr.mxu0 0.0
    %4111 = vmatpush1.msra.mxu0 0.0
    %4112 = vmatprep.subr.mxu0 0.0
    %4113 = vmatpush1.msra.mxu0 0.0
    %4114 = vmatprep.subr.mxu0 0.0
    %4115 = vmatpush1.msra.mxu0 0.0
    %4116 = vmatprep.subr.mxu0 0.0
    %4117 = vmatpush1.msra.mxu0 0.0
    %4118 = vmatprep.subr.mxu0 0.0
    %4119 = vmatpush1.msra.mxu0 0.0
    %4120 = vmatprep.subr.mxu0 0.0
    %4121 = vmatpush1.msra.mxu0 0.0
    %4122 = vmatprep.subr.mxu0 0.0
    %4123 = vmatpush1.msra.mxu0 0.0
    %4124 = vmatprep.subr.mxu0 0.0
    %4125 = vmatpush1.msra.mxu0 0.0
    %4126 = vmatprep.subr.mxu0 0.0
    %4127 = vmatpush1.msra.mxu0 0.0
    %4128 = vmatprep.subr.mxu0 0.0
    %4129 = vmatpush1.msra.mxu0 0.0
    %4130 = vmatprep.mubr.f32.mxu0 0.0
    %4131 = vmatmul.mubr.f32.gmra.mrb[0].mxu0 %v4055
    %v4132 = vpop.f32.mrb[0].mxu0
    %v4133 = vadd.f32 1e-05, %v4132
    %v4134 = vpop.f32.mrb[0].mxu0
    %4135 = vmatprep.mubr.f32.mxu0 0.0
    %4136 = vmatmul.mubr.f32.gmra.mrb[0].mxu0 %v4058
    %v4137 = vpop.f32.mrb[0].mxu0
    %v4138 = vadd.f32 1e-05, %v4137
    %v4139 = vpop.f32.mrb[0].mxu0
    %4140 = vmatprep.mubr.f32.mxu0 0.0
    %4141 = vmatmul.mubr.f32.gmra.mrb[0].mxu0 %v4061
    %v4142 = vpop.f32.mrb[0].mxu0
    %v4143 = vadd.f32 1e-05, %v4142
    %v4144 = vpop.f32.mrb[0].mxu0
    %4145 = vmatprep.mubr.f32.mxu0 0.0
    %4146 = vmatmul.mubr.f32.gmra.mrb[0].mxu0 %v4064
    %v4147 = vpop.f32.mrb[0].mxu0
    %v4148 = vadd.f32 1e-05, %v4147
    %v4149 = vpop.f32.mrb[0].mxu0
    %4150 = vdwg.mxu0
    %v4151 = vrsqrt.pop %v4133
    %v4152 = vrsqrt.pop %v4138
    %v4153 = vrsqrt.pop %v4143
    %v4154 = vrsqrt.pop %v4148
    %v4155 = vmul.f32 %v4046, %v4151
    %v4156 = vmul.f32 %v4047, %v4152
    %v4157 = vmul.f32 %v4048, %v4153
    %v4158 = vmul.f32 %v4049, %v4154
    %v4159 = vmul.f32 %v4155, %v3947
    %v4160 = vmul.f32 %v4156, %v3947
    %v4161 = vmul.f32 %v4157, %v3947
    %v4162 = vmul.f32 %v4158, %v3947
    %v4163 = vadd.f32 %v4159, %v3948
    %v4164 = vadd.f32 %v4160, %v3948
    %v4165 = vadd.f32 %v4161, %v3948
    %v4166 = vadd.f32 %v4162, %v3948
    %4167 = vst.msk [vmem:[%s2 + $0x8] sm:$0xff] %vm633, %v4163
    %4168 = vst.msk [vmem:[%s2 + $0x18] sm:$0xff] %vm633, %v4164
    %4169 = vst.msk [vmem:[%s2 + $0x28] sm:$0xff] %vm633, %v4165
    %4170 = vst.msk [vmem:[%s2 + $0x38] sm:$0xff] %vm633, %v4166
    %4175 = vrot.lane.b32.xlu0 %v2849, 48
    %v4176 = vpop.permute.xlu0 %4175
    %4177 = vrot.lane.b32.xlu0 %v2854, 48
    %v4178 = vpop.permute.xlu0 %4177
    %4179 = vrot.lane.b32.xlu0 %v2859, 48
    %v4180 = vpop.permute.xlu0 %4179
    %4181 = vrot.lane.b32.xlu0 %v2864, 48
    %v4182 = vpop.permute.xlu0 %4181
    %v4187 = vsel %vm1060, %v1031, %v4176
    %v4188 = vsel %vm1060, %v1032, %v4178
    %v4189 = vsel %vm1060, %v1033, %v4180
    %v4190 = vsel %vm1060, %v1034, %v4182
    %v4191 = vld [vmem:[#allocation2 + $0x308] sm:$0xff]
    %v4192 = vld [vmem:[#allocation2 + $0x318] sm:$0xff]
    %v4193 = vld [vmem:[#allocation2 + $0x328] sm:$0xff]
    %v4194 = vld [vmem:[#allocation2 + $0x338] sm:$0xff]
    %v4195 = vld [vmem:[#allocation2 + $0x348] sm:$0xff]
    %v4196 = vld [vmem:[#allocation2 + $0x358] sm:$0xff]
    %v4197 = vld [vmem:[#allocation2 + $0x368] sm:$0xff]
    %v4198 = vld [vmem:[#allocation2 + $0x378] sm:$0xff]
    %v4199 = vld [vmem:[#allocation2 + $0x388] sm:$0xff]
    %v4200 = vld [vmem:[#allocation2 + $0x398] sm:$0xff]
    %v4201 = vld [vmem:[#allocation2 + $0x3a8] sm:$0xff]
    %v4202 = vld [vmem:[#allocation2 + $0x3b8] sm:$0xff]
    %v4203 = vld [vmem:[#allocation2 + $0x6e5] ss:$0 sm:$0xff]
    %4216 = vrot.lane.b32.xlu0 %v4191, 64
    %v4217 = vpop.permute.xlu0 %4216
    %4218 = vrot.lane.b32.xlu0 %v4192, 64
    %v4219 = vpop.permute.xlu0 %4218
    %4220 = vrot.lane.b32.xlu0 %v4193, 64
    %v4221 = vpop.permute.xlu0 %4220
    %4222 = vrot.lane.b32.xlu0 %v4194, 64
    %v4223 = vpop.permute.xlu0 %4222
    %4224 = vrot.lane.b32.xlu0 %v4195, 64
    %v4225 = vpop.permute.xlu0 %4224
    %4226 = vrot.lane.b32.xlu0 %v4196, 64
    %v4227 = vpop.permute.xlu0 %4226
    %4228 = vrot.lane.b32.xlu0 %v4197, 64
    %v4229 = vpop.permute.xlu0 %4228
    %4230 = vrot.lane.b32.xlu0 %v4198, 64
    %v4231 = vpop.permute.xlu0 %4230
    %4232 = vrot.lane.b32.xlu0 %v4199, 64
    %v4233 = vpop.permute.xlu0 %4232
    %4234 = vrot.lane.b32.xlu0 %v4200, 64
    %v4235 = vpop.permute.xlu0 %4234
    %4236 = vrot.lane.b32.xlu0 %v4201, 64
    %v4237 = vpop.permute.xlu0 %4236
    %4238 = vrot.lane.b32.xlu0 %v4202, 64
    %v4239 = vpop.permute.xlu0 %4238
    %v4253 = vsel %vm633, %v4187, 0
    %v4256 = vsel %vm633, %v4188, 0
    %v4259 = vsel %vm633, %v4189, 0
    %v4262 = vsel %vm633, %v4190, 0
    %4264 = vmatprep.subr.mxu0 0.0
    %4265 = vmatpush1.msra.mxu0 %v4217
    %4266 = vmatprep.subr.mxu0 0.0
    %4267 = vmatpush1.msra.mxu0 %v4219
    %4268 = vmatprep.subr.mxu0 0.0
    %4269 = vmatpush1.msra.mxu0 %v4221
    %4270 = vmatprep.subr.mxu0 0.0
    %4271 = vmatpush1.msra.mxu0 %v4223
    %4272 = vmatprep.subr.mxu0 0.0
    %4273 = vmatpush1.msra.mxu0 %v4225
    %4274 = vmatprep.subr.mxu0 0.0
    %4275 = vmatpush1.msra.mxu0 %v4227
    %4276 = vmatprep.subr.mxu0 0.0
    %4277 = vmatpush1.msra.mxu0 %v4229
    %4278 = vmatprep.subr.mxu0 0.0
    %4279 = vmatpush1.msra.mxu0 %v4231
    %4280 = vmatprep.subr.mxu0 0.0
    %4281 = vmatpush1.msra.mxu0 %v4233
    %4282 = vmatprep.subr.mxu0 0.0
    %4283 = vmatpush1.msra.mxu0 %v4235
    %4284 = vmatprep.subr.mxu0 0.0
    %4285 = vmatpush1.msra.mxu0 %v4237
    %4286 = vmatprep.subr.mxu0 0.0
    %4287 = vmatpush1.msra.mxu0 %v4239
    %4288 = vmatprep.subr.mxu0 0.0
    %4289 = vmatpush1.msra.mxu0 0.0
    %4290 = vmatprep.subr.mxu0 0.0
    %4291 = vmatpush1.msra.mxu0 0.0
    %4292 = vmatprep.subr.mxu0 0.0
    %4293 = vmatpush1.msra.mxu0 0.0
    %4294 = vmatprep.subr.mxu0 0.0
    %4295 = vmatpush1.msra.mxu0 0.0
    %4296 = vmatprep.subr.mxu0 0.0
    %4297 = vmatpush1.msra.mxu0 0.0
    %4298 = vmatprep.subr.mxu0 0.0
    %4299 = vmatpush1.msra.mxu0 0.0
    %4300 = vmatprep.subr.mxu0 0.0
    %4301 = vmatpush1.msra.mxu0 0.0
    %4302 = vmatprep.subr.mxu0 0.0
    %4303 = vmatpush1.msra.mxu0 0.0
    %4304 = vmatprep.subr.mxu0 0.0
    %4305 = vmatpush1.msra.mxu0 0.0
    %4306 = vmatprep.subr.mxu0 0.0
    %4307 = vmatpush1.msra.mxu0 0.0
    %4308 = vmatprep.subr.mxu0 0.0
    %4309 = vmatpush1.msra.mxu0 0.0
    %4310 = vmatprep.subr.mxu0 0.0
    %4311 = vmatpush1.msra.mxu0 0.0
    %4312 = vmatprep.subr.mxu0 0.0
    %4313 = vmatpush1.msra.mxu0 0.0
    %4314 = vmatprep.subr.mxu0 0.0
    %4315 = vmatpush1.msra.mxu0 0.0
    %4316 = vmatprep.subr.mxu0 0.0
    %4317 = vmatpush1.msra.mxu0 0.0
    %4318 = vmatprep.subr.mxu0 0.0
    %4319 = vmatpush1.msra.mxu0 0.0
    %4320 = vmatprep.subr.mxu0 0.0
    %4321 = vmatpush1.msra.mxu0 0.0
    %4322 = vmatprep.subr.mxu0 0.0
    %4323 = vmatpush1.msra.mxu0 0.0
    %4324 = vmatprep.subr.mxu0 0.0
    %4325 = vmatpush1.msra.mxu0 0.0
    %4326 = vmatprep.subr.mxu0 0.0
    %4327 = vmatpush1.msra.mxu0 0.0
    %4328 = vmatprep.mubr.f32.mxu0 0.0
    %4329 = vmatmul.mubr.f32.gmra.mrb[0].mxu0 %v4253
    %v4330 = vpop.f32.mrb[0].mxu0
    %v4331 = vadd.f32 %v4203, %v4330
    %v4332 = vpop.f32.mrb[0].mxu0
    %4333 = vmatprep.mubr.f32.mxu0 0.0
    %4334 = vmatmul.mubr.f32.gmra.mrb[0].mxu0 %v4256
    %v4335 = vpop.f32.mrb[0].mxu0
    %v4336 = vadd.f32 %v4203, %v4335
    %v4337 = vpop.f32.mrb[0].mxu0
    %4338 = vmatprep.mubr.f32.mxu0 0.0
    %4339 = vmatmul.mubr.f32.gmra.mrb[0].mxu0 %v4259
    %v4340 = vpop.f32.mrb[0].mxu0
    %v4341 = vadd.f32 %v4203, %v4340
    %v4342 = vpop.f32.mrb[0].mxu0
    %4343 = vmatprep.mubr.f32.mxu0 0.0
    %4344 = vmatmul.mubr.f32.gmra.mrb[0].mxu0 %v4262
    %v4345 = vpop.f32.mrb[0].mxu0
    %v4346 = vadd.f32 %v4203, %v4345
    %v4347 = vpop.f32.mrb[0].mxu0
    %4348 = vdwg.mxu0
    %v4349 = vmax.f32 %v4331, 0.0
    %v4350 = vmax.f32 %v4336, 0.0
    %v4351 = vmax.f32 %v4341, 0.0
    %v4352 = vmax.f32 %v4346, 0.0
    %v4353 = vld [vmem:[#allocation2 + $0x540] sm:$0xff]
    %v4354 = vld [vmem:[#allocation2 + $0x550] sm:$0xff]
    %v4355 = vld [vmem:[#allocation2 + $0x560] sm:$0xff]
    %v4356 = vld [vmem:[#allocation2 + $0x570] sm:$0xff]
    %v4357 = vld [vmem:[#allocation2 + $0x580] sm:$0xff]
    %v4358 = vld [vmem:[#allocation2 + $0x590] sm:$0xff]
    %v4359 = vld [vmem:[#allocation2 + $0x5a0] sm:$0xff]
    %v4360 = vld [vmem:[#allocation2 + $0x5b0] sm:$0xff]
    %v4361 = vld [vmem:[#allocation2 + $0x6e6] ss:$0 sm:$0xff]
    %v4362 = vld [vmem:[#allocation2 + $0x6e7] ss:$0 sm:$0xff]
    %v4364 = vsel %vm220, %v4349, 0
    %v4367 = vsel %vm220, %v4350, 0
    %v4370 = vsel %vm220, %v4351, 0
    %v4373 = vsel %vm220, %v4352, 0
    %4375 = vmatprep.subr.mxu0 0.0
    %4376 = vmatpush1.msra.mxu0 %v4353
    %4377 = vmatprep.subr.mxu0 0.0
    %4378 = vmatpush1.msra.mxu0 %v4354
    %4379 = vmatprep.subr.mxu0 0.0
    %4380 = vmatpush1.msra.mxu0 %v4355
    %4381 = vmatprep.subr.mxu0 0.0
    %4382 = vmatpush1.msra.mxu0 %v4356
    %4383 = vmatprep.subr.mxu0 0.0
    %4384 = vmatpush1.msra.mxu0 %v4357
    %4385 = vmatprep.subr.mxu0 0.0
    %4386 = vmatpush1.msra.mxu0 %v4358
    %4387 = vmatprep.subr.mxu0 0.0
    %4388 = vmatpush1.msra.mxu0 %v4359
    %4389 = vmatprep.subr.mxu0 0.0
    %4390 = vmatpush1.msra.mxu0 %v4360
    %4391 = vmatprep.subr.mxu0 0.0
    %4392 = vmatpush1.msra.mxu0 0.0
    %4393 = vmatprep.subr.mxu0 0.0
    %4394 = vmatpush1.msra.mxu0 0.0
    %4395 = vmatprep.subr.mxu0 0.0
    %4396 = vmatpush1.msra.mxu0 0.0
    %4397 = vmatprep.subr.mxu0 0.0
    %4398 = vmatpush1.msra.mxu0 0.0
    %4399 = vmatprep.subr.mxu0 0.0
    %4400 = vmatpush1.msra.mxu0 0.0
    %4401 = vmatprep.subr.mxu0 0.0
    %4402 = vmatpush1.msra.mxu0 0.0
    %4403 = vmatprep.subr.mxu0 0.0
    %4404 = vmatpush1.msra.mxu0 0.0
    %4405 = vmatprep.subr.mxu0 0.0
    %4406 = vmatpush1.msra.mxu0 0.0
    %4407 = vmatprep.subr.mxu0 0.0
    %4408 = vmatpush1.msra.mxu0 0.0
    %4409 = vmatprep.subr.mxu0 0.0
    %4410 = vmatpush1.msra.mxu0 0.0
    %4411 = vmatprep.subr.mxu0 0.0
    %4412 = vmatpush1.msra.mxu0 0.0
    %4413 = vmatprep.subr.mxu0 0.0
    %4414 = vmatpush1.msra.mxu0 0.0
    %4415 = vmatprep.subr.mxu0 0.0
    %4416 = vmatpush1.msra.mxu0 0.0
    %4417 = vmatprep.subr.mxu0 0.0
    %4418 = vmatpush1.msra.mxu0 0.0
    %4419 = vmatprep.subr.mxu0 0.0
    %4420 = vmatpush1.msra.mxu0 0.0
    %4421 = vmatprep.subr.mxu0 0.0
    %4422 = vmatpush1.msra.mxu0 0.0
    %4423 = vmatprep.subr.mxu0 0.0
    %4424 = vmatpush1.msra.mxu0 0.0
    %4425 = vmatprep.subr.mxu0 0.0
    %4426 = vmatpush1.msra.mxu0 0.0
    %4427 = vmatprep.subr.mxu0 0.0
    %4428 = vmatpush1.msra.mxu0 0.0
    %4429 = vmatprep.subr.mxu0 0.0
    %4430 = vmatpush1.msra.mxu0 0.0
    %4431 = vmatprep.subr.mxu0 0.0
    %4432 = vmatpush1.msra.mxu0 0.0
    %4433 = vmatprep.subr.mxu0 0.0
    %4434 = vmatpush1.msra.mxu0 0.0
    %4435 = vmatprep.subr.mxu0 0.0
    %4436 = vmatpush1.msra.mxu0 0.0
    %4437 = vmatprep.subr.mxu0 0.0
    %4438 = vmatpush1.msra.mxu0 0.0
    %4439 = vmatprep.mubr.f32.mxu0 0.0
    %4440 = vmatmul.mubr.f32.gmra.mrb[0].mxu0 %v4364
    %v4441 = vpop.f32.mrb[0].mxu0
    %v4442 = vadd.f32 0.0, %v4441
    %v4443 = vpop.f32.mrb[0].mxu0
    %4444 = vmatprep.mubr.f32.mxu0 0.0
    %4445 = vmatmul.mubr.f32.gmra.mrb[0].mxu0 %v4367
    %v4446 = vpop.f32.mrb[0].mxu0
    %v4447 = vadd.f32 0.0, %v4446
    %v4448 = vpop.f32.mrb[0].mxu0
    %4449 = vmatprep.mubr.f32.mxu0 0.0
    %4450 = vmatmul.mubr.f32.gmra.mrb[0].mxu0 %v4370
    %v4451 = vpop.f32.mrb[0].mxu0
    %v4452 = vadd.f32 0.0, %v4451
    %v4453 = vpop.f32.mrb[0].mxu0
    %4454 = vmatprep.mubr.f32.mxu0 0.0
    %4455 = vmatmul.mubr.f32.gmra.mrb[0].mxu0 %v4373
    %v4456 = vpop.f32.mrb[0].mxu0
    %v4457 = vadd.f32 0.0, %v4456
    %v4458 = vpop.f32.mrb[0].mxu0
    %4459 = vdwg.mxu0
    %v4460 = vsub.f32 %v4349, %v4442
    %v4461 = vsub.f32 %v4350, %v4447
    %v4462 = vsub.f32 %v4351, %v4452
    %v4463 = vsub.f32 %v4352, %v4457
    %v4464 = vmul.f32 %v4460, %v4460
    %v4465 = vmul.f32 %v4461, %v4461
    %v4466 = vmul.f32 %v4462, %v4462
    %v4467 = vmul.f32 %v4463, %v4463
    %v4469 = vsel %vm220, %v4464, 0
    %v4472 = vsel %vm220, %v4465, 0
    %v4475 = vsel %vm220, %v4466, 0
    %v4478 = vsel %vm220, %v4467, 0
    %4480 = vmatprep.subr.mxu0 0.0
    %4481 = vmatpush1.msra.mxu0 %v4353
    %4482 = vmatprep.subr.mxu0 0.0
    %4483 = vmatpush1.msra.mxu0 %v4354
    %4484 = vmatprep.subr.mxu0 0.0
    %4485 = vmatpush1.msra.mxu0 %v4355
    %4486 = vmatprep.subr.mxu0 0.0
    %4487 = vmatpush1.msra.mxu0 %v4356
    %4488 = vmatprep.subr.mxu0 0.0
    %4489 = vmatpush1.msra.mxu0 %v4357
    %4490 = vmatprep.subr.mxu0 0.0
    %4491 = vmatpush1.msra.mxu0 %v4358
    %4492 = vmatprep.subr.mxu0 0.0
    %4493 = vmatpush1.msra.mxu0 %v4359
    %4494 = vmatprep.subr.mxu0 0.0
    %4495 = vmatpush1.msra.mxu0 %v4360
    %4496 = vmatprep.subr.mxu0 0.0
    %4497 = vmatpush1.msra.mxu0 0.0
    %4498 = vmatprep.subr.mxu0 0.0
    %4499 = vmatpush1.msra.mxu0 0.0
    %4500 = vmatprep.subr.mxu0 0.0
    %4501 = vmatpush1.msra.mxu0 0.0
    %4502 = vmatprep.subr.mxu0 0.0
    %4503 = vmatpush1.msra.mxu0 0.0
    %4504 = vmatprep.subr.mxu0 0.0
    %4505 = vmatpush1.msra.mxu0 0.0
    %4506 = vmatprep.subr.mxu0 0.0
    %4507 = vmatpush1.msra.mxu0 0.0
    %4508 = vmatprep.subr.mxu0 0.0
    %4509 = vmatpush1.msra.mxu0 0.0
    %4510 = vmatprep.subr.mxu0 0.0
    %4511 = vmatpush1.msra.mxu0 0.0
    %4512 = vmatprep.subr.mxu0 0.0
    %4513 = vmatpush1.msra.mxu0 0.0
    %4514 = vmatprep.subr.mxu0 0.0
    %4515 = vmatpush1.msra.mxu0 0.0
    %4516 = vmatprep.subr.mxu0 0.0
    %4517 = vmatpush1.msra.mxu0 0.0
    %4518 = vmatprep.subr.mxu0 0.0
    %4519 = vmatpush1.msra.mxu0 0.0
    %4520 = vmatprep.subr.mxu0 0.0
    %4521 = vmatpush1.msra.mxu0 0.0
    %4522 = vmatprep.subr.mxu0 0.0
    %4523 = vmatpush1.msra.mxu0 0.0
    %4524 = vmatprep.subr.mxu0 0.0
    %4525 = vmatpush1.msra.mxu0 0.0
    %4526 = vmatprep.subr.mxu0 0.0
    %4527 = vmatpush1.msra.mxu0 0.0
    %4528 = vmatprep.subr.mxu0 0.0
    %4529 = vmatpush1.msra.mxu0 0.0
    %4530 = vmatprep.subr.mxu0 0.0
    %4531 = vmatpush1.msra.mxu0 0.0
    %4532 = vmatprep.subr.mxu0 0.0
    %4533 = vmatpush1.msra.mxu0 0.0
    %4534 = vmatprep.subr.mxu0 0.0
    %4535 = vmatpush1.msra.mxu0 0.0
    %4536 = vmatprep.subr.mxu0 0.0
    %4537 = vmatpush1.msra.mxu0 0.0
    %4538 = vmatprep.subr.mxu0 0.0
    %4539 = vmatpush1.msra.mxu0 0.0
    %4540 = vmatprep.subr.mxu0 0.0
    %4541 = vmatpush1.msra.mxu0 0.0
    %4542 = vmatprep.subr.mxu0 0.0
    %4543 = vmatpush1.msra.mxu0 0.0
    %4544 = vmatprep.mubr.f32.mxu0 0.0
    %4545 = vmatmul.mubr.f32.gmra.mrb[0].mxu0 %v4469
    %v4546 = vpop.f32.mrb[0].mxu0
    %v4547 = vadd.f32 1e-05, %v4546
    %v4548 = vpop.f32.mrb[0].mxu0
    %4549 = vmatprep.mubr.f32.mxu0 0.0
    %4550 = vmatmul.mubr.f32.gmra.mrb[0].mxu0 %v4472
    %v4551 = vpop.f32.mrb[0].mxu0
    %v4552 = vadd.f32 1e-05, %v4551
    %v4553 = vpop.f32.mrb[0].mxu0
    %4554 = vmatprep.mubr.f32.mxu0 0.0
    %4555 = vmatmul.mubr.f32.gmra.mrb[0].mxu0 %v4475
    %v4556 = vpop.f32.mrb[0].mxu0
    %v4557 = vadd.f32 1e-05, %v4556
    %v4558 = vpop.f32.mrb[0].mxu0
    %4559 = vmatprep.mubr.f32.mxu0 0.0
    %4560 = vmatmul.mubr.f32.gmra.mrb[0].mxu0 %v4478
    %v4561 = vpop.f32.mrb[0].mxu0
    %v4562 = vadd.f32 1e-05, %v4561
    %v4563 = vpop.f32.mrb[0].mxu0
    %4564 = vdwg.mxu0
    %v4565 = vrsqrt.pop %v4547
    %v4566 = vrsqrt.pop %v4552
    %v4567 = vrsqrt.pop %v4557
    %v4568 = vrsqrt.pop %v4562
    %v4569 = vmul.f32 %v4460, %v4565
    %v4570 = vmul.f32 %v4461, %v4566
    %v4571 = vmul.f32 %v4462, %v4567
    %v4572 = vmul.f32 %v4463, %v4568
    %v4573 = vmul.f32 %v4569, %v4361
    %v4574 = vmul.f32 %v4570, %v4361
    %v4575 = vmul.f32 %v4571, %v4361
    %v4576 = vmul.f32 %v4572, %v4361
    %v4577 = vadd.f32 %v4573, %v4362
    %v4578 = vadd.f32 %v4574, %v4362
    %v4579 = vadd.f32 %v4575, %v4362
    %v4580 = vadd.f32 %v4576, %v4362
    %v4581 = vld [vmem:[#allocation2 + $0x6f0] ss:$0 sm:$0xff]
    %4590 = vrot.lane.b32.xlu0 %v4353, 64
    %v4591 = vpop.permute.xlu0 %4590
    %4592 = vrot.lane.b32.xlu0 %v4354, 64
    %v4593 = vpop.permute.xlu0 %4592
    %4594 = vrot.lane.b32.xlu0 %v4355, 64
    %v4595 = vpop.permute.xlu0 %4594
    %4596 = vrot.lane.b32.xlu0 %v4356, 64
    %v4597 = vpop.permute.xlu0 %4596
    %4598 = vrot.lane.b32.xlu0 %v4357, 64
    %v4599 = vpop.permute.xlu0 %4598
    %4600 = vrot.lane.b32.xlu0 %v4358, 64
    %v4601 = vpop.permute.xlu0 %4600
    %4602 = vrot.lane.b32.xlu0 %v4359, 64
    %v4603 = vpop.permute.xlu0 %4602
    %4604 = vrot.lane.b32.xlu0 %v4360, 64
    %v4605 = vpop.permute.xlu0 %4604
    %v4615 = vsel %vm220, %v4577, 0
    %v4618 = vsel %vm220, %v4578, 0
    %v4621 = vsel %vm220, %v4579, 0
    %v4624 = vsel %vm220, %v4580, 0
    %4626 = vmatprep.subr.mxu0 0.0
    %4627 = vmatpush1.msra.mxu0 %v4591
    %4628 = vmatprep.subr.mxu0 0.0
    %4629 = vmatpush1.msra.mxu0 %v4593
    %4630 = vmatprep.subr.mxu0 0.0
    %4631 = vmatpush1.msra.mxu0 %v4595
    %4632 = vmatprep.subr.mxu0 0.0
    %4633 = vmatpush1.msra.mxu0 %v4597
    %4634 = vmatprep.subr.mxu0 0.0
    %4635 = vmatpush1.msra.mxu0 %v4599
    %4636 = vmatprep.subr.mxu0 0.0
    %4637 = vmatpush1.msra.mxu0 %v4601
    %4638 = vmatprep.subr.mxu0 0.0
    %4639 = vmatpush1.msra.mxu0 %v4603
    %4640 = vmatprep.subr.mxu0 0.0
    %4641 = vmatpush1.msra.mxu0 %v4605
    %4642 = vmatprep.subr.mxu0 0.0
    %4643 = vmatpush1.msra.mxu0 0.0
    %4644 = vmatprep.subr.mxu0 0.0
    %4645 = vmatpush1.msra.mxu0 0.0
    %4646 = vmatprep.subr.mxu0 0.0
    %4647 = vmatpush1.msra.mxu0 0.0
    %4648 = vmatprep.subr.mxu0 0.0
    %4649 = vmatpush1.msra.mxu0 0.0
    %4650 = vmatprep.subr.mxu0 0.0
    %4651 = vmatpush1.msra.mxu0 0.0
    %4652 = vmatprep.subr.mxu0 0.0
    %4653 = vmatpush1.msra.mxu0 0.0
    %4654 = vmatprep.subr.mxu0 0.0
    %4655 = vmatpush1.msra.mxu0 0.0
    %4656 = vmatprep.subr.mxu0 0.0
    %4657 = vmatpush1.msra.mxu0 0.0
    %4658 = vmatprep.subr.mxu0 0.0
    %4659 = vmatpush1.msra.mxu0 0.0
    %4660 = vmatprep.subr.mxu0 0.0
    %4661 = vmatpush1.msra.mxu0 0.0
    %4662 = vmatprep.subr.mxu0 0.0
    %4663 = vmatpush1.msra.mxu0 0.0
    %4664 = vmatprep.subr.mxu0 0.0
    %4665 = vmatpush1.msra.mxu0 0.0
    %4666 = vmatprep.subr.mxu0 0.0
    %4667 = vmatpush1.msra.mxu0 0.0
    %4668 = vmatprep.subr.mxu0 0.0
    %4669 = vmatpush1.msra.mxu0 0.0
    %4670 = vmatprep.subr.mxu0 0.0
    %4671 = vmatpush1.msra.mxu0 0.0
    %4672 = vmatprep.subr.mxu0 0.0
    %4673 = vmatpush1.msra.mxu0 0.0
    %4674 = vmatprep.subr.mxu0 0.0
    %4675 = vmatpush1.msra.mxu0 0.0
    %4676 = vmatprep.subr.mxu0 0.0
    %4677 = vmatpush1.msra.mxu0 0.0
    %4678 = vmatprep.subr.mxu0 0.0
    %4679 = vmatpush1.msra.mxu0 0.0
    %4680 = vmatprep.subr.mxu0 0.0
    %4681 = vmatpush1.msra.mxu0 0.0
    %4682 = vmatprep.subr.mxu0 0.0
    %4683 = vmatpush1.msra.mxu0 0.0
    %4684 = vmatprep.subr.mxu0 0.0
    %4685 = vmatpush1.msra.mxu0 0.0
    %4686 = vmatprep.subr.mxu0 0.0
    %4687 = vmatpush1.msra.mxu0 0.0
    %4688 = vmatprep.subr.mxu0 0.0
    %4689 = vmatpush1.msra.mxu0 0.0
    %4690 = vmatprep.mubr.f32.mxu0 0.0
    %4691 = vmatmul.mubr.f32.gmra.mrb[0].mxu0 %v4615
    %v4692 = vpop.f32.mrb[0].mxu0
    %v4693 = vadd.f32 %v4581, %v4692
    %v4694 = vpop.f32.mrb[0].mxu0
    %4695 = vmatprep.mubr.f32.mxu0 0.0
    %4696 = vmatmul.mubr.f32.gmra.mrb[0].mxu0 %v4618
    %v4697 = vpop.f32.mrb[0].mxu0
    %v4698 = vadd.f32 %v4581, %v4697
    %v4699 = vpop.f32.mrb[0].mxu0
    %4700 = vmatprep.mubr.f32.mxu0 0.0
    %4701 = vmatmul.mubr.f32.gmra.mrb[0].mxu0 %v4621
    %v4702 = vpop.f32.mrb[0].mxu0
    %v4703 = vadd.f32 %v4581, %v4702
    %v4704 = vpop.f32.mrb[0].mxu0
    %4705 = vmatprep.mubr.f32.mxu0 0.0
    %4706 = vmatmul.mubr.f32.gmra.mrb[0].mxu0 %v4624
    %v4707 = vpop.f32.mrb[0].mxu0
    %v4708 = vadd.f32 %v4581, %v4707
    %v4709 = vpop.f32.mrb[0].mxu0
    %4710 = vdwg.mxu0
    %vm4711 = vcmask 23552
    %v4712 = vsel %vm4711, %v4693, -inf
    %4713 = vmax.xlane.f32.xlu0 %v4712
    %v4714 = vpop.xlane.xlu0 %4713
    %v4715 = vsel %vm4711, %v4698, -inf
    %4716 = vmax.xlane.f32.xlu0 %v4715
    %v4717 = vpop.xlane.xlu0 %4716
    %v4718 = vsel %vm4711, %v4703, -inf
    %4719 = vmax.xlane.f32.xlu0 %v4718
    %v4720 = vpop.xlane.xlu0 %4719
    %v4721 = vsel %vm4711, %v4708, -inf
    %4722 = vmax.xlane.f32.xlu0 %v4721
    %v4723 = vpop.xlane.xlu0 %4722
    %v4724 = vsub.f32 %v4693, %v4714
    %v4725 = vsub.f32 %v4698, %v4717
    %v4726 = vsub.f32 %v4703, %v4720
    %v4727 = vsub.f32 %v4708, %v4723
    %v4728 = vmul.f32 %v4724, 1.442695
    %v4729 = vpow.pop %v4728
    %v4730 = vmul.f32 %v4725, 1.442695
    %v4731 = vpow.pop %v4730
    %v4732 = vmul.f32 %v4726, 1.442695
    %v4733 = vpow.pop %v4732
    %v4734 = vmul.f32 %v4727, 1.442695
    %v4735 = vpow.pop %v4734
    %v4736 = vsel %vm4711, %v4729, 0.0
    %4737 = vadd.xlane.f32.xlu0 %v4736
    %v4738 = vpop.xlane.xlu0 %4737
    %v4739 = vsel %vm4711, %v4731, 0.0
    %4740 = vadd.xlane.f32.xlu0 %v4739
    %v4741 = vpop.xlane.xlu0 %4740
    %v4742 = vsel %vm4711, %v4733, 0.0
    %4743 = vadd.xlane.f32.xlu0 %v4742
    %v4744 = vpop.xlane.xlu0 %4743
    %v4745 = vsel %vm4711, %v4735, 0.0
    %4746 = vadd.xlane.f32.xlu0 %v4745
    %v4747 = vpop.xlane.xlu0 %4746
    %v4748 = vrcp.pop %v4738
    %v4749 = vmul.f32 %v4729, %v4748
    %v4750 = vrcp.pop %v4741
    %v4751 = vmul.f32 %v4731, %v4750
    %v4752 = vrcp.pop %v4744
    %v4753 = vmul.f32 %v4733, %v4752
    %v4754 = vrcp.pop %v4747
    %v4755 = vmul.f32 %v4735, %v4754
    %v4756 = vsub.f32 0.0, %v4693
    %v4757 = vsub.f32 0.0, %v4698
    %v4758 = vsub.f32 0.0, %v4703
    %v4759 = vsub.f32 0.0, %v4708
    %v4760 = vmul.f32 %v4756, 1.442695
    %v4761 = vpow.pop %v4760
    %v4762 = vmul.f32 %v4757, 1.442695
    %v4763 = vpow.pop %v4762
    %v4764 = vmul.f32 %v4758, 1.442695
    %v4765 = vpow.pop %v4764
    %v4766 = vmul.f32 %v4759, 1.442695
    %v4767 = vpow.pop %v4766
    %v4768 = vadd.f32 %v4761, 1.0
    %v4769 = vadd.f32 %v4763, 1.0
    %v4770 = vadd.f32 %v4765, 1.0
    %v4771 = vadd.f32 %v4767, 1.0
    %v4772 = vrcp.pop %v4768
    %v4773 = vmul.f32 1.0, %v4772
    %v4774 = vrcp.pop %v4769
    %v4775 = vmul.f32 1.0, %v4774
    %v4776 = vrcp.pop %v4770
    %v4777 = vmul.f32 1.0, %v4776
    %v4778 = vrcp.pop %v4771
    %v4779 = vmul.f32 1.0, %v4778
    %4784 = vrot.lane.b32.xlu0 %v4749, 105
    %v4785 = vpop.permute.xlu0 %4784
    %4786 = vrot.lane.b32.xlu0 %v4751, 105
    %v4787 = vpop.permute.xlu0 %4786
    %4788 = vrot.lane.b32.xlu0 %v4753, 105
    %v4789 = vpop.permute.xlu0 %4788
    %4790 = vrot.lane.b32.xlu0 %v4755, 105
    %v4791 = vpop.permute.xlu0 %4790
    %vm4796 = vcmask 884552
    %4797 = vst.msk [vmem:[%s2 + $0x8] sm:$0xff] %vm4796, %v4785
    %4798 = vst.msk [vmem:[%s2 + $0x18] sm:$0xff] %vm4796, %v4787
    %4799 = vst.msk [vmem:[%s2 + $0x28] sm:$0xff] %vm4796, %v4789
    %4800 = vst.msk [vmem:[%s2 + $0x38] sm:$0xff] %vm4796, %v4791
    %4805 = vrot.lane.b32.xlu0 %v4773, 105
    %v4806 = vpop.permute.xlu0 %4805
    %4807 = vrot.lane.b32.xlu0 %v4775, 105
    %v4808 = vpop.permute.xlu0 %4807
    %4809 = vrot.lane.b32.xlu0 %v4777, 105
    %v4810 = vpop.permute.xlu0 %4809
    %4811 = vrot.lane.b32.xlu0 %v4779, 105
    %v4812 = vpop.permute.xlu0 %4811
    %vm4817 = vcmask 892768
    %4818 = vst.msk [vmem:[%s2 + $0x8] sm:$0xff] %vm4817, %v4806
    %4819 = vst.msk [vmem:[%s2 + $0x18] sm:$0xff] %vm4817, %v4808
    %4820 = vst.msk [vmem:[%s2 + $0x28] sm:$0xff] %vm4817, %v4810
    %4821 = vst.msk [vmem:[%s2 + $0x38] sm:$0xff] %vm4817, %v4812
    %v4822 = vsel %vm4711, %v4749, 0.0
    %v4823 = vsel %vm4711, %v4751, 0.0
    %v4824 = vsel %vm4711, %v4753, 0.0
    %v4825 = vsel %vm4711, %v4755, 0.0
    %4826 = vxpose.xlu0.b32.start [1/16] %v4822, 128
    %4827 = vxpose.xlu0.b32.cont [2/16] %v4823, 128
    %4828 = vxpose.xlu0.b32.cont [3/16] %v4824, 128
    %4829 = vxpose.xlu0.b32.cont [4/16] %v4825, 128
    %4830 = vxpose.xlu0.b32.cont [5/16] 0.0, 128
    %4831 = vxpose.xlu0.b32.cont [6/16] 0.0, 128
    %4832 = vxpose.xlu0.b32.cont [7/16] 0.0, 128
    %4833 = vxpose.xlu0.b32.cont [8/16] 0.0, 128
    %4834 = vxpose.xlu0.b32.cont [9/16] 0.0, 128
    %4835 = vxpose.xlu0.b32.cont [10/16] 0.0, 128
    %4836 = vxpose.xlu0.b32.cont [11/16] 0.0, 128
    %4837 = vxpose.xlu0.b32.cont [12/16] 0.0, 128
    %4838 = vxpose.xlu0.b32.cont [13/16] 0.0, 128
    %4839 = vxpose.xlu0.b32.cont [14/16] 0.0, 128
    %4840 = vxpose.xlu0.b32.cont [15/16] 0.0, 128
    %4841 = vxpose.xlu0.b32.end [16/16] 0.0, 128
    %v4842 = vpop.trf.xlu0
    %v4843 = vpop.trf.xlu0
    %v4844 = vpop.trf.xlu0
    %v4845 = vpop.trf.xlu0
    %v4846 = vpop.trf.xlu0
    %v4847 = vpop.trf.xlu0
    %v4848 = vpop.trf.xlu0
    %v4849 = vpop.trf.xlu0
    %v4850 = vpop.trf.xlu0
    %v4851 = vpop.trf.xlu0
    %v4852 = vpop.trf.xlu0
    %v4853 = vpop.trf.xlu0
    %v4854 = vpop.trf.xlu0
    %v4855 = vpop.trf.xlu0
    %v4856 = vpop.trf.xlu0
    %v4857 = vpop.trf.xlu0
    %v4859 = vrot.slane %v4842, 1
    %4860 = vrot.lane.b32.xlu0 %v4859, 32
    %v4861 = vpop.permute.xlu0 %4860
    %v4863 = vrot.slane %v4842, 2
    %4864 = vrot.lane.b32.xlu0 %v4863, 64
    %v4865 = vpop.permute.xlu0 %4864
    %v4867 = vsel %vm58, %v4842, %v4861
    %v4868 = vsel %vm220, %v4867, %v4865
    %4869 = vset.pattern.permute.xlu0 3
    %4870 = vperm.xlu0 %4869, %v4773
    %v4871 = vpop.permute.xlu0 %4870
    %4873 = vset.pattern.permute.xlu0 3
    %4874 = vperm.xlu0 %4873, %v4775
    %v4875 = vpop.permute.xlu0 %4874
    %4877 = vset.pattern.permute.xlu0 3
    %4878 = vperm.xlu0 %4877, %v4777
    %v4879 = vpop.permute.xlu0 %4878
    %4881 = vset.pattern.permute.xlu0 3
    %4882 = vperm.xlu0 %4881, %v4779
    %v4883 = vpop.permute.xlu0 %4882
    %v4885 = vmul.f32 %v29, %v4871
    %v4886 = vmul.f32 %v30, %v4871
    %v4887 = vmul.f32 %v31, %v4875
    %v4888 = vmul.f32 %v32, %v4875
    %v4889 = vmul.f32 %v33, %v4879
    %v4890 = vmul.f32 %v34, %v4879
    %v4891 = vmul.f32 %v35, %v4883
    %v4892 = vmul.f32 %v36, %v4883
    %v4893 = vlaneseq
    %v4894 = vshrl.u32 %v4893, 7
    %v4895 = vsub.s32 0, %v4894
    %v4896 = vrot.slane %v4868, %v4895
    %4898 = vrot.lane.b32.xlu0 %v4896, 80
    %v4899 = vpop.permute.xlu0 %4898
    %v4901 = vmul.f32 %v4885, %v4899
    %v4902 = vmul.f32 %v4886, %v4899
    %v4903 = vmul.f32 %v4887, %v4899
    %v4904 = vmul.f32 %v4888, %v4899
    %v4905 = vmul.f32 %v4889, %v4899
    %v4906 = vmul.f32 %v4890, %v4899
    %v4907 = vmul.f32 %v4891, %v4899
    %v4908 = vmul.f32 %v4892, %v4899
    %4917 = vrot.lane.b32.xlu0 %v4901, 48
    %v4918 = vpop.permute.xlu0 %4917
    %4919 = vrot.lane.b32.xlu0 %v4902, 48
    %v4920 = vpop.permute.xlu0 %4919
    %4921 = vrot.lane.b32.xlu0 %v4903, 48
    %v4922 = vpop.permute.xlu0 %4921
    %4923 = vrot.lane.b32.xlu0 %v4904, 48
    %v4924 = vpop.permute.xlu0 %4923
    %4925 = vrot.lane.b32.xlu0 %v4905, 48
    %v4926 = vpop.permute.xlu0 %4925
    %4927 = vrot.lane.b32.xlu0 %v4906, 48
    %v4928 = vpop.permute.xlu0 %4927
    %4929 = vrot.lane.b32.xlu0 %v4907, 48
    %v4930 = vpop.permute.xlu0 %4929
    %4931 = vrot.lane.b32.xlu0 %v4908, 48
    %v4932 = vpop.permute.xlu0 %4931
    %v4933 = vsel %vm1060, %v4918, %v4920
    %v4934 = vsel %vm1060, %v4922, %v4924
    %v4935 = vsel %vm1060, %v4926, %v4928
    %v4936 = vsel %vm1060, %v4930, %v4932
    %v4941 = vadd.f32 %v4163, %v4933
    %v4942 = vadd.f32 %v4164, %v4934
    %v4943 = vadd.f32 %v4165, %v4935
    %v4944 = vadd.f32 %v4166, %v4936
    %v4945 = vld [vmem:[#allocation2 + $0x3c8] sm:$0xff]
    %v4946 = vld [vmem:[#allocation2 + $0x3d8] sm:$0xff]
    %v4947 = vld [vmem:[#allocation2 + $0x3e8] sm:$0xff]
    %v4948 = vld [vmem:[#allocation2 + $0x3f8] sm:$0xff]
    %v4949 = vld [vmem:[#allocation2 + $0x408] sm:$0xff]
    %v4950 = vld [vmem:[#allocation2 + $0x418] sm:$0xff]
    %v4951 = vld [vmem:[#allocation2 + $0x428] sm:$0xff]
    %v4952 = vld [vmem:[#allocation2 + $0x438] sm:$0xff]
    %v4953 = vld [vmem:[#allocation2 + $0x448] sm:$0xff]
    %v4954 = vld [vmem:[#allocation2 + $0x458] sm:$0xff]
    %v4955 = vld [vmem:[#allocation2 + $0x468] sm:$0xff]
    %v4956 = vld [vmem:[#allocation2 + $0x478] sm:$0xff]
    %v4957 = vld [vmem:[#allocation2 + $0x6e1] ss:$0 sm:$0xff]
    %v4959 = vsel %vm633, %v4941, 0
    %v4962 = vsel %vm633, %v4942, 0
    %v4965 = vsel %vm633, %v4943, 0
    %v4968 = vsel %vm633, %v4944, 0
    %4970 = vmatprep.subr.mxu0 0.0
    %4971 = vmatpush1.msra.mxu0 %v4945
    %4972 = vmatprep.subr.mxu0 0.0
    %4973 = vmatpush1.msra.mxu0 %v4946
    %4974 = vmatprep.subr.mxu0 0.0
    %4975 = vmatpush1.msra.mxu0 %v4947
    %4976 = vmatprep.subr.mxu0 0.0
    %4977 = vmatpush1.msra.mxu0 %v4948
    %4978 = vmatprep.subr.mxu0 0.0
    %4979 = vmatpush1.msra.mxu0 %v4949
    %4980 = vmatprep.subr.mxu0 0.0
    %4981 = vmatpush1.msra.mxu0 %v4950
    %4982 = vmatprep.subr.mxu0 0.0
    %4983 = vmatpush1.msra.mxu0 %v4951
    %4984 = vmatprep.subr.mxu0 0.0
    %4985 = vmatpush1.msra.mxu0 %v4952
    %4986 = vmatprep.subr.mxu0 0.0
    %4987 = vmatpush1.msra.mxu0 %v4953
    %4988 = vmatprep.subr.mxu0 0.0
    %4989 = vmatpush1.msra.mxu0 %v4954
    %4990 = vmatprep.subr.mxu0 0.0
    %4991 = vmatpush1.msra.mxu0 %v4955
    %4992 = vmatprep.subr.mxu0 0.0
    %4993 = vmatpush1.msra.mxu0 %v4956
    %4994 = vmatprep.subr.mxu0 0.0
    %4995 = vmatpush1.msra.mxu0 0.0
    %4996 = vmatprep.subr.mxu0 0.0
    %4997 = vmatpush1.msra.mxu0 0.0
    %4998 = vmatprep.subr.mxu0 0.0
    %4999 = vmatpush1.msra.mxu0 0.0
    %5000 = vmatprep.subr.mxu0 0.0
    %5001 = vmatpush1.msra.mxu0 0.0
    %5002 = vmatprep.subr.mxu0 0.0
    %5003 = vmatpush1.msra.mxu0 0.0
    %5004 = vmatprep.subr.mxu0 0.0
    %5005 = vmatpush1.msra.mxu0 0.0
    %5006 = vmatprep.subr.mxu0 0.0
    %5007 = vmatpush1.msra.mxu0 0.0
    %5008 = vmatprep.subr.mxu0 0.0
    %5009 = vmatpush1.msra.mxu0 0.0
    %5010 = vmatprep.subr.mxu0 0.0
    %5011 = vmatpush1.msra.mxu0 0.0
    %5012 = vmatprep.subr.mxu0 0.0
    %5013 = vmatpush1.msra.mxu0 0.0
    %5014 = vmatprep.subr.mxu0 0.0
    %5015 = vmatpush1.msra.mxu0 0.0
    %5016 = vmatprep.subr.mxu0 0.0
    %5017 = vmatpush1.msra.mxu0 0.0
    %5018 = vmatprep.subr.mxu0 0.0
    %5019 = vmatpush1.msra.mxu0 0.0
    %5020 = vmatprep.subr.mxu0 0.0
    %5021 = vmatpush1.msra.mxu0 0.0
    %5022 = vmatprep.subr.mxu0 0.0
    %5023 = vmatpush1.msra.mxu0 0.0
    %5024 = vmatprep.subr.mxu0 0.0
    %5025 = vmatpush1.msra.mxu0 0.0
    %5026 = vmatprep.subr.mxu0 0.0
    %5027 = vmatpush1.msra.mxu0 0.0
    %5028 = vmatprep.subr.mxu0 0.0
    %5029 = vmatpush1.msra.mxu0 0.0
    %5030 = vmatprep.subr.mxu0 0.0
    %5031 = vmatpush1.msra.mxu0 0.0
    %5032 = vmatprep.subr.mxu0 0.0
    %5033 = vmatpush1.msra.mxu0 0.0
    %5034 = vmatprep.mubr.f32.mxu0 0.0
    %5035 = vmatmul.mubr.f32.gmra.mrb[0].mxu0 %v4959
    %v5036 = vpop.f32.mrb[0].mxu0
    %v5037 = vadd.f32 %v4957, %v5036
    %v5038 = vpop.f32.mrb[0].mxu0
    %5039 = vmatprep.mubr.f32.mxu0 0.0
    %5040 = vmatmul.mubr.f32.gmra.mrb[0].mxu0 %v4962
    %v5041 = vpop.f32.mrb[0].mxu0
    %v5042 = vadd.f32 %v4957, %v5041
    %v5043 = vpop.f32.mrb[0].mxu0
    %5044 = vmatprep.mubr.f32.mxu0 0.0
    %5045 = vmatmul.mubr.f32.gmra.mrb[0].mxu0 %v4965
    %v5046 = vpop.f32.mrb[0].mxu0
    %v5047 = vadd.f32 %v4957, %v5046
    %v5048 = vpop.f32.mrb[0].mxu0
    %5049 = vmatprep.mubr.f32.mxu0 0.0
    %5050 = vmatmul.mubr.f32.gmra.mrb[0].mxu0 %v4968
    %v5051 = vpop.f32.mrb[0].mxu0
    %v5052 = vadd.f32 %v4957, %v5051
    %v5053 = vpop.f32.mrb[0].mxu0
    %5054 = vdwg.mxu0
    %v5055 = vmax.f32 %v5037, 0.0
    %v5056 = vmax.f32 %v5042, 0.0
    %v5057 = vmax.f32 %v5047, 0.0
    %v5058 = vmax.f32 %v5052, 0.0
    %v5059 = vld [vmem:[#allocation2 + $0x480] sm:$0xff]
    %v5060 = vld [vmem:[#allocation2 + $0x490] sm:$0xff]
    %v5061 = vld [vmem:[#allocation2 + $0x4a0] sm:$0xff]
    %v5062 = vld [vmem:[#allocation2 + $0x4b0] sm:$0xff]
    %v5063 = vld [vmem:[#allocation2 + $0x4c0] sm:$0xff]
    %v5064 = vld [vmem:[#allocation2 + $0x4d0] sm:$0xff]
    %v5065 = vld [vmem:[#allocation2 + $0x4e0] sm:$0xff]
    %v5066 = vld [vmem:[#allocation2 + $0x4f0] sm:$0xff]
    %v5067 = vld [vmem:[#allocation2 + $0x500] sm:$0xff]
    %v5068 = vld [vmem:[#allocation2 + $0x510] sm:$0xff]
    %v5069 = vld [vmem:[#allocation2 + $0x520] sm:$0xff]
    %v5070 = vld [vmem:[#allocation2 + $0x530] sm:$0xff]
    %v5071 = vld [vmem:[#allocation2 + $0x6e2] ss:$0 sm:$0xff]
    %v5072 = vld [vmem:[#allocation2 + $0x6e3] ss:$0 sm:$0xff]
    %v5074 = vsel %vm633, %v5055, 0
    %v5077 = vsel %vm633, %v5056, 0
    %v5080 = vsel %vm633, %v5057, 0
    %v5083 = vsel %vm633, %v5058, 0
    %5085 = vmatprep.subr.mxu0 0.0
    %5086 = vmatpush1.msra.mxu0 %v5059
    %5087 = vmatprep.subr.mxu0 0.0
    %5088 = vmatpush1.msra.mxu0 %v5060
    %5089 = vmatprep.subr.mxu0 0.0
    %5090 = vmatpush1.msra.mxu0 %v5061
    %5091 = vmatprep.subr.mxu0 0.0
    %5092 = vmatpush1.msra.mxu0 %v5062
    %5093 = vmatprep.subr.mxu0 0.0
    %5094 = vmatpush1.msra.mxu0 %v5063
    %5095 = vmatprep.subr.mxu0 0.0
    %5096 = vmatpush1.msra.mxu0 %v5064
    %5097 = vmatprep.subr.mxu0 0.0
    %5098 = vmatpush1.msra.mxu0 %v5065
    %5099 = vmatprep.subr.mxu0 0.0
    %5100 = vmatpush1.msra.mxu0 %v5066
    %5101 = vmatprep.subr.mxu0 0.0
    %5102 = vmatpush1.msra.mxu0 %v5067
    %5103 = vmatprep.subr.mxu0 0.0
    %5104 = vmatpush1.msra.mxu0 %v5068
    %5105 = vmatprep.subr.mxu0 0.0
    %5106 = vmatpush1.msra.mxu0 %v5069
    %5107 = vmatprep.subr.mxu0 0.0
    %5108 = vmatpush1.msra.mxu0 %v5070
    %5109 = vmatprep.subr.mxu0 0.0
    %5110 = vmatpush1.msra.mxu0 0.0
    %5111 = vmatprep.subr.mxu0 0.0
    %5112 = vmatpush1.msra.mxu0 0.0
    %5113 = vmatprep.subr.mxu0 0.0
    %5114 = vmatpush1.msra.mxu0 0.0
    %5115 = vmatprep.subr.mxu0 0.0
    %5116 = vmatpush1.msra.mxu0 0.0
    %5117 = vmatprep.subr.mxu0 0.0
    %5118 = vmatpush1.msra.mxu0 0.0
    %5119 = vmatprep.subr.mxu0 0.0
    %5120 = vmatpush1.msra.mxu0 0.0
    %5121 = vmatprep.subr.mxu0 0.0
    %5122 = vmatpush1.msra.mxu0 0.0
    %5123 = vmatprep.subr.mxu0 0.0
    %5124 = vmatpush1.msra.mxu0 0.0
    %5125 = vmatprep.subr.mxu0 0.0
    %5126 = vmatpush1.msra.mxu0 0.0
    %5127 = vmatprep.subr.mxu0 0.0
    %5128 = vmatpush1.msra.mxu0 0.0
    %5129 = vmatprep.subr.mxu0 0.0
    %5130 = vmatpush1.msra.mxu0 0.0
    %5131 = vmatprep.subr.mxu0 0.0
    %5132 = vmatpush1.msra.mxu0 0.0
    %5133 = vmatprep.subr.mxu0 0.0
    %5134 = vmatpush1.msra.mxu0 0.0
    %5135 = vmatprep.subr.mxu0 0.0
    %5136 = vmatpush1.msra.mxu0 0.0
    %5137 = vmatprep.subr.mxu0 0.0
    %5138 = vmatpush1.msra.mxu0 0.0
    %5139 = vmatprep.subr.mxu0 0.0
    %5140 = vmatpush1.msra.mxu0 0.0
    %5141 = vmatprep.subr.mxu0 0.0
    %5142 = vmatpush1.msra.mxu0 0.0
    %5143 = vmatprep.subr.mxu0 0.0
    %5144 = vmatpush1.msra.mxu0 0.0
    %5145 = vmatprep.subr.mxu0 0.0
    %5146 = vmatpush1.msra.mxu0 0.0
    %5147 = vmatprep.subr.mxu0 0.0
    %5148 = vmatpush1.msra.mxu0 0.0
    %5149 = vmatprep.mubr.f32.mxu0 0.0
    %5150 = vmatmul.mubr.f32.gmra.mrb[0].mxu0 %v5074
    %v5151 = vpop.f32.mrb[0].mxu0
    %v5152 = vadd.f32 0.0, %v5151
    %v5153 = vpop.f32.mrb[0].mxu0
    %5154 = vmatprep.mubr.f32.mxu0 0.0
    %5155 = vmatmul.mubr.f32.gmra.mrb[0].mxu0 %v5077
    %v5156 = vpop.f32.mrb[0].mxu0
    %v5157 = vadd.f32 0.0, %v5156
    %v5158 = vpop.f32.mrb[0].mxu0
    %5159 = vmatprep.mubr.f32.mxu0 0.0
    %5160 = vmatmul.mubr.f32.gmra.mrb[0].mxu0 %v5080
    %v5161 = vpop.f32.mrb[0].mxu0
    %v5162 = vadd.f32 0.0, %v5161
    %v5163 = vpop.f32.mrb[0].mxu0
    %5164 = vmatprep.mubr.f32.mxu0 0.0
    %5165 = vmatmul.mubr.f32.gmra.mrb[0].mxu0 %v5083
    %v5166 = vpop.f32.mrb[0].mxu0
    %v5167 = vadd.f32 0.0, %v5166
    %v5168 = vpop.f32.mrb[0].mxu0
    %5169 = vdwg.mxu0
    %v5170 = vsub.f32 %v5055, %v5152
    %v5171 = vsub.f32 %v5056, %v5157
    %v5172 = vsub.f32 %v5057, %v5162
    %v5173 = vsub.f32 %v5058, %v5167
    %v5174 = vmul.f32 %v5170, %v5170
    %v5175 = vmul.f32 %v5171, %v5171
    %v5176 = vmul.f32 %v5172, %v5172
    %v5177 = vmul.f32 %v5173, %v5173
    %v5179 = vsel %vm633, %v5174, 0
    %v5182 = vsel %vm633, %v5175, 0
    %v5185 = vsel %vm633, %v5176, 0
    %v5188 = vsel %vm633, %v5177, 0
    %5190 = vmatprep.subr.mxu0 0.0
    %5191 = vmatpush1.msra.mxu0 %v5059
    %5192 = vmatprep.subr.mxu0 0.0
    %5193 = vmatpush1.msra.mxu0 %v5060
    %5194 = vmatprep.subr.mxu0 0.0
    %5195 = vmatpush1.msra.mxu0 %v5061
    %5196 = vmatprep.subr.mxu0 0.0
    %5197 = vmatpush1.msra.mxu0 %v5062
    %5198 = vmatprep.subr.mxu0 0.0
    %5199 = vmatpush1.msra.mxu0 %v5063
    %5200 = vmatprep.subr.mxu0 0.0
    %5201 = vmatpush1.msra.mxu0 %v5064
    %5202 = vmatprep.subr.mxu0 0.0
    %5203 = vmatpush1.msra.mxu0 %v5065
    %5204 = vmatprep.subr.mxu0 0.0
    %5205 = vmatpush1.msra.mxu0 %v5066
    %5206 = vmatprep.subr.mxu0 0.0
    %5207 = vmatpush1.msra.mxu0 %v5067
    %5208 = vmatprep.subr.mxu0 0.0
    %5209 = vmatpush1.msra.mxu0 %v5068
    %5210 = vmatprep.subr.mxu0 0.0
    %5211 = vmatpush1.msra.mxu0 %v5069
    %5212 = vmatprep.subr.mxu0 0.0
    %5213 = vmatpush1.msra.mxu0 %v5070
    %5214 = vmatprep.subr.mxu0 0.0
    %5215 = vmatpush1.msra.mxu0 0.0
    %5216 = vmatprep.subr.mxu0 0.0
    %5217 = vmatpush1.msra.mxu0 0.0
    %5218 = vmatprep.subr.mxu0 0.0
    %5219 = vmatpush1.msra.mxu0 0.0
    %5220 = vmatprep.subr.mxu0 0.0
    %5221 = vmatpush1.msra.mxu0 0.0
    %5222 = vmatprep.subr.mxu0 0.0
    %5223 = vmatpush1.msra.mxu0 0.0
    %5224 = vmatprep.subr.mxu0 0.0
    %5225 = vmatpush1.msra.mxu0 0.0
    %5226 = vmatprep.subr.mxu0 0.0
    %5227 = vmatpush1.msra.mxu0 0.0
    %5228 = vmatprep.subr.mxu0 0.0
    %5229 = vmatpush1.msra.mxu0 0.0
    %5230 = vmatprep.subr.mxu0 0.0
    %5231 = vmatpush1.msra.mxu0 0.0
    %5232 = vmatprep.subr.mxu0 0.0
    %5233 = vmatpush1.msra.mxu0 0.0
    %5234 = vmatprep.subr.mxu0 0.0
    %5235 = vmatpush1.msra.mxu0 0.0
    %5236 = vmatprep.subr.mxu0 0.0
    %5237 = vmatpush1.msra.mxu0 0.0
    %5238 = vmatprep.subr.mxu0 0.0
    %5239 = vmatpush1.msra.mxu0 0.0
    %5240 = vmatprep.subr.mxu0 0.0
    %5241 = vmatpush1.msra.mxu0 0.0
    %5242 = vmatprep.subr.mxu0 0.0
    %5243 = vmatpush1.msra.mxu0 0.0
    %5244 = vmatprep.subr.mxu0 0.0
    %5245 = vmatpush1.msra.mxu0 0.0
    %5246 = vmatprep.subr.mxu0 0.0
    %5247 = vmatpush1.msra.mxu0 0.0
    %5248 = vmatprep.subr.mxu0 0.0
    %5249 = vmatpush1.msra.mxu0 0.0
    %5250 = vmatprep.subr.mxu0 0.0
    %5251 = vmatpush1.msra.mxu0 0.0
    %5252 = vmatprep.subr.mxu0 0.0
    %5253 = vmatpush1.msra.mxu0 0.0
    %5254 = vmatprep.mubr.f32.mxu0 0.0
    %5255 = vmatmul.mubr.f32.gmra.mrb[0].mxu0 %v5179
    %v5256 = vpop.f32.mrb[0].mxu0
    %v5257 = vadd.f32 1e-05, %v5256
    %v5258 = vpop.f32.mrb[0].mxu0
    %5259 = vmatprep.mubr.f32.mxu0 0.0
    %5260 = vmatmul.mubr.f32.gmra.mrb[0].mxu0 %v5182
    %v5261 = vpop.f32.mrb[0].mxu0
    %v5262 = vadd.f32 1e-05, %v5261
    %v5263 = vpop.f32.mrb[0].mxu0
    %5264 = vmatprep.mubr.f32.mxu0 0.0
    %5265 = vmatmul.mubr.f32.gmra.mrb[0].mxu0 %v5185
    %v5266 = vpop.f32.mrb[0].mxu0
    %v5267 = vadd.f32 1e-05, %v5266
    %v5268 = vpop.f32.mrb[0].mxu0
    %5269 = vmatprep.mubr.f32.mxu0 0.0
    %5270 = vmatmul.mubr.f32.gmra.mrb[0].mxu0 %v5188
    %v5271 = vpop.f32.mrb[0].mxu0
    %v5272 = vadd.f32 1e-05, %v5271
    %v5273 = vpop.f32.mrb[0].mxu0
    %5274 = vdwg.mxu0
    %v5275 = vrsqrt.pop %v5257
    %v5276 = vrsqrt.pop %v5262
    %v5277 = vrsqrt.pop %v5267
    %v5278 = vrsqrt.pop %v5272
    %v5279 = vmul.f32 %v5170, %v5275
    %v5280 = vmul.f32 %v5171, %v5276
    %v5281 = vmul.f32 %v5172, %v5277
    %v5282 = vmul.f32 %v5173, %v5278
    %v5283 = vmul.f32 %v5279, %v5071
    %v5284 = vmul.f32 %v5280, %v5071
    %v5285 = vmul.f32 %v5281, %v5071
    %v5286 = vmul.f32 %v5282, %v5071
    %v5287 = vadd.f32 %v5283, %v5072
    %v5288 = vadd.f32 %v5284, %v5072
    %v5289 = vadd.f32 %v5285, %v5072
    %v5290 = vadd.f32 %v5286, %v5072
    %v5291 = vld [vmem:[#allocation2 + $0x488] sm:$0xff]
    %v5292 = vld [vmem:[#allocation2 + $0x498] sm:$0xff]
    %v5293 = vld [vmem:[#allocation2 + $0x4a8] sm:$0xff]
    %v5294 = vld [vmem:[#allocation2 + $0x4b8] sm:$0xff]
    %v5295 = vld [vmem:[#allocation2 + $0x4c8] sm:$0xff]
    %v5296 = vld [vmem:[#allocation2 + $0x4d8] sm:$0xff]
    %v5297 = vld [vmem:[#allocation2 + $0x4e8] sm:$0xff]
    %v5298 = vld [vmem:[#allocation2 + $0x4f8] sm:$0xff]
    %v5299 = vld [vmem:[#allocation2 + $0x508] sm:$0xff]
    %v5300 = vld [vmem:[#allocation2 + $0x518] sm:$0xff]
    %v5301 = vld [vmem:[#allocation2 + $0x528] sm:$0xff]
    %v5302 = vld [vmem:[#allocation2 + $0x538] sm:$0xff]
    %v5303 = vld [vmem:[#allocation2 + $0x6f0] ss:$0 sm:$0xff]
    %5316 = vrot.lane.b32.xlu0 %v5291, 64
    %v5317 = vpop.permute.xlu0 %5316
    %5318 = vrot.lane.b32.xlu0 %v5292, 64
    %v5319 = vpop.permute.xlu0 %5318
    %5320 = vrot.lane.b32.xlu0 %v5293, 64
    %v5321 = vpop.permute.xlu0 %5320
    %5322 = vrot.lane.b32.xlu0 %v5294, 64
    %v5323 = vpop.permute.xlu0 %5322
    %5324 = vrot.lane.b32.xlu0 %v5295, 64
    %v5325 = vpop.permute.xlu0 %5324
    %5326 = vrot.lane.b32.xlu0 %v5296, 64
    %v5327 = vpop.permute.xlu0 %5326
    %5328 = vrot.lane.b32.xlu0 %v5297, 64
    %v5329 = vpop.permute.xlu0 %5328
    %5330 = vrot.lane.b32.xlu0 %v5298, 64
    %v5331 = vpop.permute.xlu0 %5330
    %5332 = vrot.lane.b32.xlu0 %v5299, 64
    %v5333 = vpop.permute.xlu0 %5332
    %5334 = vrot.lane.b32.xlu0 %v5300, 64
    %v5335 = vpop.permute.xlu0 %5334
    %5336 = vrot.lane.b32.xlu0 %v5301, 64
    %v5337 = vpop.permute.xlu0 %5336
    %5338 = vrot.lane.b32.xlu0 %v5302, 64
    %v5339 = vpop.permute.xlu0 %5338
    %5353 = vrot.lane.b32.xlu0 %v5303, 124
    %v5354 = vpop.permute.xlu0 %5353
    %v5357 = vsel %vm633, %v5287, 0
    %v5360 = vsel %vm633, %v5288, 0
    %v5363 = vsel %vm633, %v5289, 0
    %v5366 = vsel %vm633, %v5290, 0
    %5368 = vmatprep.subr.mxu0 0.0
    %5369 = vmatpush1.msra.mxu0 %v5317
    %5370 = vmatprep.subr.mxu0 0.0
    %5371 = vmatpush1.msra.mxu0 %v5319
    %5372 = vmatprep.subr.mxu0 0.0
    %5373 = vmatpush1.msra.mxu0 %v5321
    %5374 = vmatprep.subr.mxu0 0.0
    %5375 = vmatpush1.msra.mxu0 %v5323
    %5376 = vmatprep.subr.mxu0 0.0
    %5377 = vmatpush1.msra.mxu0 %v5325
    %5378 = vmatprep.subr.mxu0 0.0
    %5379 = vmatpush1.msra.mxu0 %v5327
    %5380 = vmatprep.subr.mxu0 0.0
    %5381 = vmatpush1.msra.mxu0 %v5329
    %5382 = vmatprep.subr.mxu0 0.0
    %5383 = vmatpush1.msra.mxu0 %v5331
    %5384 = vmatprep.subr.mxu0 0.0
    %5385 = vmatpush1.msra.mxu0 %v5333
    %5386 = vmatprep.subr.mxu0 0.0
    %5387 = vmatpush1.msra.mxu0 %v5335
    %5388 = vmatprep.subr.mxu0 0.0
    %5389 = vmatpush1.msra.mxu0 %v5337
    %5390 = vmatprep.subr.mxu0 0.0
    %5391 = vmatpush1.msra.mxu0 %v5339
    %5392 = vmatprep.subr.mxu0 0.0
    %5393 = vmatpush1.msra.mxu0 0.0
    %5394 = vmatprep.subr.mxu0 0.0
    %5395 = vmatpush1.msra.mxu0 0.0
    %5396 = vmatprep.subr.mxu0 0.0
    %5397 = vmatpush1.msra.mxu0 0.0
    %5398 = vmatprep.subr.mxu0 0.0
    %5399 = vmatpush1.msra.mxu0 0.0
    %5400 = vmatprep.subr.mxu0 0.0
    %5401 = vmatpush1.msra.mxu0 0.0
    %5402 = vmatprep.subr.mxu0 0.0
    %5403 = vmatpush1.msra.mxu0 0.0
    %5404 = vmatprep.subr.mxu0 0.0
    %5405 = vmatpush1.msra.mxu0 0.0
    %5406 = vmatprep.subr.mxu0 0.0
    %5407 = vmatpush1.msra.mxu0 0.0
    %5408 = vmatprep.subr.mxu0 0.0
    %5409 = vmatpush1.msra.mxu0 0.0
    %5410 = vmatprep.subr.mxu0 0.0
    %5411 = vmatpush1.msra.mxu0 0.0
    %5412 = vmatprep.subr.mxu0 0.0
    %5413 = vmatpush1.msra.mxu0 0.0
    %5414 = vmatprep.subr.mxu0 0.0
    %5415 = vmatpush1.msra.mxu0 0.0
    %5416 = vmatprep.subr.mxu0 0.0
    %5417 = vmatpush1.msra.mxu0 0.0
    %5418 = vmatprep.subr.mxu0 0.0
    %5419 = vmatpush1.msra.mxu0 0.0
    %5420 = vmatprep.subr.mxu0 0.0
    %5421 = vmatpush1.msra.mxu0 0.0
    %5422 = vmatprep.subr.mxu0 0.0
    %5423 = vmatpush1.msra.mxu0 0.0
    %5424 = vmatprep.subr.mxu0 0.0
    %5425 = vmatpush1.msra.mxu0 0.0
    %5426 = vmatprep.subr.mxu0 0.0
    %5427 = vmatpush1.msra.mxu0 0.0
    %5428 = vmatprep.subr.mxu0 0.0
    %5429 = vmatpush1.msra.mxu0 0.0
    %5430 = vmatprep.subr.mxu0 0.0
    %5431 = vmatpush1.msra.mxu0 0.0
    %5432 = vmatprep.mubr.f32.mxu0 0.0
    %5433 = vmatmul.mubr.f32.gmra.mrb[0].mxu0 %v5357
    %v5434 = vpop.f32.mrb[0].mxu0
    %v5435 = vadd.f32 %v5354, %v5434
    %v5436 = vpop.f32.mrb[0].mxu0
    %5437 = vmatprep.mubr.f32.mxu0 0.0
    %5438 = vmatmul.mubr.f32.gmra.mrb[0].mxu0 %v5360
    %v5439 = vpop.f32.mrb[0].mxu0
    %v5440 = vadd.f32 %v5354, %v5439
    %v5441 = vpop.f32.mrb[0].mxu0
    %5442 = vmatprep.mubr.f32.mxu0 0.0
    %5443 = vmatmul.mubr.f32.gmra.mrb[0].mxu0 %v5363
    %v5444 = vpop.f32.mrb[0].mxu0
    %v5445 = vadd.f32 %v5354, %v5444
    %v5446 = vpop.f32.mrb[0].mxu0
    %5447 = vmatprep.mubr.f32.mxu0 0.0
    %5448 = vmatmul.mubr.f32.gmra.mrb[0].mxu0 %v5366
    %v5449 = vpop.f32.mrb[0].mxu0
    %v5450 = vadd.f32 %v5354, %v5449
    %v5451 = vpop.f32.mrb[0].mxu0
    %5452 = vdwg.mxu0
    %v5453 = vsub.f32 0.0, %v5435
    %v5454 = vsub.f32 0.0, %v5440
    %v5455 = vsub.f32 0.0, %v5445
    %v5456 = vsub.f32 0.0, %v5450
    %v5457 = vmul.f32 %v5453, 1.442695
    %v5458 = vpow.pop %v5457
    %v5459 = vmul.f32 %v5454, 1.442695
    %v5460 = vpow.pop %v5459
    %v5461 = vmul.f32 %v5455, 1.442695
    %v5462 = vpow.pop %v5461
    %v5463 = vmul.f32 %v5456, 1.442695
    %v5464 = vpow.pop %v5463
    %v5465 = vadd.f32 %v5458, 1.0
    %v5466 = vadd.f32 %v5460, 1.0
    %v5467 = vadd.f32 %v5462, 1.0
    %v5468 = vadd.f32 %v5464, 1.0
    %v5469 = vrcp.pop %v5465
    %v5470 = vmul.f32 1.0, %v5469
    %v5471 = vrcp.pop %v5466
    %v5472 = vmul.f32 1.0, %v5471
    %v5473 = vrcp.pop %v5467
    %v5474 = vmul.f32 1.0, %v5473
    %v5475 = vrcp.pop %v5468
    %v5476 = vmul.f32 1.0, %v5475
    %5481 = vrot.lane.b32.xlu0 %v5470, 109
    %v5482 = vpop.permute.xlu0 %5481
    %5483 = vrot.lane.b32.xlu0 %v5472, 109
    %v5484 = vpop.permute.xlu0 %5483
    %5485 = vrot.lane.b32.xlu0 %v5474, 109
    %v5486 = vpop.permute.xlu0 %5485
    %5487 = vrot.lane.b32.xlu0 %v5476, 109
    %v5488 = vpop.permute.xlu0 %5487
    %vm5493 = vcmask 917352
    %5494 = vst.msk [vmem:[%s2 + $0x8] sm:$0xff] %vm5493, %v5482
    %5495 = vst.msk [vmem:[%s2 + $0x18] sm:$0xff] %vm5493, %v5484
    %5496 = vst.msk [vmem:[%s2 + $0x28] sm:$0xff] %vm5493, %v5486
    %5497 = vst.msk [vmem:[%s2 + $0x38] sm:$0xff] %vm5493, %v5488
    %vm5498 = vcmask 1048448
    %5499 = vst.msk [vmem:[%s2 + $0x8] sm:$0xff] %vm5498, 0.0
    %5500 = vst.msk [vmem:[%s2 + $0x18] sm:$0xff] %vm5498, 0.0
    %5501 = vst.msk [vmem:[%s2 + $0x28] sm:$0xff] %vm5498, 0.0
    %5502 = vst.msk [vmem:[%s2 + $0x38] sm:$0xff] %vm5498, 0.0
    %v5503 = vld [vmem:[#allocation2 + $0x708] sm:$0x7]
    %v5504 = vsel %vm4711, %v5470, 0
    %v5506 = vsel %vm4711, %v5472, 0
    %v5508 = vsel %vm4711, %v5474, 0
    %v5510 = vsel %vm4711, %v5476, 0
    %vm5512 = vcmask 1042432
    %v5514 = vsel %vm5512, %v5503, 0
    %5516 = vmatprep.subr.mxu0 0.0
    %5517 = vmatpush1.msra.mxu0 %v5514
    %5518 = vmatprep.subr.mxu0 0.0
    %5519 = vmatpush1.msra.mxu0 0.0
    %5520 = vmatprep.subr.mxu0 0.0
    %5521 = vmatpush1.msra.mxu0 0.0
    %5522 = vmatprep.subr.mxu0 0.0
    %5523 = vmatpush1.msra.mxu0 0.0
    %5524 = vmatprep.subr.mxu0 0.0
    %5525 = vmatpush1.msra.mxu0 0.0
    %5526 = vmatprep.subr.mxu0 0.0
    %5527 = vmatpush1.msra.mxu0 0.0
    %5528 = vmatprep.subr.mxu0 0.0
    %5529 = vmatpush1.msra.mxu0 0.0
    %5530 = vmatprep.subr.mxu0 0.0
    %5531 = vmatpush1.msra.mxu0 0.0
    %5532 = vmatprep.subr.mxu0 0.0
    %5533 = vmatpush1.msra.mxu0 0.0
    %5534 = vmatprep.subr.mxu0 0.0
    %5535 = vmatpush1.msra.mxu0 0.0
    %5536 = vmatprep.subr.mxu0 0.0
    %5537 = vmatpush1.msra.mxu0 0.0
    %5538 = vmatprep.subr.mxu0 0.0
    %5539 = vmatpush1.msra.mxu0 0.0
    %5540 = vmatprep.subr.mxu0 0.0
    %5541 = vmatpush1.msra.mxu0 0.0
    %5542 = vmatprep.subr.mxu0 0.0
    %5543 = vmatpush1.msra.mxu0 0.0
    %5544 = vmatprep.subr.mxu0 0.0
    %5545 = vmatpush1.msra.mxu0 0.0
    %5546 = vmatprep.subr.mxu0 0.0
    %5547 = vmatpush1.msra.mxu0 0.0
    %5548 = vmatprep.subr.mxu0 0.0
    %5549 = vmatpush1.msra.mxu0 0.0
    %5550 = vmatprep.subr.mxu0 0.0
    %5551 = vmatpush1.msra.mxu0 0.0
    %5552 = vmatprep.subr.mxu0 0.0
    %5553 = vmatpush1.msra.mxu0 0.0
    %5554 = vmatprep.subr.mxu0 0.0
    %5555 = vmatpush1.msra.mxu0 0.0
    %5556 = vmatprep.subr.mxu0 0.0
    %5557 = vmatpush1.msra.mxu0 0.0
    %5558 = vmatprep.subr.mxu0 0.0
    %5559 = vmatpush1.msra.mxu0 0.0
    %5560 = vmatprep.subr.mxu0 0.0
    %5561 = vmatpush1.msra.mxu0 0.0
    %5562 = vmatprep.subr.mxu0 0.0
    %5563 = vmatpush1.msra.mxu0 0.0
    %5564 = vmatprep.subr.mxu0 0.0
    %5565 = vmatpush1.msra.mxu0 0.0
    %5566 = vmatprep.subr.mxu0 0.0
    %5567 = vmatpush1.msra.mxu0 0.0
    %5568 = vmatprep.subr.mxu0 0.0
    %5569 = vmatpush1.msra.mxu0 0.0
    %5570 = vmatprep.subr.mxu0 0.0
    %5571 = vmatpush1.msra.mxu0 0.0
    %5572 = vmatprep.subr.mxu0 0.0
    %5573 = vmatpush1.msra.mxu0 0.0
    %5574 = vmatprep.subr.mxu0 0.0
    %5575 = vmatpush1.msra.mxu0 0.0
    %5576 = vmatprep.subr.mxu0 0.0
    %5577 = vmatpush1.msra.mxu0 0.0
    %5578 = vmatprep.subr.mxu0 0.0
    %5579 = vmatpush1.msra.mxu0 0.0
    %5580 = vmatprep.mubr.f32.mxu0 0.0
    %5581 = vmatmul.mubr.f32.gmra.mrb[0].mxu0 %v5504
    %v5582 = vpop.f32.mrb[0].mxu0
    %v5583 = vadd.f32 0.0, %v5582
    %v5584 = vpop.f32.mrb[0].mxu0
    %5585 = vmatprep.mubr.f32.mxu0 0.0
    %5586 = vmatmul.mubr.f32.gmra.mrb[0].mxu0 %v5506
    %v5587 = vpop.f32.mrb[0].mxu0
    %v5588 = vadd.f32 0.0, %v5587
    %v5589 = vpop.f32.mrb[0].mxu0
    %5590 = vmatprep.mubr.f32.mxu0 0.0
    %5591 = vmatmul.mubr.f32.gmra.mrb[0].mxu0 %v5508
    %v5592 = vpop.f32.mrb[0].mxu0
    %v5593 = vadd.f32 0.0, %v5592
    %v5594 = vpop.f32.mrb[0].mxu0
    %5595 = vmatprep.mubr.f32.mxu0 0.0
    %5596 = vmatmul.mubr.f32.gmra.mrb[0].mxu0 %v5510
    %v5597 = vpop.f32.mrb[0].mxu0
    %v5598 = vadd.f32 0.0, %v5597
    %v5599 = vpop.f32.mrb[0].mxu0
    %5600 = vdwg.mxu0
    %v5601 = vmul.f32 %v5583, %v4941
    %v5602 = vmul.f32 %v5588, %v4942
    %v5603 = vmul.f32 %v5593, %v4943
    %v5604 = vmul.f32 %v5598, %v4944
    %v5605 = vld [vmem:[#allocation2 + $0x488] sm:$0xff]
    %v5606 = vld [vmem:[#allocation2 + $0x498] sm:$0xff]
    %v5607 = vld [vmem:[#allocation2 + $0x4a8] sm:$0xff]
    %v5608 = vld [vmem:[#allocation2 + $0x4b8] sm:$0xff]
    %v5609 = vld [vmem:[#allocation2 + $0x4c8] sm:$0xff]
    %v5610 = vld [vmem:[#allocation2 + $0x4d8] sm:$0xff]
    %v5611 = vld [vmem:[#allocation2 + $0x4e8] sm:$0xff]
    %v5612 = vld [vmem:[#allocation2 + $0x4f8] sm:$0xff]
    %v5613 = vld [vmem:[#allocation2 + $0x508] sm:$0xff]
    %v5614 = vld [vmem:[#allocation2 + $0x518] sm:$0xff]
    %v5615 = vld [vmem:[#allocation2 + $0x528] sm:$0xff]
    %v5616 = vld [vmem:[#allocation2 + $0x538] sm:$0xff]
    %v5618 = vsel %vm633, %v5601, 0
    %v5621 = vsel %vm633, %v5602, 0
    %v5624 = vsel %vm633, %v5603, 0
    %v5627 = vsel %vm633, %v5604, 0
    %5629 = vmatprep.subr.mxu0 0.0
    %5630 = vmatpush1.msra.mxu0 %v5605
    %5631 = vmatprep.subr.mxu0 0.0
    %5632 = vmatpush1.msra.mxu0 %v5606
    %5633 = vmatprep.subr.mxu0 0.0
    %5634 = vmatpush1.msra.mxu0 %v5607
    %5635 = vmatprep.subr.mxu0 0.0
    %5636 = vmatpush1.msra.mxu0 %v5608
    %5637 = vmatprep.subr.mxu0 0.0
    %5638 = vmatpush1.msra.mxu0 %v5609
    %5639 = vmatprep.subr.mxu0 0.0
    %5640 = vmatpush1.msra.mxu0 %v5610
    %5641 = vmatprep.subr.mxu0 0.0
    %5642 = vmatpush1.msra.mxu0 %v5611
    %5643 = vmatprep.subr.mxu0 0.0
    %5644 = vmatpush1.msra.mxu0 %v5612
    %5645 = vmatprep.subr.mxu0 0.0
    %5646 = vmatpush1.msra.mxu0 %v5613
    %5647 = vmatprep.subr.mxu0 0.0
    %5648 = vmatpush1.msra.mxu0 %v5614
    %5649 = vmatprep.subr.mxu0 0.0
    %5650 = vmatpush1.msra.mxu0 %v5615
    %5651 = vmatprep.subr.mxu0 0.0
    %5652 = vmatpush1.msra.mxu0 %v5616
    %5653 = vmatprep.subr.mxu0 0.0
    %5654 = vmatpush1.msra.mxu0 0.0
    %5655 = vmatprep.subr.mxu0 0.0
    %5656 = vmatpush1.msra.mxu0 0.0
    %5657 = vmatprep.subr.mxu0 0.0
    %5658 = vmatpush1.msra.mxu0 0.0
    %5659 = vmatprep.subr.mxu0 0.0
    %5660 = vmatpush1.msra.mxu0 0.0
    %5661 = vmatprep.subr.mxu0 0.0
    %5662 = vmatpush1.msra.mxu0 0.0
    %5663 = vmatprep.subr.mxu0 0.0
    %5664 = vmatpush1.msra.mxu0 0.0
    %5665 = vmatprep.subr.mxu0 0.0
    %5666 = vmatpush1.msra.mxu0 0.0
    %5667 = vmatprep.subr.mxu0 0.0
    %5668 = vmatpush1.msra.mxu0 0.0
    %5669 = vmatprep.subr.mxu0 0.0
    %5670 = vmatpush1.msra.mxu0 0.0
    %5671 = vmatprep.subr.mxu0 0.0
    %5672 = vmatpush1.msra.mxu0 0.0
    %5673 = vmatprep.subr.mxu0 0.0
    %5674 = vmatpush1.msra.mxu0 0.0
    %5675 = vmatprep.subr.mxu0 0.0
    %5676 = vmatpush1.msra.mxu0 0.0
    %5677 = vmatprep.subr.mxu0 0.0
    %5678 = vmatpush1.msra.mxu0 0.0
    %5679 = vmatprep.subr.mxu0 0.0
    %5680 = vmatpush1.msra.mxu0 0.0
    %5681 = vmatprep.subr.mxu0 0.0
    %5682 = vmatpush1.msra.mxu0 0.0
    %5683 = vmatprep.subr.mxu0 0.0
    %5684 = vmatpush1.msra.mxu0 0.0
    %5685 = vmatprep.subr.mxu0 0.0
    %5686 = vmatpush1.msra.mxu0 0.0
    %5687 = vmatprep.subr.mxu0 0.0
    %5688 = vmatpush1.msra.mxu0 0.0
    %5689 = vmatprep.subr.mxu0 0.0
    %5690 = vmatpush1.msra.mxu0 0.0
    %5691 = vmatprep.subr.mxu0 0.0
    %5692 = vmatpush1.msra.mxu0 0.0
    %5693 = vmatprep.mubr.f32.mxu0 0.0
    %5694 = vmatmul.mubr.f32.gmra.mrb[0].mxu0 %v5618
    %v5695 = vpop.f32.mrb[0].mxu0
    %v5696 = vadd.f32 0.0, %v5695
    %v5697 = vpop.f32.mrb[0].mxu0
    %5698 = vmatprep.mubr.f32.mxu0 0.0
    %5699 = vmatmul.mubr.f32.gmra.mrb[0].mxu0 %v5621
    %v5700 = vpop.f32.mrb[0].mxu0
    %v5701 = vadd.f32 0.0, %v5700
    %v5702 = vpop.f32.mrb[0].mxu0
    %5703 = vmatprep.mubr.f32.mxu0 0.0
    %5704 = vmatmul.mubr.f32.gmra.mrb[0].mxu0 %v5624
    %v5705 = vpop.f32.mrb[0].mxu0
    %v5706 = vadd.f32 0.0, %v5705
    %v5707 = vpop.f32.mrb[0].mxu0
    %5708 = vmatprep.mubr.f32.mxu0 0.0
    %5709 = vmatmul.mubr.f32.gmra.mrb[0].mxu0 %v5627
    %v5710 = vpop.f32.mrb[0].mxu0
    %v5711 = vadd.f32 0.0, %v5710
    %v5712 = vpop.f32.mrb[0].mxu0
    %5713 = vdwg.mxu0
    %5714 = vst.msk [vmem:[%s2] sm:$0xff] %vm58, %v5696
    %5715 = vst.msk [vmem:[%s2 + $0x10] sm:$0xff] %vm58, %v5701
    %5716 = vst.msk [vmem:[%s2 + $0x20] sm:$0xff] %vm58, %v5706
    %5717 = vst.msk [vmem:[%s2 + $0x30] sm:$0xff] %vm58, %v5711
    // Predicated region
    $region14: #{exploration_forward.1} parent=1 // pred_check
      _
    $region15: #{exploration_forward.1} parent=1 // pred_check_branch
      %5719 = sbr.rel (0) target = $region17
    $region16: #{exploration_forward.1} parent=1 // pred_region
      _
    $region17: #{exploration_forward.1} parent=1 // pred_fallthru
      _
    // Predicated region
    $region18: #{exploration_forward.1} parent=1 // pred_check
      _
    $region19: #{exploration_forward.1} parent=1 // pred_check_branch
      %5721 = sbr.rel (0) target = $region21
    $region20: #{exploration_forward.1} parent=1 // pred_region
      _
    $region21: #{exploration_forward.1} parent=1 // pred_fallthru
      _
    %5722 = vsyncpa [#allocation3], 1

</llo_original>
